<compile_context>
chip_gen: v6e
topology: v6e:2x2x1
jax: 0.10.0
libtpu: 0.0.40
codegen_flags: <defaults>
</compile_context>

<pallas_src>
import numpy as np
import jax
import jax.numpy as jnp
from jax.experimental import pallas as pl
from jax.experimental.pallas import tpu as pltpu

EPS_LN = 1e-6     # nn.LayerNorm(eps=1e-6)
EPS_L2 = 1e-12    # F.normalize default eps


def _linear(x, w_ref, b_ref):
    """x @ W.T + b with W kept in torch (out, in) layout (contraction, no transpose)."""
    return jax.lax.dot_general(
        x, w_ref[...], (((x.ndim - 1,), (1,)), ((), ())),
        preferred_element_type=jnp.float32) + b_ref[...]


def _recip(x):
    return pl.reciprocal(x, approx=True)


# --------------------------------------------------------------------------
# Fused kernel: masked item-mean + LayerNorm + 1-head attention +
#               group_encoder MLP + L2 normalize + PredictLayer (eval branch)
# grid = (N // GN,) : one block of GN groups per grid step (independent blocks)
# --------------------------------------------------------------------------
def indig_kernel(me_ref, ig_ref, im_ref, mm_ref, it_ref,
                 funw_ref, lng_ref, lnb_ref,
                 wq_ref, wk_ref, wv_ref, bq_ref, bk_ref, bv_ref,
                 wo_ref, bo_ref,
                 w1_ref, b1_ref, w2_ref, b2_ref,
                 wpa_ref, wpb_ref, wpc_ref, bp1_ref, wp2_ref, bp2_ref,
                 z_ref, y_ref):
    me = me_ref[...]          # (G, M, D)  member user embeddings (padded)
    ig = ig_ref[...]          # (G, M, K, D) per-member interacted-item embeddings
    im = im_ref[...]          # (G, M, K)  item validity mask (K on lanes)
    mm = mm_ref[...]          # (G, M)     member validity mask
    it = it_ref[...]          # (G, D)     candidate item embeddings
    D = me.shape[-1]

    # masked mean of each member's interacted-item embeddings (itemembeds_mf2 mean)
    cnt = jnp.maximum(jnp.sum(im, axis=-1, keepdims=True), 1.0)      # (G, M, 1)
    item_mean = jnp.sum(ig * im[..., None], axis=2) / cnt            # (G, M, D)
    me = me + item_mean

    # LayerNorm(D, eps=1e-6) per member row
    mu = jnp.mean(me, axis=-1, keepdims=True)
    var = jnp.mean((me - mu) ** 2, axis=-1, keepdims=True)
    me_ln = (me - mu) * jax.lax.rsqrt(var + EPS_LN) * lng_ref[...] + lnb_ref[...]

    # group-invariant query path: F.normalize(funw) then q = funw_n @ Wq.T + bq
    # (computed once per grid block; cheap, and safe with "parallel" semantics)
    fw = funw_ref[...]                                                # (1, D)
    fw = fw * _recip(jnp.maximum(
        jnp.sqrt(jnp.sum(fw * fw, axis=-1, keepdims=True)), EPS_L2))
    q = _linear(fw, wq_ref, bq_ref)                                   # (1, D)

    # Fold Wk/bk into the query:  q . (Wk x + bk) = (q Wk) . x + q . bk
    qk = jax.lax.dot_general(q, wk_ref[...], (((1,), (0,)), ((), ())),
                             preferred_element_type=jnp.float32)      # (1, D)
    qb = jnp.sum(q * bk_ref[...], axis=-1, keepdims=True)             # (1, 1)
    scores = (jnp.sum(me_ln * qk, axis=-1) + qb) * (D ** -0.5)        # (G, M)

    # masked softmax over members
    scores = jnp.where(mm > 0.0, scores, -1e30)
    scores = scores - jnp.max(scores, axis=-1, keepdims=True)
    p = jnp.exp(scores)
    p = p * _recip(jnp.sum(p, axis=-1, keepdims=True))                # (G, M)

    # attention context; fold Wv/bv AFTER the weighted sum (softmax weights sum to 1)
    ctx = jnp.sum(p[..., None] * me_ln, axis=1)                       # (G, D)
    attn = _linear(ctx, wv_ref, bv_ref)                               # (G, D)
    ua = _linear(attn, wo_ref, bo_ref)                                # (G, D) user_aggregation

    # group_encoder: Linear(D, 2D) + ReLU + (Dropout=id) + Linear(2D, D)
    h = jnp.maximum(_linear(ua, w1_ref, b1_ref), 0.0)                 # (G, 2D)
    zp = _linear(h, w2_ref, b2_ref)                                   # (G, D)
    # F.normalize(z_p_mu, p=2, dim=-1);  eval path: z = z_p_mu
    z = zp * _recip(jnp.maximum(
        jnp.sqrt(jnp.sum(zp * zp, axis=-1, keepdims=True)), EPS_L2))
    z_ref[...] = z

    # PredictLayer on cat(z*it, z, it): first Linear weight split into 3 (8, D) chunks
    h2 = (jax.lax.dot_general(z * it, wpa_ref[...], (((1,), (1,)), ((), ())),
                              preferred_element_type=jnp.float32)
          + jax.lax.dot_general(z, wpb_ref[...], (((1,), (1,)), ((), ())),
                                preferred_element_type=jnp.float32)
          + jax.lax.dot_general(it, wpc_ref[...], (((1,), (1,)), ((), ())),
                                preferred_element_type=jnp.float32)
          + bp1_ref[...])
    h2 = jnp.maximum(h2, 0.0)                                          # (G, 8)
    y = _linear(h2, wp2_ref, bp2_ref)                                  # (G, 2)

    cols = jax.lax.broadcasted_iota(jnp.int32, y.shape, 1)
    y_mu = jax.nn.sigmoid(y)
    y_sigma = 0.1 + 0.9 * jax.nn.softplus(y)
    y_ref[...] = jnp.where(cols == 0, y_mu, y_sigma)   # col 0: y_mu, col 1: y_sigma


# --------------------------------------------------------------------------
# Wrapper
# --------------------------------------------------------------------------
def run_indig_forward(members_e, item_gath, item_mask, member_mask, item_embed,
                      params, group_block=None):
    N, M, D = members_e.shape
    K = item_gath.shape[2]
    GN = group_block if group_block is not None else (N if N <= 8 else 8)
    assert N % GN == 0 and (GN == N or GN % 8 == 0), \
        "group block must divide N and be sublane-aligned (multiple of 8 or == N)"
    grid = (N // GN,)

    def rep(shape):      # grid-invariant (weights): constant block index
        return pl.BlockSpec(shape, lambda i: (0,) * len(shape))

    in_specs = [
        pl.BlockSpec((GN, M, D), lambda i: (i, 0, 0)),        # members_e
        pl.BlockSpec((GN, M, K, D), lambda i: (i, 0, 0, 0)),  # item_gath
        pl.BlockSpec((GN, M, K), lambda i: (i, 0, 0)),        # item_mask (lane = K)
        pl.BlockSpec((GN, M), lambda i: (i, 0)),              # member_mask
        pl.BlockSpec((GN, D), lambda i: (i, 0)),              # item_embed
        rep((1, D)), rep((1, D)), rep((1, D)),                # funw, ln_g, ln_b
        rep((D, D)), rep((D, D)), rep((D, D)),                # Wq Wk Wv
        rep((1, D)), rep((1, D)), rep((1, D)),                # bq bk bv
        rep((D, D)), rep((1, D)),                             # Wo bo
        rep((2 * D, D)), rep((1, 2 * D)),                     # W1 b1
        rep((D, 2 * D)), rep((1, D)),                         # W2 b2
        rep((8, D)), rep((8, D)), rep((8, D)), rep((1, 8)),   # Wp1a Wp1b Wp1c bp1
        rep((2, 8)), rep((1, 2)),                             # Wp2 bp2
    ]
    out_specs = (pl.BlockSpec((GN, D), lambda i: (i, 0)),     # z (= z_p_mu, get_z())
                 pl.BlockSpec((GN, 2), lambda i: (i, 0)))     # [y_mu, y_sigma]
    out_shape = (jax.ShapeDtypeStruct((N, D), jnp.float32),
                 jax.ShapeDtypeStruct((N, 2), jnp.float32))

    z, y = pl.pallas_call(
        indig_kernel,
        out_shape=out_shape,
        grid_spec=pltpu.PrefetchScalarGridSpec(
            num_scalar_prefetch=0, grid=grid,
            in_specs=in_specs, out_specs=out_specs),
        compiler_params=pltpu.CompilerParams(
            dimension_semantics=("parallel",)),
    )(members_e, item_gath, item_mask, member_mask, item_embed,
      params["funw"], params["ln_g"], params["ln_b"],
      params["wq"], params["wk"], params["wv"],
      params["bq"], params["bk"], params["bv"],
      params["wo"], params["bo"],
      params["w1"], params["b1"], params["w2"], params["b2"],
      params["wp1a"], params["wp1b"], params["wp1c"], params["bp1"],
      params["wp2"], params["bp2"])
    return z, y[:, 0:1], y[:, 1:2]


# --------------------------------------------------------------------------
# Deterministic parameter construction (shapes from INDIG.__init__)
# --------------------------------------------------------------------------
def make_params(key, D):
    ks = jax.random.split(key, 16)
    s = 0.2
    p = {}
    p["funw"] = jax.random.normal(ks[0], (1, D), jnp.float32)
    p["ln_g"] = jnp.ones((1, D), jnp.float32)
    p["ln_b"] = jnp.zeros((1, D), jnp.float32)
    in_proj = jax.random.normal(ks[1], (3 * D, D), jnp.float32) * s   # MHA in_proj_weight
    p["wq"], p["wk"], p["wv"] = in_proj[:D], in_proj[D:2 * D], in_proj[2 * D:]
    in_b = jax.random.normal(ks[2], (1, 3 * D), jnp.float32) * s      # MHA in_proj_bias
    p["bq"], p["bk"], p["bv"] = in_b[:, :D], in_b[:, D:2 * D], in_b[:, 2 * D:]
    p["wo"] = jax.random.normal(ks[3], (D, D), jnp.float32) * s       # MHA out_proj
    p["bo"] = jax.random.normal(ks[4], (1, D), jnp.float32) * s
    H = 2 * D                                                          # MLP hidden = in+out
    p["w1"] = jax.random.normal(ks[5], (H, D), jnp.float32) * s
    p["b1"] = jax.random.normal(ks[6], (1, H), jnp.float32) * s
    p["w2"] = jax.random.normal(ks[7], (D, H), jnp.float32) * s
    p["b2"] = jax.random.normal(ks[8], (1, D), jnp.float32) * s
    wp1 = jax.random.normal(ks[9], (8, 3 * D), jnp.float32) * s        # PredictLayer L1
    p["wp1a"], p["wp1b"], p["wp1c"] = wp1[:, :D], wp1[:, D:2 * D], wp1[:, 2 * D:]
    p["bp1"] = jax.random.normal(ks[10], (1, 8), jnp.float32) * s
    p["wp2"] = jax.random.normal(ks[11], (2, 8), jnp.float32) * s      # PredictLayer L2
    p["bp2"] = jax.random.normal(ks[12], (1, 2), jnp.float32) * s
    return p


# --------------------------------------------------------------------------
# Pure-JAX reference (standard, un-folded attention) for validation
# --------------------------------------------------------------------------
def reference(members_e, item_gath, item_mask, member_mask, item_embed, p):
    cnt = jnp.maximum(item_mask.sum(axis=2, keepdims=True), 1.0)          # (N,M,1)
    item_mean = (item_gath * item_mask[..., None]).sum(axis=2) / cnt      # (N,M,D)
    me = members_e + item_mean
    mu = me.mean(-1, keepdims=True)
    var = ((me - mu) ** 2).mean(-1, keepdims=True)
    me_ln = (me - mu) / jnp.sqrt(var + EPS_LN) * p["ln_g"][0] + p["ln_b"][0]
    fw = p["funw"]
    fw = fw / jnp.maximum(jnp.linalg.norm(fw, axis=-1, keepdims=True), EPS_L2)
    D = fw.shape[-1]
    q = fw @ p["wq"].T + p["bq"]
    k = me_ln @ p["wk"].T + p["bk"]
    v = me_ln @ p["wv"].T + p["bv"]
    scores = jnp.einsum("qd,nmd->nqm", q, k) / jnp.sqrt(jnp.float32(D))
    scores = jnp.where(member_mask[:, None, :] > 0, scores, -1e30)
    attn = jnp.einsum("nqm,nmd->nqd", jax.nn.softmax(scores, axis=-1), v)[:, 0, :]
    ua = attn @ p["wo"].T + p["bo"]
    h = jax.nn.relu(ua @ p["w1"].T + p["b1"])
    zp = h @ p["w2"].T + p["b2"]
    z = zp / jnp.maximum(jnp.linalg.norm(zp, axis=-1, keepdims=True), EPS_L2)
    ncf = jnp.concatenate([z * item_embed, z, item_embed], axis=-1)
    wp1 = jnp.concatenate([p["wp1a"], p["wp1b"], p["wp1c"]], axis=-1)
    h2 = jax.nn.relu(ncf @ wp1.T + p["bp1"])
    y = h2 @ p["wp2"].T + p["bp2"]
    return z, jax.nn.sigmoid(y[:, 0:1]), 0.1 + 0.9 * jax.nn.softplus(y[:, 1:2])


if __name__ == "__main__":
    D = 32
    num_users, num_items, num_groups = 24, 12, 16

    key = jax.random.PRNGKey(0)
    kp, ku, ki, ki2 = jax.random.split(key, 4)
    params = make_params(kp, D)
    user_table = jax.random.normal(ku, (num_users, D), jnp.float32) * 0.2      # userembeds
    item_table = jax.random.normal(ki, (num_items, D), jnp.float32) * 0.2      # itemembeds
    item_mf2_table = jax.random.normal(ki2, (num_items, D), jnp.float32) * 0.2 # itemembeds_mf2

    # deterministic ragged dicts
    group_member_dict = {g: [(g * 3 + j) % num_users for j in range(2 + g % 3)]
                         for g in range(num_groups)}
    ui_dict = {u: [(u + 7 * j) % num_items for j in range(1 + u % 4)]
               for u in range(num_users)}

    group_inputs = list(range(num_groups))                       # N = 16 groups
    item_inputs = np.array([(3 * g + 1) % num_items for g in group_inputs], np.int32)
    N = len(group_inputs)
    M = max(len(group_member_dict[g]) for g in group_inputs)
    K = max(len(ui_dict[u]) for g in group_inputs for u in group_member_dict[g])

    member_idx = np.zeros((N, M), np.int32)
    member_mask = np.zeros((N, M), np.float32)
    item_idx = np.zeros((N, M, K), np.int32)
    item_mask = np.zeros((N, M, K), np.float32)
    for b, g in enumerate(group_inputs):
        for m, u in enumerate(group_member_dict[g]):
            member_idx[b, m] = u
            member_mask[b, m] = 1.0
            for kk, it in enumerate(ui_dict[u]):
                item_idx[b, m, kk] = it
                item_mask[b, m, kk] = 1.0

    # host-side embedding gathers (glue) -> padded dense tensors
    # TODO(synk): could be moved in-kernel via scalar-prefetched indices + manual DMA
    members_e = user_table[jnp.asarray(member_idx)]            # (N, M, D)
    item_gath = item_mf2_table[jnp.asarray(item_idx)]          # (N, M, K, D)
    item_embed = item_table[jnp.asarray(item_inputs)]          # (N, D)
    item_mask_j = jnp.asarray(item_mask)                       # (N, M, K)
    member_mask_j = jnp.asarray(member_mask)                   # (N, M)

    # ---- Pallas forward (eval path), fused single kernel, GN=8 groups / step ----
    z, y_mu, y_sigma = run_indig_forward(members_e, item_gath, item_mask_j,
                                         member_mask_j, item_embed, params,
                                         group_block=8)
    y_sigma = jax.block_until_ready(y_sigma)

    # ---- validate against pure-JAX reference ----
    z_ref, y_mu_ref, y_sigma_ref = reference(members_e, item_gath, item_mask_j,
                                             member_mask_j, item_embed, params)
    # tolerances loosened slightly for pl.reciprocal(approx=True) denominators
    np.testing.assert_allclose(np.asarray(z), np.asarray(z_ref), rtol=2e-2, atol=2e-3)
    np.testing.assert_allclose(np.asarray(y_mu), np.asarray(y_mu_ref), rtol=2e-2, atol=2e-3)
    np.testing.assert_allclose(np.asarray(y_sigma), np.asarray(y_sigma_ref),
                               rtol=2e-2, atol=2e-3)

    # TODO(synk): training-only branch (reparameterized sampling, BPR/KL/Barlow losses)
    # not implemented; this covers the inference forward returning [y_mu, y_sigma].
    print("KERNEL_OK")
</pallas_src>

<mosaic_0001>
module attributes {stable_mosaic.version = 11 : i64} {
  func.func @indig_kernel(%arg0: i32, %arg1: memref<8x4x32xf32, #tpu.memory_space<vmem>>, %arg2: memref<8x4x4x32xf32, #tpu.memory_space<vmem>>, %arg3: memref<8x4x4xf32, #tpu.memory_space<vmem>>, %arg4: memref<8x4xf32, #tpu.memory_space<vmem>>, %arg5: memref<8x32xf32, #tpu.memory_space<vmem>>, %arg6: memref<1x32xf32, #tpu.memory_space<vmem>>, %arg7: memref<1x32xf32, #tpu.memory_space<vmem>>, %arg8: memref<1x32xf32, #tpu.memory_space<vmem>>, %arg9: memref<32x32xf32, #tpu.memory_space<vmem>>, %arg10: memref<32x32xf32, #tpu.memory_space<vmem>>, %arg11: memref<32x32xf32, #tpu.memory_space<vmem>>, %arg12: memref<1x32xf32, #tpu.memory_space<vmem>>, %arg13: memref<1x32xf32, #tpu.memory_space<vmem>>, %arg14: memref<1x32xf32, #tpu.memory_space<vmem>>, %arg15: memref<32x32xf32, #tpu.memory_space<vmem>>, %arg16: memref<1x32xf32, #tpu.memory_space<vmem>>, %arg17: memref<64x32xf32, #tpu.memory_space<vmem>>, %arg18: memref<1x64xf32, #tpu.memory_space<vmem>>, %arg19: memref<32x64xf32, #tpu.memory_space<vmem>>, %arg20: memref<1x32xf32, #tpu.memory_space<vmem>>, %arg21: memref<8x32xf32, #tpu.memory_space<vmem>>, %arg22: memref<8x32xf32, #tpu.memory_space<vmem>>, %arg23: memref<8x32xf32, #tpu.memory_space<vmem>>, %arg24: memref<1x8xf32, #tpu.memory_space<vmem>>, %arg25: memref<2x8xf32, #tpu.memory_space<vmem>>, %arg26: memref<1x2xf32, #tpu.memory_space<vmem>>, %arg27: memref<8x32xf32, #tpu.memory_space<vmem>>, %arg28: memref<8x2xf32, #tpu.memory_space<vmem>>) attributes {dimension_semantics = [#tpu.dimension_semantics<parallel>], iteration_bounds = array<i64: 2>, scalar_prefetch = 0 : i64, scratch_operands = 0 : i64, tpu.core_type = #tpu.core_type<tc>, window_params = [{transform_indices = @transform_0, window_bounds = array<i64: 8, 4, 32>}, {transform_indices = @transform_1, window_bounds = array<i64: 8, 4, 4, 32>}, {transform_indices = @transform_2, window_bounds = array<i64: 8, 4, 4>}, {transform_indices = @transform_3, window_bounds = array<i64: 8, 4>}, {transform_indices = @transform_4, window_bounds = array<i64: 8, 32>}, {pipeline_mode = #tpu.pipeline_mode<synchronous>, transform_indices = @transform_5, window_bounds = array<i64: 1, 32>}, {pipeline_mode = #tpu.pipeline_mode<synchronous>, transform_indices = @transform_6, window_bounds = array<i64: 1, 32>}, {pipeline_mode = #tpu.pipeline_mode<synchronous>, transform_indices = @transform_7, window_bounds = array<i64: 1, 32>}, {pipeline_mode = #tpu.pipeline_mode<synchronous>, transform_indices = @transform_8, window_bounds = array<i64: 32, 32>}, {pipeline_mode = #tpu.pipeline_mode<synchronous>, transform_indices = @transform_9, window_bounds = array<i64: 32, 32>}, {pipeline_mode = #tpu.pipeline_mode<synchronous>, transform_indices = @transform_10, window_bounds = array<i64: 32, 32>}, {pipeline_mode = #tpu.pipeline_mode<synchronous>, transform_indices = @transform_11, window_bounds = array<i64: 1, 32>}, {pipeline_mode = #tpu.pipeline_mode<synchronous>, transform_indices = @transform_12, window_bounds = array<i64: 1, 32>}, {pipeline_mode = #tpu.pipeline_mode<synchronous>, transform_indices = @transform_13, window_bounds = array<i64: 1, 32>}, {pipeline_mode = #tpu.pipeline_mode<synchronous>, transform_indices = @transform_14, window_bounds = array<i64: 32, 32>}, {pipeline_mode = #tpu.pipeline_mode<synchronous>, transform_indices = @transform_15, window_bounds = array<i64: 1, 32>}, {pipeline_mode = #tpu.pipeline_mode<synchronous>, transform_indices = @transform_16, window_bounds = array<i64: 64, 32>}, {pipeline_mode = #tpu.pipeline_mode<synchronous>, transform_indices = @transform_17, window_bounds = array<i64: 1, 64>}, {pipeline_mode = #tpu.pipeline_mode<synchronous>, transform_indices = @transform_18, window_bounds = array<i64: 32, 64>}, {pipeline_mode = #tpu.pipeline_mode<synchronous>, transform_indices = @transform_19, window_bounds = array<i64: 1, 32>}, {pipeline_mode = #tpu.pipeline_mode<synchronous>, transform_indices = @transform_20, window_bounds = array<i64: 8, 32>}, {pipeline_mode = #tpu.pipeline_mode<synchronous>, transform_indices = @transform_21, window_bounds = array<i64: 8, 32>}, {pipeline_mode = #tpu.pipeline_mode<synchronous>, transform_indices = @transform_22, window_bounds = array<i64: 8, 32>}, {pipeline_mode = #tpu.pipeline_mode<synchronous>, transform_indices = @transform_23, window_bounds = array<i64: 1, 8>}, {pipeline_mode = #tpu.pipeline_mode<synchronous>, transform_indices = @transform_24, window_bounds = array<i64: 2, 8>}, {pipeline_mode = #tpu.pipeline_mode<synchronous>, transform_indices = @transform_25, window_bounds = array<i64: 1, 2>}, {transform_indices = @transform_26, window_bounds = array<i64: 8, 32>}, {transform_indices = @transform_27, window_bounds = array<i64: 8, 2>}]} {
    %c0 = arith.constant 0 : index
    %c0_0 = arith.constant 0 : index
    %c0_1 = arith.constant 0 : index
    %0 = vector.load %arg1[%c0, %c0_0, %c0_1] : memref<8x4x32xf32, #tpu.memory_space<vmem>>, vector<8x4x32xf32>
    %c0_2 = arith.constant 0 : index
    %c0_3 = arith.constant 0 : index
    %c0_4 = arith.constant 0 : index
    %c0_5 = arith.constant 0 : index
    %1 = vector.load %arg2[%c0_2, %c0_3, %c0_4, %c0_5] : memref<8x4x4x32xf32, #tpu.memory_space<vmem>>, vector<8x4x4x32xf32>
    %c0_6 = arith.constant 0 : index
    %c0_7 = arith.constant 0 : index
    %c0_8 = arith.constant 0 : index
    %2 = vector.load %arg3[%c0_6, %c0_7, %c0_8] : memref<8x4x4xf32, #tpu.memory_space<vmem>>, vector<8x4x4xf32>
    %c0_9 = arith.constant 0 : index
    %c0_10 = arith.constant 0 : index
    %3 = vector.load %arg4[%c0_9, %c0_10] : memref<8x4xf32, #tpu.memory_space<vmem>>, vector<8x4xf32>
    %c0_11 = arith.constant 0 : index
    %c0_12 = arith.constant 0 : index
    %4 = vector.load %arg5[%c0_11, %c0_12] : memref<8x32xf32, #tpu.memory_space<vmem>>, vector<8x32xf32>
    %cst = arith.constant dense<0.000000e+00> : vector<8x4xf32>
    %5 = vector.multi_reduction <add>, %2, %cst [2] : vector<8x4x4xf32> to vector<8x4xf32>
    %6 = vector.shape_cast %5 : vector<8x4xf32> to vector<8x4x1xf32>
    %cst_13 = arith.constant 1.000000e+00 : f32
    %7 = vector.broadcast %cst_13 : f32 to vector<8x4x1xf32>
    %8 = arith.maximumf %6, %7 : vector<8x4x1xf32>
    %9 = vector.shape_cast %2 : vector<8x4x4xf32> to vector<8x4x4x1xf32>
    %10 = vector.broadcast %9 : vector<8x4x4x1xf32> to vector<8x4x4x32xf32>
    %11 = arith.mulf %1, %10 : vector<8x4x4x32xf32>
    %cst_14 = arith.constant dense<0.000000e+00> : vector<8x4x32xf32>
    %12 = vector.multi_reduction <add>, %11, %cst_14 [2] : vector<8x4x4x32xf32> to vector<8x4x32xf32>
    %13 = vector.broadcast %8 : vector<8x4x1xf32> to vector<8x4x32xf32>
    %14 = arith.divf %12, %13 : vector<8x4x32xf32>
    %15 = arith.addf %0, %14 : vector<8x4x32xf32>
    %cst_15 = arith.constant dense<0.000000e+00> : vector<8x4xf32>
    %16 = vector.multi_reduction <add>, %15, %cst_15 [2] : vector<8x4x32xf32> to vector<8x4xf32>
    %17 = vector.shape_cast %16 : vector<8x4xf32> to vector<8x4x1xf32>
    %cst_16 = arith.constant 3.200000e+01 : f32
    %18 = vector.broadcast %cst_16 : f32 to vector<8x4x1xf32>
    %19 = arith.divf %17, %18 : vector<8x4x1xf32>
    %20 = vector.broadcast %19 : vector<8x4x1xf32> to vector<8x4x32xf32>
    %21 = arith.subf %15, %20 : vector<8x4x32xf32>
    %22 = arith.mulf %21, %21 : vector<8x4x32xf32>
    %cst_17 = arith.constant dense<0.000000e+00> : vector<8x4xf32>
    %23 = vector.multi_reduction <add>, %22, %cst_17 [2] : vector<8x4x32xf32> to vector<8x4xf32>
    %24 = vector.shape_cast %23 : vector<8x4xf32> to vector<8x4x1xf32>
    %cst_18 = arith.constant 3.200000e+01 : f32
    %25 = vector.broadcast %cst_18 : f32 to vector<8x4x1xf32>
    %26 = arith.divf %24, %25 : vector<8x4x1xf32>
    %27 = vector.broadcast %19 : vector<8x4x1xf32> to vector<8x4x32xf32>
    %28 = arith.subf %15, %27 : vector<8x4x32xf32>
    %cst_19 = arith.constant 9.99999997E-7 : f32
    %29 = vector.broadcast %cst_19 : f32 to vector<8x4x1xf32>
    %30 = arith.addf %26, %29 : vector<8x4x1xf32>
    %31 = math.rsqrt %30 : vector<8x4x1xf32>
    %32 = vector.broadcast %31 : vector<8x4x1xf32> to vector<8x4x32xf32>
    %33 = arith.mulf %28, %32 : vector<8x4x32xf32>
    %c0_20 = arith.constant 0 : index
    %c0_21 = arith.constant 0 : index
    %34 = vector.load %arg7[%c0_20, %c0_21] : memref<1x32xf32, #tpu.memory_space<vmem>>, vector<1x32xf32>
    %35 = vector.shape_cast %34 : vector<1x32xf32> to vector<1x1x32xf32>
    %36 = vector.broadcast %35 : vector<1x1x32xf32> to vector<8x4x32xf32>
    %37 = arith.mulf %33, %36 : vector<8x4x32xf32>
    %c0_22 = arith.constant 0 : index
    %c0_23 = arith.constant 0 : index
    %38 = vector.load %arg8[%c0_22, %c0_23] : memref<1x32xf32, #tpu.memory_space<vmem>>, vector<1x32xf32>
    %39 = vector.shape_cast %38 : vector<1x32xf32> to vector<1x1x32xf32>
    %40 = vector.broadcast %39 : vector<1x1x32xf32> to vector<8x4x32xf32>
    %41 = arith.addf %37, %40 : vector<8x4x32xf32>
    %c0_24 = arith.constant 0 : index
    %c0_25 = arith.constant 0 : index
    %42 = vector.load %arg6[%c0_24, %c0_25] : memref<1x32xf32, #tpu.memory_space<vmem>>, vector<1x32xf32>
    %43 = arith.mulf %42, %42 : vector<1x32xf32>
    %cst_26 = arith.constant dense<0.000000e+00> : vector<1xf32>
    %44 = vector.multi_reduction <add>, %43, %cst_26 [1] : vector<1x32xf32> to vector<1xf32>
    %45 = vector.shape_cast %44 : vector<1xf32> to vector<1x1xf32>
    %46 = math.sqrt %45 : vector<1x1xf32>
    %cst_27 = arith.constant 9.99999996E-13 : f32
    %47 = vector.broadcast %cst_27 : f32 to vector<1x1xf32>
    %48 = arith.maximumf %46, %47 : vector<1x1xf32>
    %49 = tpu.reciprocal %48 {approx = true} : vector<1x1xf32> -> vector<1x1xf32>
    %50 = vector.broadcast %49 : vector<1x1xf32> to vector<1x32xf32>
    %51 = arith.mulf %42, %50 : vector<1x32xf32>
    %c0_28 = arith.constant 0 : index
    %c0_29 = arith.constant 0 : index
    %52 = vector.load %arg9[%c0_28, %c0_29] : memref<32x32xf32, #tpu.memory_space<vmem>>, vector<32x32xf32>
    %cst_30 = arith.constant dense<0.000000e+00> : vector<1x32xf32>
    %53 = tpu.matmul %51, %52, %cst_30 {dimension_numbers = #tpu.dot_dimension_numbers<[1], [1], [0], [0], [0, 0, 1, 0], [], []>} : vector<1x32xf32>, vector<32x32xf32>, vector<1x32xf32> -> vector<1x32xf32>
    %c0_31 = arith.constant 0 : index
    %c0_32 = arith.constant 0 : index
    %54 = vector.load %arg12[%c0_31, %c0_32] : memref<1x32xf32, #tpu.memory_space<vmem>>, vector<1x32xf32>
    %55 = arith.addf %53, %54 : vector<1x32xf32>
    %c0_33 = arith.constant 0 : index
    %c0_34 = arith.constant 0 : index
    %56 = vector.load %arg10[%c0_33, %c0_34] : memref<32x32xf32, #tpu.memory_space<vmem>>, vector<32x32xf32>
    %cst_35 = arith.constant dense<0.000000e+00> : vector<1x32xf32>
    %57 = tpu.matmul %55, %56, %cst_35 {dimension_numbers = #tpu.dot_dimension_numbers<[1], [0], [0], [1], [0, 0, 1, 1], [], []>} : vector<1x32xf32>, vector<32x32xf32>, vector<1x32xf32> -> vector<1x32xf32>
    %c0_36 = arith.constant 0 : index
    %c0_37 = arith.constant 0 : index
    %58 = vector.load %arg13[%c0_36, %c0_37] : memref<1x32xf32, #tpu.memory_space<vmem>>, vector<1x32xf32>
    %59 = arith.mulf %55, %58 : vector<1x32xf32>
    %cst_38 = arith.constant dense<0.000000e+00> : vector<1xf32>
    %60 = vector.multi_reduction <add>, %59, %cst_38 [1] : vector<1x32xf32> to vector<1xf32>
    %61 = vector.shape_cast %60 : vector<1xf32> to vector<1x1xf32>
    %62 = vector.shape_cast %57 : vector<1x32xf32> to vector<1x1x32xf32>
    %63 = vector.broadcast %62 : vector<1x1x32xf32> to vector<8x4x32xf32>
    %64 = arith.mulf %41, %63 : vector<8x4x32xf32>
    %cst_39 = arith.constant dense<0.000000e+00> : vector<8x4xf32>
    %65 = vector.multi_reduction <add>, %64, %cst_39 [2] : vector<8x4x32xf32> to vector<8x4xf32>
    %66 = vector.broadcast %61 : vector<1x1xf32> to vector<8x4xf32>
    %67 = arith.addf %65, %66 : vector<8x4xf32>
    %cst_40 = arith.constant 0.176776692 : f32
    %68 = vector.broadcast %cst_40 : f32 to vector<8x4xf32>
    %69 = arith.mulf %67, %68 : vector<8x4xf32>
    %cst_41 = arith.constant 0.000000e+00 : f32
    %70 = vector.broadcast %cst_41 : f32 to vector<8x4xf32>
    %71 = arith.cmpf ogt, %3, %70 : vector<8x4xf32>
    %cst_42 = arith.constant -1.000000e+30 : f32
    %72 = vector.broadcast %cst_42 : f32 to vector<8x4xf32>
    %73 = arith.select %71, %69, %72 : vector<8x4xi1>, vector<8x4xf32>
    %cst_43 = arith.constant dense<0xFF800000> : vector<8xf32>
    %74 = vector.multi_reduction <maximumf>, %73, %cst_43 [1] : vector<8x4xf32> to vector<8xf32>
    %75 = vector.shape_cast %74 : vector<8xf32> to vector<8x1xf32>
    %76 = vector.broadcast %75 : vector<8x1xf32> to vector<8x4xf32>
    %77 = arith.subf %73, %76 : vector<8x4xf32>
    %78 = math.exp %77 : vector<8x4xf32>
    %cst_44 = arith.constant dense<0.000000e+00> : vector<8xf32>
    %79 = vector.multi_reduction <add>, %78, %cst_44 [1] : vector<8x4xf32> to vector<8xf32>
    %80 = vector.shape_cast %79 : vector<8xf32> to vector<8x1xf32>
    %81 = tpu.reciprocal %80 {approx = true} : vector<8x1xf32> -> vector<8x1xf32>
    %82 = vector.broadcast %81 : vector<8x1xf32> to vector<8x4xf32>
    %83 = arith.mulf %78, %82 : vector<8x4xf32>
    %84 = vector.shape_cast %83 : vector<8x4xf32> to vector<8x4x1xf32>
    %85 = vector.broadcast %84 : vector<8x4x1xf32> to vector<8x4x32xf32>
    %86 = arith.mulf %85, %41 : vector<8x4x32xf32>
    %cst_45 = arith.constant dense<0.000000e+00> : vector<8x32xf32>
    %87 = vector.multi_reduction <add>, %86, %cst_45 [1] : vector<8x4x32xf32> to vector<8x32xf32>
    %c0_46 = arith.constant 0 : index
    %c0_47 = arith.constant 0 : index
    %88 = vector.load %arg11[%c0_46, %c0_47] : memref<32x32xf32, #tpu.memory_space<vmem>>, vector<32x32xf32>
    %cst_48 = arith.constant dense<0.000000e+00> : vector<8x32xf32>
    %89 = tpu.matmul %87, %88, %cst_48 {dimension_numbers = #tpu.dot_dimension_numbers<[1], [1], [0], [0], [0, 0, 1, 0], [], []>} : vector<8x32xf32>, vector<32x32xf32>, vector<8x32xf32> -> vector<8x32xf32>
    %c0_49 = arith.constant 0 : index
    %c0_50 = arith.constant 0 : index
    %90 = vector.load %arg14[%c0_49, %c0_50] : memref<1x32xf32, #tpu.memory_space<vmem>>, vector<1x32xf32>
    %91 = vector.broadcast %90 : vector<1x32xf32> to vector<8x32xf32>
    %92 = arith.addf %89, %91 : vector<8x32xf32>
    %c0_51 = arith.constant 0 : index
    %c0_52 = arith.constant 0 : index
    %93 = vector.load %arg15[%c0_51, %c0_52] : memref<32x32xf32, #tpu.memory_space<vmem>>, vector<32x32xf32>
    %cst_53 = arith.constant dense<0.000000e+00> : vector<8x32xf32>
    %94 = tpu.matmul %92, %93, %cst_53 {dimension_numbers = #tpu.dot_dimension_numbers<[1], [1], [0], [0], [0, 0, 1, 0], [], []>} : vector<8x32xf32>, vector<32x32xf32>, vector<8x32xf32> -> vector<8x32xf32>
    %c0_54 = arith.constant 0 : index
    %c0_55 = arith.constant 0 : index
    %95 = vector.load %arg16[%c0_54, %c0_55] : memref<1x32xf32, #tpu.memory_space<vmem>>, vector<1x32xf32>
    %96 = vector.broadcast %95 : vector<1x32xf32> to vector<8x32xf32>
    %97 = arith.addf %94, %96 : vector<8x32xf32>
    %c0_56 = arith.constant 0 : index
    %c0_57 = arith.constant 0 : index
    %98 = vector.load %arg17[%c0_56, %c0_57] : memref<64x32xf32, #tpu.memory_space<vmem>>, vector<64x32xf32>
    %cst_58 = arith.constant dense<0.000000e+00> : vector<8x64xf32>
    %99 = tpu.matmul %97, %98, %cst_58 {dimension_numbers = #tpu.dot_dimension_numbers<[1], [1], [0], [0], [0, 0, 1, 0], [], []>} : vector<8x32xf32>, vector<64x32xf32>, vector<8x64xf32> -> vector<8x64xf32>
    %c0_59 = arith.constant 0 : index
    %c0_60 = arith.constant 0 : index
    %100 = vector.load %arg18[%c0_59, %c0_60] : memref<1x64xf32, #tpu.memory_space<vmem>>, vector<1x64xf32>
    %101 = vector.broadcast %100 : vector<1x64xf32> to vector<8x64xf32>
    %102 = arith.addf %99, %101 : vector<8x64xf32>
    %cst_61 = arith.constant 0.000000e+00 : f32
    %103 = vector.broadcast %cst_61 : f32 to vector<8x64xf32>
    %104 = arith.maximumf %102, %103 : vector<8x64xf32>
    %c0_62 = arith.constant 0 : index
    %c0_63 = arith.constant 0 : index
    %105 = vector.load %arg19[%c0_62, %c0_63] : memref<32x64xf32, #tpu.memory_space<vmem>>, vector<32x64xf32>
    %cst_64 = arith.constant dense<0.000000e+00> : vector<8x32xf32>
    %106 = tpu.matmul %104, %105, %cst_64 {dimension_numbers = #tpu.dot_dimension_numbers<[1], [1], [0], [0], [0, 0, 1, 0], [], []>} : vector<8x64xf32>, vector<32x64xf32>, vector<8x32xf32> -> vector<8x32xf32>
    %c0_65 = arith.constant 0 : index
    %c0_66 = arith.constant 0 : index
    %107 = vector.load %arg20[%c0_65, %c0_66] : memref<1x32xf32, #tpu.memory_space<vmem>>, vector<1x32xf32>
    %108 = vector.broadcast %107 : vector<1x32xf32> to vector<8x32xf32>
    %109 = arith.addf %106, %108 : vector<8x32xf32>
    %110 = arith.mulf %109, %109 : vector<8x32xf32>
    %cst_67 = arith.constant dense<0.000000e+00> : vector<8xf32>
    %111 = vector.multi_reduction <add>, %110, %cst_67 [1] : vector<8x32xf32> to vector<8xf32>
    %112 = vector.shape_cast %111 : vector<8xf32> to vector<8x1xf32>
    %113 = math.sqrt %112 : vector<8x1xf32>
    %cst_68 = arith.constant 9.99999996E-13 : f32
    %114 = vector.broadcast %cst_68 : f32 to vector<8x1xf32>
    %115 = arith.maximumf %113, %114 : vector<8x1xf32>
    %116 = tpu.reciprocal %115 {approx = true} : vector<8x1xf32> -> vector<8x1xf32>
    %117 = vector.broadcast %116 : vector<8x1xf32> to vector<8x32xf32>
    %118 = arith.mulf %109, %117 : vector<8x32xf32>
    %c0_69 = arith.constant 0 : index
    %c0_70 = arith.constant 0 : index
    %119 = vector.load %arg27[%c0_69, %c0_70] : memref<8x32xf32, #tpu.memory_space<vmem>>, vector<8x32xf32>
    tpu.vector_store %arg27[%c0_69, %c0_70], %118 {strides = array<i32>} : memref<8x32xf32, #tpu.memory_space<vmem>>, vector<8x32xf32>,
    %120 = arith.mulf %118, %4 : vector<8x32xf32>
    %c0_71 = arith.constant 0 : index
    %c0_72 = arith.constant 0 : index
    %121 = vector.load %arg21[%c0_71, %c0_72] : memref<8x32xf32, #tpu.memory_space<vmem>>, vector<8x32xf32>
    %cst_73 = arith.constant dense<0.000000e+00> : vector<8x8xf32>
    %122 = tpu.matmul %120, %121, %cst_73 {dimension_numbers = #tpu.dot_dimension_numbers<[1], [1], [0], [0], [0, 0, 1, 0], [], []>} : vector<8x32xf32>, vector<8x32xf32>, vector<8x8xf32> -> vector<8x8xf32>
    %c0_74 = arith.constant 0 : index
    %c0_75 = arith.constant 0 : index
    %123 = vector.load %arg22[%c0_74, %c0_75] : memref<8x32xf32, #tpu.memory_space<vmem>>, vector<8x32xf32>
    %cst_76 = arith.constant dense<0.000000e+00> : vector<8x8xf32>
    %124 = tpu.matmul %118, %123, %cst_76 {dimension_numbers = #tpu.dot_dimension_numbers<[1], [1], [0], [0], [0, 0, 1, 0], [], []>} : vector<8x32xf32>, vector<8x32xf32>, vector<8x8xf32> -> vector<8x8xf32>
    %125 = arith.addf %122, %124 : vector<8x8xf32>
    %c0_77 = arith.constant 0 : index
    %c0_78 = arith.constant 0 : index
    %126 = vector.load %arg23[%c0_77, %c0_78] : memref<8x32xf32, #tpu.memory_space<vmem>>, vector<8x32xf32>
    %cst_79 = arith.constant dense<0.000000e+00> : vector<8x8xf32>
    %127 = tpu.matmul %4, %126, %cst_79 {dimension_numbers = #tpu.dot_dimension_numbers<[1], [1], [0], [0], [0, 0, 1, 0], [], []>} : vector<8x32xf32>, vector<8x32xf32>, vector<8x8xf32> -> vector<8x8xf32>
    %128 = arith.addf %125, %127 : vector<8x8xf32>
    %c0_80 = arith.constant 0 : index
    %c0_81 = arith.constant 0 : index
    %129 = vector.load %arg24[%c0_80, %c0_81] : memref<1x8xf32, #tpu.memory_space<vmem>>, vector<1x8xf32>
    %130 = vector.broadcast %129 : vector<1x8xf32> to vector<8x8xf32>
    %131 = arith.addf %128, %130 : vector<8x8xf32>
    %cst_82 = arith.constant 0.000000e+00 : f32
    %132 = vector.broadcast %cst_82 : f32 to vector<8x8xf32>
    %133 = arith.maximumf %131, %132 : vector<8x8xf32>
    %c0_83 = arith.constant 0 : index
    %c0_84 = arith.constant 0 : index
    %134 = vector.load %arg25[%c0_83, %c0_84] : memref<2x8xf32, #tpu.memory_space<vmem>>, vector<2x8xf32>
    %cst_85 = arith.constant dense<0.000000e+00> : vector<8x2xf32>
    %135 = tpu.matmul %133, %134, %cst_85 {dimension_numbers = #tpu.dot_dimension_numbers<[1], [1], [0], [0], [0, 0, 1, 0], [], []>} : vector<8x8xf32>, vector<2x8xf32>, vector<8x2xf32> -> vector<8x2xf32>
    %c0_86 = arith.constant 0 : index
    %c0_87 = arith.constant 0 : index
    %136 = vector.load %arg26[%c0_86, %c0_87] : memref<1x2xf32, #tpu.memory_space<vmem>>, vector<1x2xf32>
    %137 = vector.broadcast %136 : vector<1x2xf32> to vector<8x2xf32>
    %138 = arith.addf %135, %137 : vector<8x2xf32>
    %139 = tpu.iota {dimensions = array<i32: 1>} : vector<8x2xi32>
    %140 = arith.negf %138 : vector<8x2xf32>
    %141 = math.exp %140 : vector<8x2xf32>
    %cst_88 = arith.constant 1.000000e+00 : f32
    %142 = vector.broadcast %cst_88 : f32 to vector<8x2xf32>
    %143 = arith.addf %142, %141 : vector<8x2xf32>
    %144 = arith.divf %142, %143 : vector<8x2xf32>
    %cst_89 = arith.constant 0.000000e+00 : f32
    %145 = vector.broadcast %cst_89 : f32 to vector<8x2xf32>
    %146 = arith.maximumf %138, %145 : vector<8x2xf32>
    %147 = vector.broadcast %cst_89 : f32 to vector<8x2xf32>
    %148 = arith.subf %138, %147 : vector<8x2xf32>
    %149 = arith.cmpf one, %148, %148 : vector<8x2xf32>
    %150 = vector.broadcast %cst_89 : f32 to vector<8x2xf32>
    %151 = arith.addf %138, %150 : vector<8x2xf32>
    %152 = math.absf %148 : vector<8x2xf32>
    %cst_90 = arith.constant 0.000000e+00 : f32
    %153 = vector.broadcast %cst_90 : f32 to vector<8x2xf32>
    %154 = arith.subf %153, %152 : vector<8x2xf32>
    %155 = math.exp %154 : vector<8x2xf32>
    %156 = math.log1p %155 : vector<8x2xf32>
    %157 = arith.addf %146, %156 : vector<8x2xf32>
    %158 = arith.select %149, %151, %157 : vector<8x2xi1>, vector<8x2xf32>
    %cst_91 = arith.constant 0.899999976 : f32
    %159 = vector.broadcast %cst_91 : f32 to vector<8x2xf32>
    %160 = arith.mulf %159, %158 : vector<8x2xf32>
    %cst_92 = arith.constant 1.000000e-01 : f32
    %161 = vector.broadcast %cst_92 : f32 to vector<8x2xf32>
    %162 = arith.addf %161, %160 : vector<8x2xf32>
    %c0_i32 = arith.constant 0 : i32
    %163 = vector.broadcast %c0_i32 : i32 to vector<8x2xi32>
    %164 = arith.cmpi eq, %139, %163 : vector<8x2xi32>
    %165 = arith.select %164, %144, %162 : vector<8x2xi1>, vector<8x2xf32>
    %c0_93 = arith.constant 0 : index
    %c0_94 = arith.constant 0 : index
    %166 = vector.load %arg28[%c0_93, %c0_94] : memref<8x2xf32, #tpu.memory_space<vmem>>, vector<8x2xf32>
    tpu.vector_store %arg28[%c0_93, %c0_94], %165 {strides = array<i32>} : memref<8x2xf32, #tpu.memory_space<vmem>>, vector<8x2xf32>,
    return
  }
  func.func @transform_0(%arg0: i32) -> (i32, i32, i32) {
    %c0_i32 = arith.constant 0 : i32
    %c0_i32_0 = arith.constant 0 : i32
    %c0_i32_1 = arith.constant 0 : i32
    return %arg0, %c0_i32, %c0_i32_0 : i32, i32, i32
  }
  func.func @transform_1(%arg0: i32) -> (i32, i32, i32, i32) {
    %c0_i32 = arith.constant 0 : i32
    %c0_i32_0 = arith.constant 0 : i32
    %c0_i32_1 = arith.constant 0 : i32
    %c0_i32_2 = arith.constant 0 : i32
    return %arg0, %c0_i32, %c0_i32_0, %c0_i32_1 : i32, i32, i32, i32
  }
  func.func @transform_2(%arg0: i32) -> (i32, i32, i32) {
    %c0_i32 = arith.constant 0 : i32
    %c0_i32_0 = arith.constant 0 : i32
    %c0_i32_1 = arith.constant 0 : i32
    return %arg0, %c0_i32, %c0_i32_0 : i32, i32, i32
  }
  func.func @transform_3(%arg0: i32) -> (i32, i32) {
    %c0_i32 = arith.constant 0 : i32
    %c0_i32_0 = arith.constant 0 : i32
    return %arg0, %c0_i32 : i32, i32
  }
  func.func @transform_4(%arg0: i32) -> (i32, i32) {
    %c0_i32 = arith.constant 0 : i32
    %c0_i32_0 = arith.constant 0 : i32
    return %arg0, %c0_i32 : i32, i32
  }
  func.func @transform_5(%arg0: i32) -> (i32, i32) {
    %c0_i32 = arith.constant 0 : i32
    %c0_i32_0 = arith.constant 0 : i32
    %c0_i32_1 = arith.constant 0 : i32
    return %c0_i32, %c0_i32_0 : i32, i32
  }
  func.func @transform_6(%arg0: i32) -> (i32, i32) {
    %c0_i32 = arith.constant 0 : i32
    %c0_i32_0 = arith.constant 0 : i32
    %c0_i32_1 = arith.constant 0 : i32
    return %c0_i32, %c0_i32_0 : i32, i32
  }
  func.func @transform_7(%arg0: i32) -> (i32, i32) {
    %c0_i32 = arith.constant 0 : i32
    %c0_i32_0 = arith.constant 0 : i32
    %c0_i32_1 = arith.constant 0 : i32
    return %c0_i32, %c0_i32_0 : i32, i32
  }
  func.func @transform_8(%arg0: i32) -> (i32, i32) {
    %c0_i32 = arith.constant 0 : i32
    %c0_i32_0 = arith.constant 0 : i32
    %c0_i32_1 = arith.constant 0 : i32
    return %c0_i32, %c0_i32_0 : i32, i32
  }
  func.func @transform_9(%arg0: i32) -> (i32, i32) {
    %c0_i32 = arith.constant 0 : i32
    %c0_i32_0 = arith.constant 0 : i32
    %c0_i32_1 = arith.constant 0 : i32
    return %c0_i32, %c0_i32_0 : i32, i32
  }
  func.func @transform_10(%arg0: i32) -> (i32, i32) {
    %c0_i32 = arith.constant 0 : i32
    %c0_i32_0 = arith.constant 0 : i32
    %c0_i32_1 = arith.constant 0 : i32
    return %c0_i32, %c0_i32_0 : i32, i32
  }
  func.func @transform_11(%arg0: i32) -> (i32, i32) {
    %c0_i32 = arith.constant 0 : i32
    %c0_i32_0 = arith.constant 0 : i32
    %c0_i32_1 = arith.constant 0 : i32
    return %c0_i32, %c0_i32_0 : i32, i32
  }
  func.func @transform_12(%arg0: i32) -> (i32, i32) {
    %c0_i32 = arith.constant 0 : i32
    %c0_i32_0 = arith.constant 0 : i32
    %c0_i32_1 = arith.constant 0 : i32
    return %c0_i32, %c0_i32_0 : i32, i32
  }
  func.func @transform_13(%arg0: i32) -> (i32, i32) {
    %c0_i32 = arith.constant 0 : i32
    %c0_i32_0 = arith.constant 0 : i32
    %c0_i32_1 = arith.constant 0 : i32
    return %c0_i32, %c0_i32_0 : i32, i32
  }
  func.func @transform_14(%arg0: i32) -> (i32, i32) {
    %c0_i32 = arith.constant 0 : i32
    %c0_i32_0 = arith.constant 0 : i32
    %c0_i32_1 = arith.constant 0 : i32
    return %c0_i32, %c0_i32_0 : i32, i32
  }
  func.func @transform_15(%arg0: i32) -> (i32, i32) {
    %c0_i32 = arith.constant 0 : i32
    %c0_i32_0 = arith.constant 0 : i32
    %c0_i32_1 = arith.constant 0 : i32
    return %c0_i32, %c0_i32_0 : i32, i32
  }
  func.func @transform_16(%arg0: i32) -> (i32, i32) {
    %c0_i32 = arith.constant 0 : i32
    %c0_i32_0 = arith.constant 0 : i32
    %c0_i32_1 = arith.constant 0 : i32
    return %c0_i32, %c0_i32_0 : i32, i32
  }
  func.func @transform_17(%arg0: i32) -> (i32, i32) {
    %c0_i32 = arith.constant 0 : i32
    %c0_i32_0 = arith.constant 0 : i32
    %c0_i32_1 = arith.constant 0 : i32
    return %c0_i32, %c0_i32_0 : i32, i32
  }
  func.func @transform_18(%arg0: i32) -> (i32, i32) {
    %c0_i32 = arith.constant 0 : i32
    %c0_i32_0 = arith.constant 0 : i32
    %c0_i32_1 = arith.constant 0 : i32
    return %c0_i32, %c0_i32_0 : i32, i32
  }
  func.func @transform_19(%arg0: i32) -> (i32, i32) {
    %c0_i32 = arith.constant 0 : i32
    %c0_i32_0 = arith.constant 0 : i32
    %c0_i32_1 = arith.constant 0 : i32
    return %c0_i32, %c0_i32_0 : i32, i32
  }
  func.func @transform_20(%arg0: i32) -> (i32, i32) {
    %c0_i32 = arith.constant 0 : i32
    %c0_i32_0 = arith.constant 0 : i32
    %c0_i32_1 = arith.constant 0 : i32
    return %c0_i32, %c0_i32_0 : i32, i32
  }
  func.func @transform_21(%arg0: i32) -> (i32, i32) {
    %c0_i32 = arith.constant 0 : i32
    %c0_i32_0 = arith.constant 0 : i32
    %c0_i32_1 = arith.constant 0 : i32
    return %c0_i32, %c0_i32_0 : i32, i32
  }
  func.func @transform_22(%arg0: i32) -> (i32, i32) {
    %c0_i32 = arith.constant 0 : i32
    %c0_i32_0 = arith.constant 0 : i32
    %c0_i32_1 = arith.constant 0 : i32
    return %c0_i32, %c0_i32_0 : i32, i32
  }
  func.func @transform_23(%arg0: i32) -> (i32, i32) {
    %c0_i32 = arith.constant 0 : i32
    %c0_i32_0 = arith.constant 0 : i32
    %c0_i32_1 = arith.constant 0 : i32
    return %c0_i32, %c0_i32_0 : i32, i32
  }
  func.func @transform_24(%arg0: i32) -> (i32, i32) {
    %c0_i32 = arith.constant 0 : i32
    %c0_i32_0 = arith.constant 0 : i32
    %c0_i32_1 = arith.constant 0 : i32
    return %c0_i32, %c0_i32_0 : i32, i32
  }
  func.func @transform_25(%arg0: i32) -> (i32, i32) {
    %c0_i32 = arith.constant 0 : i32
    %c0_i32_0 = arith.constant 0 : i32
    %c0_i32_1 = arith.constant 0 : i32
    return %c0_i32, %c0_i32_0 : i32, i32
  }
  func.func @transform_26(%arg0: i32) -> (i32, i32) {
    %c0_i32 = arith.constant 0 : i32
    %c0_i32_0 = arith.constant 0 : i32
    return %arg0, %c0_i32 : i32, i32
  }
  func.func @transform_27(%arg0: i32) -> (i32, i32) {
    %c0_i32 = arith.constant 0 : i32
    %c0_i32_0 = arith.constant 0 : i32
    return %arg0, %c0_i32 : i32, i32
  }
}

</mosaic_0001>

<llo_original>
// kernel: tpu_custom_call.1
$region0: #{tpu_custom_call.1}
  #allocation0 [shape = 'u32[]', space=smem, size = 0x4, offset = 0x4, fixed_abs, tag = 'smem constant byte address 0x4 - core index']
  #allocation1 [shape = 'u32[144,128]{1,0:T(1,128)}', space=vmem, size = 0x12000, scoped, tag = 'internal scratch']
  %s0 = inlined_call_operand.vmem [shape: f32[16,4,32], index: 0, kind: input, shape index: {}]
  %s1 = inlined_call_operand.hbm [shape: f32[16,4,4,32], index: 1, kind: input, shape index: {}]
  %s2 = inlined_call_operand.vmem [shape: f32[16,4,4], index: 2, kind: input, shape index: {}]
  %s3 = inlined_call_operand.vmem [shape: f32[16,4], index: 3, kind: input, shape index: {}]
  %s4 = inlined_call_operand.hbm [shape: f32[16,32], index: 4, kind: input, shape index: {}]
  %s5 = inlined_call_operand.hbm [shape: f32[1,32], index: 5, kind: input, shape index: {}]
  %s6 = inlined_call_operand.hbm [shape: f32[1,32], index: 6, kind: input, shape index: {}]
  %s7 = inlined_call_operand.hbm [shape: f32[1,32], index: 7, kind: input, shape index: {}]
  %s8 = inlined_call_operand.vmem [shape: f32[32,32], index: 8, kind: input, shape index: {}]
  %s9 = inlined_call_operand.vmem [shape: f32[32,32], index: 9, kind: input, shape index: {}]
  %s10 = inlined_call_operand.vmem [shape: f32[32,32], index: 10, kind: input, shape index: {}]
  %s11 = inlined_call_operand.hbm [shape: f32[1,32], index: 11, kind: input, shape index: {}]
  %s12 = inlined_call_operand.hbm [shape: f32[1,32], index: 12, kind: input, shape index: {}]
  %s13 = inlined_call_operand.hbm [shape: f32[1,32], index: 13, kind: input, shape index: {}]
  %s14 = inlined_call_operand.hbm [shape: f32[32,32], index: 14, kind: input, shape index: {}]
  %s15 = inlined_call_operand.hbm [shape: f32[1,32], index: 15, kind: input, shape index: {}]
  %s16 = inlined_call_operand.vmem [shape: f32[64,32], index: 16, kind: input, shape index: {}]
  %s17 = inlined_call_operand.hbm [shape: f32[1,64], index: 17, kind: input, shape index: {}]
  %s18 = inlined_call_operand.vmem [shape: f32[32,64], index: 18, kind: input, shape index: {}]
  %s19 = inlined_call_operand.hbm [shape: f32[1,32], index: 19, kind: input, shape index: {}]
  %s20 = inlined_call_operand.vmem [shape: f32[8,32], index: 20, kind: input, shape index: {}]
  %s21 = inlined_call_operand.hbm [shape: f32[8,32], index: 21, kind: input, shape index: {}]
  %s22 = inlined_call_operand.hbm [shape: f32[8,32], index: 22, kind: input, shape index: {}]
  %s23 = inlined_call_operand.vmem [shape: f32[1,8], index: 23, kind: input, shape index: {}]
  %s24 = inlined_call_operand.vmem [shape: f32[2,8], index: 24, kind: input, shape index: {}]
  %s25 = inlined_call_operand.vmem [shape: f32[1,2], index: 25, kind: input, shape index: {}]
  %s26 = inlined_call_operand.hbm [shape: f32[16,32], index: 26, kind: output, shape index: {0}]
  %s27 = inlined_call_operand.vmem [shape: f32[16,2], index: 27, kind: output, shape index: {1}]
  %28 = xla_tuple %s26, %s27
  %s29 = sld [smem:[#allocation0]]
  $region201: #{tpu_custom_call.1} parent=0
    _
  %s31 = ssub.s32 1, %s29
  %s32 = scalar_select 0, %s31, %s29
  $region1: #{tpu_custom_call.1} parent=0
    #allocation2 [shape = 'u8[131072]{0}', space=vmem, size = 0x20000, scoped, tag = 'input window, operand 1']
    #allocation3 [shape = 's32[2]{0}', space=sflag, size = 0x8, scoped, tag = 'scoped memory for tpu_custom_call.1']
    #allocation4 [shape = 's32[2]{0}', space=sflag, size = 0x8, scoped, tag = 'scoped memory for tpu_custom_call.1']
    #allocation5 [shape = 'u8[8192]{0}', space=vmem, size = 0x2000, scoped, tag = 'input window, operand 4']
    #allocation6 [shape = 's32[2]{0}', space=sflag, size = 0x8, scoped, tag = 'scoped memory for tpu_custom_call.1']
    #allocation7 [shape = 'u8[512]{0}', space=vmem, size = 0x400, scoped, tag = 'input window, operand 5, single buffered']
    #allocation8 [shape = 'u8[512]{0}', space=vmem, size = 0x400, scoped, tag = 'input window, operand 6, single buffered']
    #allocation9 [shape = 's32[1]{0}', space=sflag, size = 0x4, scoped, tag = 'scoped memory for tpu_custom_call.1']
    #allocation10 [shape = 'u8[512]{0}', space=vmem, size = 0x400, scoped, tag = 'input window, operand 7, single buffered']
    #allocation11 [shape = 'u8[512]{0}', space=vmem, size = 0x400, scoped, tag = 'input window, operand 11, single buffered']
    #allocation12 [shape = 's32[1]{0}', space=sflag, size = 0x4, scoped, tag = 'scoped memory for tpu_custom_call.1']
    #allocation13 [shape = 'u8[512]{0}', space=vmem, size = 0x400, scoped, tag = 'input window, operand 12, single buffered']
    #allocation14 [shape = 'u8[512]{0}', space=vmem, size = 0x400, scoped, tag = 'input window, operand 13, single buffered']
    #allocation15 [shape = 's32[1]{0}', space=sflag, size = 0x4, scoped, tag = 'scoped memory for tpu_custom_call.1']
    #allocation16 [shape = 'u8[16384]{0}', space=vmem, size = 0x4000, scoped, tag = 'input window, operand 14, single buffered']
    #allocation17 [shape = 'u8[512]{0}', space=vmem, size = 0x400, scoped, tag = 'input window, operand 15, single buffered']
    #allocation18 [shape = 's32[1]{0}', space=sflag, size = 0x4, scoped, tag = 'scoped memory for tpu_custom_call.1']
    #allocation19 [shape = 'u8[512]{0}', space=vmem, size = 0x400, scoped, tag = 'input window, operand 17, single buffered']
    #allocation20 [shape = 'u8[512]{0}', space=vmem, size = 0x400, scoped, tag = 'input window, operand 19, single buffered']
    #allocation21 [shape = 's32[1]{0}', space=sflag, size = 0x4, scoped, tag = 'scoped memory for tpu_custom_call.1']
    #allocation22 [shape = 'u8[4096]{0}', space=vmem, size = 0x1000, scoped, tag = 'input window, operand 21, single buffered']
    #allocation23 [shape = 'u8[4096]{0}', space=vmem, size = 0x1000, scoped, tag = 'input window, operand 22, single buffered']
    #allocation24 [shape = 's32[1]{0}', space=sflag, size = 0x4, scoped, tag = 'scoped memory for tpu_custom_call.1']
    #allocation25 [shape = 'u8[8192]{0}', space=vmem, size = 0x2000, scoped, tag = 'output window, operand 0']
    %33 = vsyncpa [#allocation3], 0
    %s34 = scalar_lea.sflag [#allocation3], 1
    %35 = vsyncpa %s34, 0
    %36 = vsyncpa [#allocation6], 0
    %s37 = scalar_lea.sflag [#allocation6], 1
    %38 = vsyncpa %s37, 0
    %39 = vsyncpa [#allocation9], 0
    %40 = vsyncpa [#allocation12], 0
    %41 = vsyncpa [#allocation15], 0
    %42 = vsyncpa [#allocation18], 0
    %43 = vsyncpa [#allocation21], 0
    %44 = vsyncpa [#allocation24], 0
    %45 = vsyncpa [#allocation4], 0
    %s46 = scalar_lea.sflag [#allocation4], 1
    %47 = vsyncpa %s46, 0
    loop: start=0, step=1, limit=4
    $region2: #{tpu_custom_call.1} parent=1 // loop_pre_header
      _
    $region3: #{tpu_custom_call.1} parent=1 // loop_header
      %s49 = sphi 0, %s53
      %p50 = scmp.ge.s32.totalorder %s49, 4
      %s59 = sphi 0, %s61
      %s62 = sphi 0, %s59
      %s63 = sphi 0, %s62
      %s79 = sphi 0, %s63
      %s85 = sphi 0, %s87
      %s88 = sphi 0, %s85
      %s89 = sphi 0, %s88
      %s105 = sphi 0, %s89
      %s111 = sphi 0, %s113
      %s114 = sphi 0, %s111
      %s115 = sphi 0, %s114
      %s131 = sphi 0, %s115
      %s137 = sphi 0, %s139
      %s140 = sphi 0, %s137
      %s141 = sphi 0, %s140
      %s157 = sphi 0, %s141
      %s163 = sphi 0, %s165
      %s166 = sphi 0, %s163
      %s167 = sphi 0, %s166
      %s183 = sphi 0, %s167
      %s187 = sphi 0, %s187
      %s189 = sphi 0, %s187
      %s190 = sphi 0, %s189
      %s204 = sphi 0, %s190
      %s208 = sphi 0, %s208
      %s210 = sphi 0, %s208
      %s211 = sphi 0, %s210
      %s225 = sphi 0, %s211
      %s229 = sphi 0, %s229
      %s231 = sphi 0, %s229
      %s232 = sphi 0, %s231
      %s246 = sphi 0, %s232
      %s250 = sphi 0, %s250
      %s252 = sphi 0, %s250
      %s253 = sphi 0, %s252
      %s267 = sphi 0, %s253
      %s271 = sphi 0, %s271
      %s273 = sphi 0, %s271
      %s274 = sphi 0, %s273
      %s288 = sphi 0, %s274
      %s292 = sphi 0, %s292
      %s294 = sphi 0, %s292
      %s295 = sphi 0, %s294
      %s309 = sphi 0, %s295
      %s313 = sphi 0, %s313
      %s315 = sphi 0, %s313
      %s316 = sphi 0, %s315
      %s330 = sphi 0, %s316
      %s334 = sphi 0, %s334
      %s336 = sphi 0, %s334
      %s337 = sphi 0, %s336
      %s351 = sphi 0, %s337
      %s355 = sphi 0, %s355
      %s357 = sphi 0, %s355
      %s358 = sphi 0, %s357
      %s372 = sphi 0, %s358
      %s376 = sphi 0, %s376
      %s378 = sphi 0, %s376
      %s379 = sphi 0, %s378
      %s393 = sphi 0, %s379
      %s397 = sphi 0, %s397
      %s399 = sphi 0, %s397
      %s400 = sphi 0, %s399
      %s414 = sphi 0, %s400
      %s418 = sphi 0, %s418
      %s420 = sphi 0, %s418
      %s421 = sphi 0, %s420
      %s435 = sphi 0, %s421
      %s439 = sphi 0, %s439
      %s441 = sphi 0, %s439
      %s442 = sphi 0, %s441
      %s456 = sphi 0, %s442
      %s460 = sphi 0, %s460
      %s462 = sphi 0, %s460
      %s463 = sphi 0, %s462
      %s477 = sphi 0, %s463
      %s481 = sphi 0, %s481
      %s483 = sphi 0, %s481
      %s484 = sphi 0, %s483
      %s498 = sphi 0, %s484
      %s502 = sphi 0, %s502
      %s504 = sphi 0, %s502
      %s505 = sphi 0, %s504
      %s519 = sphi 0, %s505
      %s523 = sphi 0, %s523
      %s525 = sphi 0, %s523
      %s526 = sphi 0, %s525
      %s540 = sphi 0, %s526
      %s544 = sphi 0, %s544
      %s546 = sphi 0, %s544
      %s547 = sphi 0, %s546
      %s561 = sphi 0, %s547
      %s565 = sphi 0, %s565
      %s567 = sphi 0, %s565
      %s568 = sphi 0, %s567
      %s582 = sphi 0, %s568
      %s586 = sphi 0, %s586
      %s588 = sphi 0, %s586
      %s589 = sphi 0, %s588
      %s603 = sphi 0, %s589
      %s607 = sphi 0, %s607
      %s609 = sphi 0, %s607
      %s610 = sphi 0, %s609
      %s624 = sphi 0, %s610
      %s630 = sphi 0, %s632
      %s633 = sphi 0, %s630
      %s634 = sphi 0, %s633
      %s650 = sphi 0, %s634
      %s656 = sphi 0, %s658
      %s659 = sphi 0, %s656
      %s660 = sphi 0, %s659
      %s676 = sphi 0, %s660
    $region4: #{tpu_custom_call.1} parent=1 // loop_header_branch
      %52 = sbr.rel (%p50) target = $region8
    $region5: #{tpu_custom_call.1} parent=1 // loop_body
      %s54 = ssub.s32 %s49, 1
      %s55 = ssub.s32 %s49, 2
      %s56 = sadd.s32 %s49, 1
      %s57 = ssub.s32 %s49, %s56
      %p58 = scmp.eq.s32.totalorder %s57, 0
      %s60 = sadd.s32 %s59, 1
      %s61 = scalar_select %p58, %s59, %s60
      %p64 = pneg %p58
      %p65 = scmp.eq.s32.totalorder %s49, 1
      %p66 = por %p64, %p65
      %p67 = scmp.ne.s32.totalorder %s59, %s62
      %p68 = scmp.eq.s32.totalorder %s49, 0
      %p69 = por %p67, %p68
      %p70 = scmp.ne.s32.totalorder %s59, %s62
      %p71 = scmp.eq.s32.totalorder %s54, 1
      %p72 = por %p70, %p71
      %p73 = scmp.ne.s32.totalorder %s62, %s63
      %p74 = scmp.eq.s32.totalorder %s54, 0
      %p75 = por %p73, %p74
      %p76 = scmp.ne.s32.totalorder %s62, %s63
      %p77 = scmp.eq.s32.totalorder %s55, 1
      %p78 = por %p76, %p77
      %p80 = scmp.ne.s32.totalorder %s63, %s79
      %p81 = scmp.eq.s32.totalorder %s55, 0
      %p82 = por %p80, %p81
      %s83 = ssub.s32 %s49, %s56
      %p84 = scmp.eq.s32.totalorder %s83, 0
      %s86 = sadd.s32 %s85, 1
      %s87 = scalar_select %p84, %s85, %s86
      %p90 = pneg %p84
      %p91 = scmp.eq.s32.totalorder %s49, 1
      %p92 = por %p90, %p91
      %p93 = scmp.ne.s32.totalorder %s85, %s88
      %p94 = scmp.eq.s32.totalorder %s49, 0
      %p95 = por %p93, %p94
      %p96 = scmp.ne.s32.totalorder %s85, %s88
      %p97 = scmp.eq.s32.totalorder %s54, 1
      %p98 = por %p96, %p97
      %p99 = scmp.ne.s32.totalorder %s88, %s89
      %p100 = scmp.eq.s32.totalorder %s54, 0
      %p101 = por %p99, %p100
      %p102 = scmp.ne.s32.totalorder %s88, %s89
      %p103 = scmp.eq.s32.totalorder %s55, 1
      %p104 = por %p102, %p103
      %p106 = scmp.ne.s32.totalorder %s89, %s105
      %p107 = scmp.eq.s32.totalorder %s55, 0
      %p108 = por %p106, %p107
      %s109 = ssub.s32 %s49, %s56
      %p110 = scmp.eq.s32.totalorder %s109, 0
      %s112 = sadd.s32 %s111, 1
      %s113 = scalar_select %p110, %s111, %s112
      %p116 = pneg %p110
      %p117 = scmp.eq.s32.totalorder %s49, 1
      %p118 = por %p116, %p117
      %p119 = scmp.ne.s32.totalorder %s111, %s114
      %p120 = scmp.eq.s32.totalorder %s49, 0
      %p121 = por %p119, %p120
      %p122 = scmp.ne.s32.totalorder %s111, %s114
      %p123 = scmp.eq.s32.totalorder %s54, 1
      %p124 = por %p122, %p123
      %p125 = scmp.ne.s32.totalorder %s114, %s115
      %p126 = scmp.eq.s32.totalorder %s54, 0
      %p127 = por %p125, %p126
      %p128 = scmp.ne.s32.totalorder %s114, %s115
      %p129 = scmp.eq.s32.totalorder %s55, 1
      %p130 = por %p128, %p129
      %p132 = scmp.ne.s32.totalorder %s115, %s131
      %p133 = scmp.eq.s32.totalorder %s55, 0
      %p134 = por %p132, %p133
      %s135 = ssub.s32 %s49, %s56
      %p136 = scmp.eq.s32.totalorder %s135, 0
      %s138 = sadd.s32 %s137, 1
      %s139 = scalar_select %p136, %s137, %s138
      %p142 = pneg %p136
      %p143 = scmp.eq.s32.totalorder %s49, 1
      %p144 = por %p142, %p143
      %p145 = scmp.ne.s32.totalorder %s137, %s140
      %p146 = scmp.eq.s32.totalorder %s49, 0
      %p147 = por %p145, %p146
      %p148 = scmp.ne.s32.totalorder %s137, %s140
      %p149 = scmp.eq.s32.totalorder %s54, 1
      %p150 = por %p148, %p149
      %p151 = scmp.ne.s32.totalorder %s140, %s141
      %p152 = scmp.eq.s32.totalorder %s54, 0
      %p153 = por %p151, %p152
      %p154 = scmp.ne.s32.totalorder %s140, %s141
      %p155 = scmp.eq.s32.totalorder %s55, 1
      %p156 = por %p154, %p155
      %p158 = scmp.ne.s32.totalorder %s141, %s157
      %p159 = scmp.eq.s32.totalorder %s55, 0
      %p160 = por %p158, %p159
      %s161 = ssub.s32 %s49, %s56
      %p162 = scmp.eq.s32.totalorder %s161, 0
      %s164 = sadd.s32 %s163, 1
      %s165 = scalar_select %p162, %s163, %s164
      %p168 = pneg %p162
      %p169 = scmp.eq.s32.totalorder %s49, 1
      %p170 = por %p168, %p169
      %p171 = scmp.ne.s32.totalorder %s163, %s166
      %p172 = scmp.eq.s32.totalorder %s49, 0
      %p173 = por %p171, %p172
      %p174 = scmp.ne.s32.totalorder %s163, %s166
      %p175 = scmp.eq.s32.totalorder %s54, 1
      %p176 = por %p174, %p175
      %p177 = scmp.ne.s32.totalorder %s166, %s167
      %p178 = scmp.eq.s32.totalorder %s54, 0
      %p179 = por %p177, %p178
      %p180 = scmp.ne.s32.totalorder %s166, %s167
      %p181 = scmp.eq.s32.totalorder %s55, 1
      %p182 = por %p180, %p181
      %p184 = scmp.ne.s32.totalorder %s167, %s183
      %p185 = scmp.eq.s32.totalorder %s55, 0
      %p186 = por %p184, %p185
      %s188 = sadd.s32 %s187, 1
      %p191 = scmp.eq.s32.totalorder %s49, 1
      %p192 = scmp.ne.s32.totalorder %s187, %s189
      %p193 = scmp.eq.s32.totalorder %s49, 0
      %p194 = por %p192, %p193
      %p195 = scmp.ne.s32.totalorder %s187, %s189
      %p196 = scmp.eq.s32.totalorder %s54, 1
      %p197 = por %p195, %p196
      %p198 = scmp.ne.s32.totalorder %s189, %s190
      %p199 = scmp.eq.s32.totalorder %s54, 0
      %p200 = por %p198, %p199
      %p201 = scmp.ne.s32.totalorder %s189, %s190
      %p202 = scmp.eq.s32.totalorder %s55, 1
      %p203 = por %p201, %p202
      %p205 = scmp.ne.s32.totalorder %s190, %s204
      %p206 = scmp.eq.s32.totalorder %s55, 0
      %p207 = por %p205, %p206
      %s209 = sadd.s32 %s208, 1
      %p212 = scmp.eq.s32.totalorder %s49, 1
      %p213 = scmp.ne.s32.totalorder %s208, %s210
      %p214 = scmp.eq.s32.totalorder %s49, 0
      %p215 = por %p213, %p214
      %p216 = scmp.ne.s32.totalorder %s208, %s210
      %p217 = scmp.eq.s32.totalorder %s54, 1
      %p218 = por %p216, %p217
      %p219 = scmp.ne.s32.totalorder %s210, %s211
      %p220 = scmp.eq.s32.totalorder %s54, 0
      %p221 = por %p219, %p220
      %p222 = scmp.ne.s32.totalorder %s210, %s211
      %p223 = scmp.eq.s32.totalorder %s55, 1
      %p224 = por %p222, %p223
      %p226 = scmp.ne.s32.totalorder %s211, %s225
      %p227 = scmp.eq.s32.totalorder %s55, 0
      %p228 = por %p226, %p227
      %s230 = sadd.s32 %s229, 1
      %p233 = scmp.eq.s32.totalorder %s49, 1
      %p234 = scmp.ne.s32.totalorder %s229, %s231
      %p235 = scmp.eq.s32.totalorder %s49, 0
      %p236 = por %p234, %p235
      %p237 = scmp.ne.s32.totalorder %s229, %s231
      %p238 = scmp.eq.s32.totalorder %s54, 1
      %p239 = por %p237, %p238
      %p240 = scmp.ne.s32.totalorder %s231, %s232
      %p241 = scmp.eq.s32.totalorder %s54, 0
      %p242 = por %p240, %p241
      %p243 = scmp.ne.s32.totalorder %s231, %s232
      %p244 = scmp.eq.s32.totalorder %s55, 1
      %p245 = por %p243, %p244
      %p247 = scmp.ne.s32.totalorder %s232, %s246
      %p248 = scmp.eq.s32.totalorder %s55, 0
      %p249 = por %p247, %p248
      %s251 = sadd.s32 %s250, 1
      %p254 = scmp.eq.s32.totalorder %s49, 1
      %p255 = scmp.ne.s32.totalorder %s250, %s252
      %p256 = scmp.eq.s32.totalorder %s49, 0
      %p257 = por %p255, %p256
      %p258 = scmp.ne.s32.totalorder %s250, %s252
      %p259 = scmp.eq.s32.totalorder %s54, 1
      %p260 = por %p258, %p259
      %p261 = scmp.ne.s32.totalorder %s252, %s253
      %p262 = scmp.eq.s32.totalorder %s54, 0
      %p263 = por %p261, %p262
      %p264 = scmp.ne.s32.totalorder %s252, %s253
      %p265 = scmp.eq.s32.totalorder %s55, 1
      %p266 = por %p264, %p265
      %p268 = scmp.ne.s32.totalorder %s253, %s267
      %p269 = scmp.eq.s32.totalorder %s55, 0
      %p270 = por %p268, %p269
      %s272 = sadd.s32 %s271, 1
      %p275 = scmp.eq.s32.totalorder %s49, 1
      %p276 = scmp.ne.s32.totalorder %s271, %s273
      %p277 = scmp.eq.s32.totalorder %s49, 0
      %p278 = por %p276, %p277
      %p279 = scmp.ne.s32.totalorder %s271, %s273
      %p280 = scmp.eq.s32.totalorder %s54, 1
      %p281 = por %p279, %p280
      %p282 = scmp.ne.s32.totalorder %s273, %s274
      %p283 = scmp.eq.s32.totalorder %s54, 0
      %p284 = por %p282, %p283
      %p285 = scmp.ne.s32.totalorder %s273, %s274
      %p286 = scmp.eq.s32.totalorder %s55, 1
      %p287 = por %p285, %p286
      %p289 = scmp.ne.s32.totalorder %s274, %s288
      %p290 = scmp.eq.s32.totalorder %s55, 0
      %p291 = por %p289, %p290
      %s293 = sadd.s32 %s292, 1
      %p296 = scmp.eq.s32.totalorder %s49, 1
      %p297 = scmp.ne.s32.totalorder %s292, %s294
      %p298 = scmp.eq.s32.totalorder %s49, 0
      %p299 = por %p297, %p298
      %p300 = scmp.ne.s32.totalorder %s292, %s294
      %p301 = scmp.eq.s32.totalorder %s54, 1
      %p302 = por %p300, %p301
      %p303 = scmp.ne.s32.totalorder %s294, %s295
      %p304 = scmp.eq.s32.totalorder %s54, 0
      %p305 = por %p303, %p304
      %p306 = scmp.ne.s32.totalorder %s294, %s295
      %p307 = scmp.eq.s32.totalorder %s55, 1
      %p308 = por %p306, %p307
      %p310 = scmp.ne.s32.totalorder %s295, %s309
      %p311 = scmp.eq.s32.totalorder %s55, 0
      %p312 = por %p310, %p311
      %s314 = sadd.s32 %s313, 1
      %p317 = scmp.eq.s32.totalorder %s49, 1
      %p318 = scmp.ne.s32.totalorder %s313, %s315
      %p319 = scmp.eq.s32.totalorder %s49, 0
      %p320 = por %p318, %p319
      %p321 = scmp.ne.s32.totalorder %s313, %s315
      %p322 = scmp.eq.s32.totalorder %s54, 1
      %p323 = por %p321, %p322
      %p324 = scmp.ne.s32.totalorder %s315, %s316
      %p325 = scmp.eq.s32.totalorder %s54, 0
      %p326 = por %p324, %p325
      %p327 = scmp.ne.s32.totalorder %s315, %s316
      %p328 = scmp.eq.s32.totalorder %s55, 1
      %p329 = por %p327, %p328
      %p331 = scmp.ne.s32.totalorder %s316, %s330
      %p332 = scmp.eq.s32.totalorder %s55, 0
      %p333 = por %p331, %p332
      %s335 = sadd.s32 %s334, 1
      %p338 = scmp.eq.s32.totalorder %s49, 1
      %p339 = scmp.ne.s32.totalorder %s334, %s336
      %p340 = scmp.eq.s32.totalorder %s49, 0
      %p341 = por %p339, %p340
      %p342 = scmp.ne.s32.totalorder %s334, %s336
      %p343 = scmp.eq.s32.totalorder %s54, 1
      %p344 = por %p342, %p343
      %p345 = scmp.ne.s32.totalorder %s336, %s337
      %p346 = scmp.eq.s32.totalorder %s54, 0
      %p347 = por %p345, %p346
      %p348 = scmp.ne.s32.totalorder %s336, %s337
      %p349 = scmp.eq.s32.totalorder %s55, 1
      %p350 = por %p348, %p349
      %p352 = scmp.ne.s32.totalorder %s337, %s351
      %p353 = scmp.eq.s32.totalorder %s55, 0
      %p354 = por %p352, %p353
      %s356 = sadd.s32 %s355, 1
      %p359 = scmp.eq.s32.totalorder %s49, 1
      %p360 = scmp.ne.s32.totalorder %s355, %s357
      %p361 = scmp.eq.s32.totalorder %s49, 0
      %p362 = por %p360, %p361
      %p363 = scmp.ne.s32.totalorder %s355, %s357
      %p364 = scmp.eq.s32.totalorder %s54, 1
      %p365 = por %p363, %p364
      %p366 = scmp.ne.s32.totalorder %s357, %s358
      %p367 = scmp.eq.s32.totalorder %s54, 0
      %p368 = por %p366, %p367
      %p369 = scmp.ne.s32.totalorder %s357, %s358
      %p370 = scmp.eq.s32.totalorder %s55, 1
      %p371 = por %p369, %p370
      %p373 = scmp.ne.s32.totalorder %s358, %s372
      %p374 = scmp.eq.s32.totalorder %s55, 0
      %p375 = por %p373, %p374
      %s377 = sadd.s32 %s376, 1
      %p380 = scmp.eq.s32.totalorder %s49, 1
      %p381 = scmp.ne.s32.totalorder %s376, %s378
      %p382 = scmp.eq.s32.totalorder %s49, 0
      %p383 = por %p381, %p382
      %p384 = scmp.ne.s32.totalorder %s376, %s378
      %p385 = scmp.eq.s32.totalorder %s54, 1
      %p386 = por %p384, %p385
      %p387 = scmp.ne.s32.totalorder %s378, %s379
      %p388 = scmp.eq.s32.totalorder %s54, 0
      %p389 = por %p387, %p388
      %p390 = scmp.ne.s32.totalorder %s378, %s379
      %p391 = scmp.eq.s32.totalorder %s55, 1
      %p392 = por %p390, %p391
      %p394 = scmp.ne.s32.totalorder %s379, %s393
      %p395 = scmp.eq.s32.totalorder %s55, 0
      %p396 = por %p394, %p395
      %s398 = sadd.s32 %s397, 1
      %p401 = scmp.eq.s32.totalorder %s49, 1
      %p402 = scmp.ne.s32.totalorder %s397, %s399
      %p403 = scmp.eq.s32.totalorder %s49, 0
      %p404 = por %p402, %p403
      %p405 = scmp.ne.s32.totalorder %s397, %s399
      %p406 = scmp.eq.s32.totalorder %s54, 1
      %p407 = por %p405, %p406
      %p408 = scmp.ne.s32.totalorder %s399, %s400
      %p409 = scmp.eq.s32.totalorder %s54, 0
      %p410 = por %p408, %p409
      %p411 = scmp.ne.s32.totalorder %s399, %s400
      %p412 = scmp.eq.s32.totalorder %s55, 1
      %p413 = por %p411, %p412
      %p415 = scmp.ne.s32.totalorder %s400, %s414
      %p416 = scmp.eq.s32.totalorder %s55, 0
      %p417 = por %p415, %p416
      %s419 = sadd.s32 %s418, 1
      %p422 = scmp.eq.s32.totalorder %s49, 1
      %p423 = scmp.ne.s32.totalorder %s418, %s420
      %p424 = scmp.eq.s32.totalorder %s49, 0
      %p425 = por %p423, %p424
      %p426 = scmp.ne.s32.totalorder %s418, %s420
      %p427 = scmp.eq.s32.totalorder %s54, 1
      %p428 = por %p426, %p427
      %p429 = scmp.ne.s32.totalorder %s420, %s421
      %p430 = scmp.eq.s32.totalorder %s54, 0
      %p431 = por %p429, %p430
      %p432 = scmp.ne.s32.totalorder %s420, %s421
      %p433 = scmp.eq.s32.totalorder %s55, 1
      %p434 = por %p432, %p433
      %p436 = scmp.ne.s32.totalorder %s421, %s435
      %p437 = scmp.eq.s32.totalorder %s55, 0
      %p438 = por %p436, %p437
      %s440 = sadd.s32 %s439, 1
      %p443 = scmp.eq.s32.totalorder %s49, 1
      %p444 = scmp.ne.s32.totalorder %s439, %s441
      %p445 = scmp.eq.s32.totalorder %s49, 0
      %p446 = por %p444, %p445
      %p447 = scmp.ne.s32.totalorder %s439, %s441
      %p448 = scmp.eq.s32.totalorder %s54, 1
      %p449 = por %p447, %p448
      %p450 = scmp.ne.s32.totalorder %s441, %s442
      %p451 = scmp.eq.s32.totalorder %s54, 0
      %p452 = por %p450, %p451
      %p453 = scmp.ne.s32.totalorder %s441, %s442
      %p454 = scmp.eq.s32.totalorder %s55, 1
      %p455 = por %p453, %p454
      %p457 = scmp.ne.s32.totalorder %s442, %s456
      %p458 = scmp.eq.s32.totalorder %s55, 0
      %p459 = por %p457, %p458
      %s461 = sadd.s32 %s460, 1
      %p464 = scmp.eq.s32.totalorder %s49, 1
      %p465 = scmp.ne.s32.totalorder %s460, %s462
      %p466 = scmp.eq.s32.totalorder %s49, 0
      %p467 = por %p465, %p466
      %p468 = scmp.ne.s32.totalorder %s460, %s462
      %p469 = scmp.eq.s32.totalorder %s54, 1
      %p470 = por %p468, %p469
      %p471 = scmp.ne.s32.totalorder %s462, %s463
      %p472 = scmp.eq.s32.totalorder %s54, 0
      %p473 = por %p471, %p472
      %p474 = scmp.ne.s32.totalorder %s462, %s463
      %p475 = scmp.eq.s32.totalorder %s55, 1
      %p476 = por %p474, %p475
      %p478 = scmp.ne.s32.totalorder %s463, %s477
      %p479 = scmp.eq.s32.totalorder %s55, 0
      %p480 = por %p478, %p479
      %s482 = sadd.s32 %s481, 1
      %p485 = scmp.eq.s32.totalorder %s49, 1
      %p486 = scmp.ne.s32.totalorder %s481, %s483
      %p487 = scmp.eq.s32.totalorder %s49, 0
      %p488 = por %p486, %p487
      %p489 = scmp.ne.s32.totalorder %s481, %s483
      %p490 = scmp.eq.s32.totalorder %s54, 1
      %p491 = por %p489, %p490
      %p492 = scmp.ne.s32.totalorder %s483, %s484
      %p493 = scmp.eq.s32.totalorder %s54, 0
      %p494 = por %p492, %p493
      %p495 = scmp.ne.s32.totalorder %s483, %s484
      %p496 = scmp.eq.s32.totalorder %s55, 1
      %p497 = por %p495, %p496
      %p499 = scmp.ne.s32.totalorder %s484, %s498
      %p500 = scmp.eq.s32.totalorder %s55, 0
      %p501 = por %p499, %p500
      %s503 = sadd.s32 %s502, 1
      %p506 = scmp.eq.s32.totalorder %s49, 1
      %p507 = scmp.ne.s32.totalorder %s502, %s504
      %p508 = scmp.eq.s32.totalorder %s49, 0
      %p509 = por %p507, %p508
      %p510 = scmp.ne.s32.totalorder %s502, %s504
      %p511 = scmp.eq.s32.totalorder %s54, 1
      %p512 = por %p510, %p511
      %p513 = scmp.ne.s32.totalorder %s504, %s505
      %p514 = scmp.eq.s32.totalorder %s54, 0
      %p515 = por %p513, %p514
      %p516 = scmp.ne.s32.totalorder %s504, %s505
      %p517 = scmp.eq.s32.totalorder %s55, 1
      %p518 = por %p516, %p517
      %p520 = scmp.ne.s32.totalorder %s505, %s519
      %p521 = scmp.eq.s32.totalorder %s55, 0
      %p522 = por %p520, %p521
      %s524 = sadd.s32 %s523, 1
      %p527 = scmp.eq.s32.totalorder %s49, 1
      %p528 = scmp.ne.s32.totalorder %s523, %s525
      %p529 = scmp.eq.s32.totalorder %s49, 0
      %p530 = por %p528, %p529
      %p531 = scmp.ne.s32.totalorder %s523, %s525
      %p532 = scmp.eq.s32.totalorder %s54, 1
      %p533 = por %p531, %p532
      %p534 = scmp.ne.s32.totalorder %s525, %s526
      %p535 = scmp.eq.s32.totalorder %s54, 0
      %p536 = por %p534, %p535
      %p537 = scmp.ne.s32.totalorder %s525, %s526
      %p538 = scmp.eq.s32.totalorder %s55, 1
      %p539 = por %p537, %p538
      %p541 = scmp.ne.s32.totalorder %s526, %s540
      %p542 = scmp.eq.s32.totalorder %s55, 0
      %p543 = por %p541, %p542
      %s545 = sadd.s32 %s544, 1
      %p548 = scmp.eq.s32.totalorder %s49, 1
      %p549 = scmp.ne.s32.totalorder %s544, %s546
      %p550 = scmp.eq.s32.totalorder %s49, 0
      %p551 = por %p549, %p550
      %p552 = scmp.ne.s32.totalorder %s544, %s546
      %p553 = scmp.eq.s32.totalorder %s54, 1
      %p554 = por %p552, %p553
      %p555 = scmp.ne.s32.totalorder %s546, %s547
      %p556 = scmp.eq.s32.totalorder %s54, 0
      %p557 = por %p555, %p556
      %p558 = scmp.ne.s32.totalorder %s546, %s547
      %p559 = scmp.eq.s32.totalorder %s55, 1
      %p560 = por %p558, %p559
      %p562 = scmp.ne.s32.totalorder %s547, %s561
      %p563 = scmp.eq.s32.totalorder %s55, 0
      %p564 = por %p562, %p563
      %s566 = sadd.s32 %s565, 1
      %p569 = scmp.eq.s32.totalorder %s49, 1
      %p570 = scmp.ne.s32.totalorder %s565, %s567
      %p571 = scmp.eq.s32.totalorder %s49, 0
      %p572 = por %p570, %p571
      %p573 = scmp.ne.s32.totalorder %s565, %s567
      %p574 = scmp.eq.s32.totalorder %s54, 1
      %p575 = por %p573, %p574
      %p576 = scmp.ne.s32.totalorder %s567, %s568
      %p577 = scmp.eq.s32.totalorder %s54, 0
      %p578 = por %p576, %p577
      %p579 = scmp.ne.s32.totalorder %s567, %s568
      %p580 = scmp.eq.s32.totalorder %s55, 1
      %p581 = por %p579, %p580
      %p583 = scmp.ne.s32.totalorder %s568, %s582
      %p584 = scmp.eq.s32.totalorder %s55, 0
      %p585 = por %p583, %p584
      %s587 = sadd.s32 %s586, 1
      %p590 = scmp.eq.s32.totalorder %s49, 1
      %p591 = scmp.ne.s32.totalorder %s586, %s588
      %p592 = scmp.eq.s32.totalorder %s49, 0
      %p593 = por %p591, %p592
      %p594 = scmp.ne.s32.totalorder %s586, %s588
      %p595 = scmp.eq.s32.totalorder %s54, 1
      %p596 = por %p594, %p595
      %p597 = scmp.ne.s32.totalorder %s588, %s589
      %p598 = scmp.eq.s32.totalorder %s54, 0
      %p599 = por %p597, %p598
      %p600 = scmp.ne.s32.totalorder %s588, %s589
      %p601 = scmp.eq.s32.totalorder %s55, 1
      %p602 = por %p600, %p601
      %p604 = scmp.ne.s32.totalorder %s589, %s603
      %p605 = scmp.eq.s32.totalorder %s55, 0
      %p606 = por %p604, %p605
      %s608 = sadd.s32 %s607, 1
      %p611 = scmp.eq.s32.totalorder %s49, 1
      %p612 = scmp.ne.s32.totalorder %s607, %s609
      %p613 = scmp.eq.s32.totalorder %s49, 0
      %p614 = por %p612, %p613
      %p615 = scmp.ne.s32.totalorder %s607, %s609
      %p616 = scmp.eq.s32.totalorder %s54, 1
      %p617 = por %p615, %p616
      %p618 = scmp.ne.s32.totalorder %s609, %s610
      %p619 = scmp.eq.s32.totalorder %s54, 0
      %p620 = por %p618, %p619
      %p621 = scmp.ne.s32.totalorder %s609, %s610
      %p622 = scmp.eq.s32.totalorder %s55, 1
      %p623 = por %p621, %p622
      %p625 = scmp.ne.s32.totalorder %s610, %s624
      %p626 = scmp.eq.s32.totalorder %s55, 0
      %p627 = por %p625, %p626
      %s628 = ssub.s32 %s49, %s56
      %p629 = scmp.eq.s32.totalorder %s628, 0
      %s631 = sadd.s32 %s630, 1
      %s632 = scalar_select %p629, %s630, %s631
      %p635 = pneg %p629
      %p636 = scmp.eq.s32.totalorder %s49, 1
      %p637 = por %p635, %p636
      %p638 = scmp.ne.s32.totalorder %s630, %s633
      %p639 = scmp.eq.s32.totalorder %s49, 0
      %p640 = por %p638, %p639
      %p641 = scmp.ne.s32.totalorder %s630, %s633
      %p642 = scmp.eq.s32.totalorder %s54, 1
      %p643 = por %p641, %p642
      %p644 = scmp.ne.s32.totalorder %s633, %s634
      %p645 = scmp.eq.s32.totalorder %s54, 0
      %p646 = por %p644, %p645
      %p647 = scmp.ne.s32.totalorder %s633, %s634
      %p648 = scmp.eq.s32.totalorder %s55, 1
      %p649 = por %p647, %p648
      %p651 = scmp.ne.s32.totalorder %s634, %s650
      %p652 = scmp.eq.s32.totalorder %s55, 0
      %p653 = por %p651, %p652
      %s654 = ssub.s32 %s49, %s56
      %p655 = scmp.eq.s32.totalorder %s654, 0
      %s657 = sadd.s32 %s656, 1
      %s658 = scalar_select %p655, %s656, %s657
      %p661 = pneg %p655
      %p662 = scmp.eq.s32.totalorder %s49, 1
      %p663 = por %p661, %p662
      %p664 = scmp.ne.s32.totalorder %s656, %s659
      %p665 = scmp.eq.s32.totalorder %s49, 0
      %p666 = por %p664, %p665
      %p667 = scmp.ne.s32.totalorder %s656, %s659
      %p668 = scmp.eq.s32.totalorder %s54, 1
      %p669 = por %p667, %p668
      %p670 = scmp.ne.s32.totalorder %s659, %s660
      %p671 = scmp.eq.s32.totalorder %s54, 0
      %p672 = por %p670, %p671
      %p673 = scmp.ne.s32.totalorder %s659, %s660
      %p674 = scmp.eq.s32.totalorder %s55, 1
      %p675 = por %p673, %p674
      %p677 = scmp.ne.s32.totalorder %s660, %s676
      %p678 = scmp.eq.s32.totalorder %s55, 0
      %p679 = por %p677, %p678
      %p680 = scmp.le.s32.totalorder 1, %s49
      %p681 = scmp.lt.s32.totalorder %s49, 3
      %p682 = pnand %p680, %p681
      %p683 = pneg %p682
      // Predicated region
      $region9: #{tpu_custom_call.1} parent=5 // pred_check
        _
      $region10: #{tpu_custom_call.1} parent=5 // pred_check_branch
        %685 = sbr.rel (%p682) target = $region12
      $region11: #{tpu_custom_call.1} parent=5 // pred_region
        %s686 = ssub.s32 %s49, 1
        // Predicated region
        $region13: #{tpu_custom_call.1} parent=11 // pred_check
          %p687 = pneg %p200
        $region14: #{tpu_custom_call.1} parent=11 // pred_check_branch
          %689 = sbr.rel (%p687) target = $region16
        $region15: #{tpu_custom_call.1} parent=11 // pred_region
          %s691 = ssub.s32 16, 16
          %692 = vsyncadd [#allocation6], %s691
          %s694 = sshll.u32 [#allocation7], 4
          %s695 = int_to_ptr.vmem [resolvable:$true] %s694
          %697 = dma.hbm_to_vmem [thread:$0]  %s5, 16, %s695, [#allocation6]
        $region16: #{tpu_custom_call.1} parent=11 // pred_fallthru
          _
        // Predicated region
        $region17: #{tpu_custom_call.1} parent=11 // pred_check
          %p698 = pneg %p221
        $region18: #{tpu_custom_call.1} parent=11 // pred_check_branch
          %700 = sbr.rel (%p698) target = $region20
        $region19: #{tpu_custom_call.1} parent=11 // pred_region
          %s702 = ssub.s32 16, 16
          %703 = vsyncadd [#allocation9], %s702
          %s705 = sshll.u32 [#allocation8], 4
          %s706 = int_to_ptr.vmem [resolvable:$true] %s705
          %708 = dma.hbm_to_vmem [thread:$0]  %s6, 16, %s706, [#allocation9]
        $region20: #{tpu_custom_call.1} parent=11 // pred_fallthru
          _
        // Predicated region
        $region21: #{tpu_custom_call.1} parent=11 // pred_check
          %p709 = pneg %p242
        $region22: #{tpu_custom_call.1} parent=11 // pred_check_branch
          %711 = sbr.rel (%p709) target = $region24
        $region23: #{tpu_custom_call.1} parent=11 // pred_region
          %s713 = ssub.s32 16, 16
          %714 = vsyncadd [#allocation9], %s713
          %s716 = sshll.u32 [#allocation10], 4
          %s717 = int_to_ptr.vmem [resolvable:$true] %s716
          %719 = dma.hbm_to_vmem [thread:$0]  %s7, 16, %s717, [#allocation9]
        $region24: #{tpu_custom_call.1} parent=11 // pred_fallthru
          _
        // Predicated region
        $region25: #{tpu_custom_call.1} parent=11 // pred_check
          %p720 = pneg %p263
        $region26: #{tpu_custom_call.1} parent=11 // pred_check_branch
          %722 = sbr.rel (%p720) target = $region28
        $region27: #{tpu_custom_call.1} parent=11 // pred_region
          _
        $region28: #{tpu_custom_call.1} parent=11 // pred_fallthru
          _
        // Predicated region
        $region29: #{tpu_custom_call.1} parent=11 // pred_check
          %p723 = pneg %p284
        $region30: #{tpu_custom_call.1} parent=11 // pred_check_branch
          %725 = sbr.rel (%p723) target = $region32
        $region31: #{tpu_custom_call.1} parent=11 // pred_region
          _
        $region32: #{tpu_custom_call.1} parent=11 // pred_fallthru
          _
        // Predicated region
        $region33: #{tpu_custom_call.1} parent=11 // pred_check
          %p726 = pneg %p305
        $region34: #{tpu_custom_call.1} parent=11 // pred_check_branch
          %728 = sbr.rel (%p726) target = $region36
        $region35: #{tpu_custom_call.1} parent=11 // pred_region
          _
        $region36: #{tpu_custom_call.1} parent=11 // pred_fallthru
          _
        // Predicated region
        $region37: #{tpu_custom_call.1} parent=11 // pred_check
          %p729 = pneg %p326
        $region38: #{tpu_custom_call.1} parent=11 // pred_check_branch
          %731 = sbr.rel (%p729) target = $region40
        $region39: #{tpu_custom_call.1} parent=11 // pred_region
          %s733 = ssub.s32 16, 16
          %734 = vsyncadd [#allocation12], %s733
          %s736 = sshll.u32 [#allocation11], 4
          %s737 = int_to_ptr.vmem [resolvable:$true] %s736
          %739 = dma.hbm_to_vmem [thread:$0]  %s11, 16, %s737, [#allocation12]
        $region40: #{tpu_custom_call.1} parent=11 // pred_fallthru
          _
        // Predicated region
        $region41: #{tpu_custom_call.1} parent=11 // pred_check
          %p740 = pneg %p347
        $region42: #{tpu_custom_call.1} parent=11 // pred_check_branch
          %742 = sbr.rel (%p740) target = $region44
        $region43: #{tpu_custom_call.1} parent=11 // pred_region
          %s744 = ssub.s32 16, 16
          %745 = vsyncadd [#allocation12], %s744
          %s747 = sshll.u32 [#allocation13], 4
          %s748 = int_to_ptr.vmem [resolvable:$true] %s747
          %750 = dma.hbm_to_vmem [thread:$0]  %s12, 16, %s748, [#allocation12]
        $region44: #{tpu_custom_call.1} parent=11 // pred_fallthru
          _
        // Predicated region
        $region45: #{tpu_custom_call.1} parent=11 // pred_check
          %p751 = pneg %p368
        $region46: #{tpu_custom_call.1} parent=11 // pred_check_branch
          %753 = sbr.rel (%p751) target = $region48
        $region47: #{tpu_custom_call.1} parent=11 // pred_region
          %s755 = ssub.s32 16, 16
          %756 = vsyncadd [#allocation15], %s755
          %s758 = sshll.u32 [#allocation14], 4
          %s759 = int_to_ptr.vmem [resolvable:$true] %s758
          %761 = dma.hbm_to_vmem [thread:$0]  %s13, 16, %s759, [#allocation15]
        $region48: #{tpu_custom_call.1} parent=11 // pred_fallthru
          _
        // Predicated region
        $region49: #{tpu_custom_call.1} parent=11 // pred_check
          %p762 = pneg %p389
        $region50: #{tpu_custom_call.1} parent=11 // pred_check_branch
          %764 = sbr.rel (%p762) target = $region52
        $region51: #{tpu_custom_call.1} parent=11 // pred_region
          %s766 = ssub.s32 512, 512
          %767 = vsyncadd [#allocation15], %s766
          %s768 = sshll.u32 [#allocation16], 4
          %s769 = int_to_ptr.vmem [resolvable:$true] %s768
          %774 = dma.hbm_to_vmem [thread:$0]  %s14, 512, %s769, [#allocation15], 128, 128, 8
        $region52: #{tpu_custom_call.1} parent=11 // pred_fallthru
          _
        // Predicated region
        $region53: #{tpu_custom_call.1} parent=11 // pred_check
          %p775 = pneg %p410
        $region54: #{tpu_custom_call.1} parent=11 // pred_check_branch
          %777 = sbr.rel (%p775) target = $region56
        $region55: #{tpu_custom_call.1} parent=11 // pred_region
          %s779 = ssub.s32 16, 16
          %780 = vsyncadd [#allocation18], %s779
          %s782 = sshll.u32 [#allocation17], 4
          %s783 = int_to_ptr.vmem [resolvable:$true] %s782
          %785 = dma.hbm_to_vmem [thread:$0]  %s15, 16, %s783, [#allocation18]
        $region56: #{tpu_custom_call.1} parent=11 // pred_fallthru
          _
        // Predicated region
        $region57: #{tpu_custom_call.1} parent=11 // pred_check
          %p786 = pneg %p431
        $region58: #{tpu_custom_call.1} parent=11 // pred_check_branch
          %788 = sbr.rel (%p786) target = $region60
        $region59: #{tpu_custom_call.1} parent=11 // pred_region
          _
        $region60: #{tpu_custom_call.1} parent=11 // pred_fallthru
          _
        // Predicated region
        $region61: #{tpu_custom_call.1} parent=11 // pred_check
          %p789 = pneg %p452
        $region62: #{tpu_custom_call.1} parent=11 // pred_check_branch
          %791 = sbr.rel (%p789) target = $region64
        $region63: #{tpu_custom_call.1} parent=11 // pred_region
          %s793 = ssub.s32 16, 16
          %794 = vsyncadd [#allocation18], %s793
          %s796 = sshll.u32 [#allocation19], 4
          %s797 = int_to_ptr.vmem [resolvable:$true] %s796
          %799 = dma.hbm_to_vmem [thread:$0]  %s17, 16, %s797, [#allocation18]
        $region64: #{tpu_custom_call.1} parent=11 // pred_fallthru
          _
        // Predicated region
        $region65: #{tpu_custom_call.1} parent=11 // pred_check
          %p800 = pneg %p473
        $region66: #{tpu_custom_call.1} parent=11 // pred_check_branch
          %802 = sbr.rel (%p800) target = $region68
        $region67: #{tpu_custom_call.1} parent=11 // pred_region
          _
        $region68: #{tpu_custom_call.1} parent=11 // pred_fallthru
          _
        // Predicated region
        $region69: #{tpu_custom_call.1} parent=11 // pred_check
          %p803 = pneg %p494
        $region70: #{tpu_custom_call.1} parent=11 // pred_check_branch
          %805 = sbr.rel (%p803) target = $region72
        $region71: #{tpu_custom_call.1} parent=11 // pred_region
          %s807 = ssub.s32 16, 16
          %808 = vsyncadd [#allocation21], %s807
          %s810 = sshll.u32 [#allocation20], 4
          %s811 = int_to_ptr.vmem [resolvable:$true] %s810
          %813 = dma.hbm_to_vmem [thread:$0]  %s19, 16, %s811, [#allocation21]
        $region72: #{tpu_custom_call.1} parent=11 // pred_fallthru
          _
        // Predicated region
        $region73: #{tpu_custom_call.1} parent=11 // pred_check
          %p814 = pneg %p515
        $region74: #{tpu_custom_call.1} parent=11 // pred_check_branch
          %816 = sbr.rel (%p814) target = $region76
        $region75: #{tpu_custom_call.1} parent=11 // pred_region
          _
        $region76: #{tpu_custom_call.1} parent=11 // pred_fallthru
          _
        // Predicated region
        $region77: #{tpu_custom_call.1} parent=11 // pred_check
          %p817 = pneg %p536
        $region78: #{tpu_custom_call.1} parent=11 // pred_check_branch
          %819 = sbr.rel (%p817) target = $region80
        $region79: #{tpu_custom_call.1} parent=11 // pred_region
          %s821 = ssub.s32 128, 128
          %822 = vsyncadd [#allocation21], %s821
          %s824 = sshll.u32 [#allocation22], 4
          %s825 = int_to_ptr.vmem [resolvable:$true] %s824
          %827 = dma.hbm_to_vmem [thread:$0]  %s21, 128, %s825, [#allocation21]
        $region80: #{tpu_custom_call.1} parent=11 // pred_fallthru
          _
        // Predicated region
        $region81: #{tpu_custom_call.1} parent=11 // pred_check
          %p828 = pneg %p557
        $region82: #{tpu_custom_call.1} parent=11 // pred_check_branch
          %830 = sbr.rel (%p828) target = $region84
        $region83: #{tpu_custom_call.1} parent=11 // pred_region
          %s832 = ssub.s32 128, 128
          %833 = vsyncadd [#allocation24], %s832
          %s835 = sshll.u32 [#allocation23], 4
          %s836 = int_to_ptr.vmem [resolvable:$true] %s835
          %838 = dma.hbm_to_vmem [thread:$0]  %s22, 128, %s836, [#allocation24]
        $region84: #{tpu_custom_call.1} parent=11 // pred_fallthru
          _
        // Predicated region
        $region85: #{tpu_custom_call.1} parent=11 // pred_check
          %p839 = pneg %p578
        $region86: #{tpu_custom_call.1} parent=11 // pred_check_branch
          %841 = sbr.rel (%p839) target = $region88
        $region87: #{tpu_custom_call.1} parent=11 // pred_region
          _
        $region88: #{tpu_custom_call.1} parent=11 // pred_fallthru
          _
        // Predicated region
        $region89: #{tpu_custom_call.1} parent=11 // pred_check
          %p842 = pneg %p599
        $region90: #{tpu_custom_call.1} parent=11 // pred_check_branch
          %844 = sbr.rel (%p842) target = $region92
        $region91: #{tpu_custom_call.1} parent=11 // pred_region
          _
        $region92: #{tpu_custom_call.1} parent=11 // pred_fallthru
          _
        // Predicated region
        $region93: #{tpu_custom_call.1} parent=11 // pred_check
          %p845 = pneg %p620
        $region94: #{tpu_custom_call.1} parent=11 // pred_check_branch
          %847 = sbr.rel (%p845) target = $region96
        $region95: #{tpu_custom_call.1} parent=11 // pred_region
          _
        $region96: #{tpu_custom_call.1} parent=11 // pred_fallthru
          _
      $region12: #{tpu_custom_call.1} parent=5 // pred_fallthru
        _
      %p848 = scmp.lt.s32.totalorder %s49, 2
      // Predicated region
      $region97: #{tpu_custom_call.1} parent=5 // pred_check
        %p849 = pneg %p848
      $region98: #{tpu_custom_call.1} parent=5 // pred_check_branch
        %851 = sbr.rel (%p849) target = $region100
      $region99: #{tpu_custom_call.1} parent=5 // pred_region
        // Predicated region
        $region101: #{tpu_custom_call.1} parent=99 // pred_check
          %p852 = pneg %p69
        $region102: #{tpu_custom_call.1} parent=99 // pred_check_branch
          %854 = sbr.rel (%p852) target = $region104
        $region103: #{tpu_custom_call.1} parent=99 // pred_region
          %s855 = smul.u32 8, %s49
          %p856 = scmp.lt.s32.totalorder %s855, 15
          %s857 = scalar_select %p856, %s855, 15
          %s858 = smul.addr %s857, 4
          %s859 = scalar_lea.vmem %s0, %s858
          %s860 = smul.u32 8, %s49
        $region104: #{tpu_custom_call.1} parent=99 // pred_fallthru
          _
        // Predicated region
        $region105: #{tpu_custom_call.1} parent=99 // pred_check
          %p861 = pneg %p95
        $region106: #{tpu_custom_call.1} parent=99 // pred_check_branch
          %863 = sbr.rel (%p861) target = $region108
        $region107: #{tpu_custom_call.1} parent=99 // pred_region
          %s864 = sand.u32 %s85, 1
          %s865 = scalar_lea.sflag [#allocation3], %s864
          %s866 = sand.u32 %s85, 1
          %s867 = smul.addr %s866, 128
          %s868 = scalar_lea.vmem [#allocation2], %s867
          %s869 = smul.u32 8, %s49
          %s871 = ssub.s32 2048, 2048
          %872 = vsyncadd %s865, %s871
          %s873 = smul.addr %s869, 4
          %s874 = smul.addr %s873, 64
          %s875 = scalar_lea.hbm %s1, %s874
          %s876 = sshll.u32 %s868, 4
          %s877 = int_to_ptr.vmem [resolvable:$true] %s876
          %882 = dma.hbm_to_vmem [thread:$0]  %s875, 2048, %s877, %s865, 64, 64, 4
        $region108: #{tpu_custom_call.1} parent=99 // pred_fallthru
          _
        // Predicated region
        $region109: #{tpu_custom_call.1} parent=99 // pred_check
          %p883 = pneg %p121
        $region110: #{tpu_custom_call.1} parent=99 // pred_check_branch
          %885 = sbr.rel (%p883) target = $region112
        $region111: #{tpu_custom_call.1} parent=99 // pred_region
          %s886 = smul.u32 8, %s49
          %p887 = scmp.lt.s32.totalorder %s886, 15
          %s888 = scalar_select %p887, %s886, 15
          %s889 = smul.addr %s888, 4
          %s890 = scalar_lea.vmem %s2, %s889
          %s891 = smul.u32 8, %s49
        $region112: #{tpu_custom_call.1} parent=99 // pred_fallthru
          _
        // Predicated region
        $region113: #{tpu_custom_call.1} parent=99 // pred_check
          %p892 = pneg %p147
        $region114: #{tpu_custom_call.1} parent=99 // pred_check_branch
          %894 = sbr.rel (%p892) target = $region116
        $region115: #{tpu_custom_call.1} parent=99 // pred_region
          %p895 = scmp.lt.s32.totalorder %s49, 1
          %s896 = scalar_select %p895, %s49, 1
          %s897 = smul.addr %s896, 8
          %s898 = scalar_lea.vmem %s3, %s897
        $region116: #{tpu_custom_call.1} parent=99 // pred_fallthru
          _
        // Predicated region
        $region117: #{tpu_custom_call.1} parent=99 // pred_check
          %p899 = pneg %p173
        $region118: #{tpu_custom_call.1} parent=99 // pred_check_branch
          %901 = sbr.rel (%p899) target = $region120
        $region119: #{tpu_custom_call.1} parent=99 // pred_region
          %s902 = sand.u32 %s49, 1
          %s903 = scalar_lea.sflag [#allocation6], %s902
          %s904 = sand.u32 %s163, 1
          %s905 = smul.addr %s904, 8
          %s906 = scalar_lea.vmem [#allocation5], %s905
          %s908 = ssub.s32 128, 128
          %909 = vsyncadd %s903, %s908
          %s910 = smul.addr %s49, 128
          %s911 = scalar_lea.hbm %s4, %s910
          %s913 = sshll.u32 %s906, 4
          %s914 = int_to_ptr.vmem [resolvable:$true] %s913
          %916 = dma.hbm_to_vmem [thread:$0]  %s911, 128, %s914, %s903
        $region120: #{tpu_custom_call.1} parent=99 // pred_fallthru
          _
      $region100: #{tpu_custom_call.1} parent=5 // pred_fallthru
        _
      %p917 = scmp.le.s32.totalorder 1, %s49
      %p918 = scmp.lt.s32.totalorder %s49, 3
      %p919 = pnand %p917, %p918
      %p920 = pneg %p919
      // Predicated region
      $region121: #{tpu_custom_call.1} parent=5 // pred_check
        _
      $region122: #{tpu_custom_call.1} parent=5 // pred_check_branch
        %922 = sbr.rel (%p919) target = $region124
      $region123: #{tpu_custom_call.1} parent=5 // pred_region
        %s923 = ssub.s32 %s49, 1
        %s924 = sand.u32 %s88, 1
        %s925 = scalar_lea.sflag [#allocation3], %s924
        %s926 = sand.u32 %s88, 1
        %s927 = smul.addr %s926, 128
        %s928 = scalar_lea.vmem [#allocation2], %s927
        // Predicated region
        $region125: #{tpu_custom_call.1} parent=123 // pred_check
          %p929 = pneg %p101
        $region126: #{tpu_custom_call.1} parent=123 // pred_check_branch
          %931 = sbr.rel (%p929) target = $region128
        $region127: #{tpu_custom_call.1} parent=123 // pred_region
          %932 = dma.done %s925, 2048
        $region128: #{tpu_custom_call.1} parent=123 // pred_fallthru
          _
        %s933 = sand.u32 %s54, 1
        %s934 = scalar_lea.sflag [#allocation6], %s933
        %s935 = sand.u32 %s166, 1
        %s936 = smul.addr %s935, 8
        %s937 = scalar_lea.vmem [#allocation5], %s936
        // Predicated region
        $region129: #{tpu_custom_call.1} parent=123 // pred_check
          %p938 = pneg %p179
        $region130: #{tpu_custom_call.1} parent=123 // pred_check_branch
          %940 = sbr.rel (%p938) target = $region132
        $region131: #{tpu_custom_call.1} parent=123 // pred_region
          %941 = dma.done %s934, 128
        $region132: #{tpu_custom_call.1} parent=123 // pred_fallthru
          _
        // Predicated region
        $region133: #{tpu_custom_call.1} parent=123 // pred_check
          %p942 = pneg %p200
        $region134: #{tpu_custom_call.1} parent=123 // pred_check_branch
          %944 = sbr.rel (%p942) target = $region136
        $region135: #{tpu_custom_call.1} parent=123 // pred_region
          %945 = dma.done [#allocation6], 16
        $region136: #{tpu_custom_call.1} parent=123 // pred_fallthru
          _
        // Predicated region
        $region137: #{tpu_custom_call.1} parent=123 // pred_check
          %p946 = pneg %p221
        $region138: #{tpu_custom_call.1} parent=123 // pred_check_branch
          %948 = sbr.rel (%p946) target = $region140
        $region139: #{tpu_custom_call.1} parent=123 // pred_region
          %949 = dma.done [#allocation9], 16
        $region140: #{tpu_custom_call.1} parent=123 // pred_fallthru
          _
        // Predicated region
        $region141: #{tpu_custom_call.1} parent=123 // pred_check
          %p950 = pneg %p242
        $region142: #{tpu_custom_call.1} parent=123 // pred_check_branch
          %952 = sbr.rel (%p950) target = $region144
        $region143: #{tpu_custom_call.1} parent=123 // pred_region
          %953 = dma.done [#allocation9], 16
        $region144: #{tpu_custom_call.1} parent=123 // pred_fallthru
          _
        // Predicated region
        $region145: #{tpu_custom_call.1} parent=123 // pred_check
          %p954 = pneg %p326
        $region146: #{tpu_custom_call.1} parent=123 // pred_check_branch
          %956 = sbr.rel (%p954) target = $region148
        $region147: #{tpu_custom_call.1} parent=123 // pred_region
          %957 = dma.done [#allocation12], 16
        $region148: #{tpu_custom_call.1} parent=123 // pred_fallthru
          _
        // Predicated region
        $region149: #{tpu_custom_call.1} parent=123 // pred_check
          %p958 = pneg %p347
        $region150: #{tpu_custom_call.1} parent=123 // pred_check_branch
          %960 = sbr.rel (%p958) target = $region152
        $region151: #{tpu_custom_call.1} parent=123 // pred_region
          %961 = dma.done [#allocation12], 16
        $region152: #{tpu_custom_call.1} parent=123 // pred_fallthru
          _
        // Predicated region
        $region153: #{tpu_custom_call.1} parent=123 // pred_check
          %p962 = pneg %p368
        $region154: #{tpu_custom_call.1} parent=123 // pred_check_branch
          %964 = sbr.rel (%p962) target = $region156
        $region155: #{tpu_custom_call.1} parent=123 // pred_region
          %965 = dma.done [#allocation15], 16
        $region156: #{tpu_custom_call.1} parent=123 // pred_fallthru
          _
        // Predicated region
        $region157: #{tpu_custom_call.1} parent=123 // pred_check
          %p966 = pneg %p389
        $region158: #{tpu_custom_call.1} parent=123 // pred_check_branch
          %968 = sbr.rel (%p966) target = $region160
        $region159: #{tpu_custom_call.1} parent=123 // pred_region
          %969 = dma.done [#allocation15], 512
        $region160: #{tpu_custom_call.1} parent=123 // pred_fallthru
          _
        // Predicated region
        $region161: #{tpu_custom_call.1} parent=123 // pred_check
          %p970 = pneg %p410
        $region162: #{tpu_custom_call.1} parent=123 // pred_check_branch
          %972 = sbr.rel (%p970) target = $region164
        $region163: #{tpu_custom_call.1} parent=123 // pred_region
          %973 = dma.done [#allocation18], 16
        $region164: #{tpu_custom_call.1} parent=123 // pred_fallthru
          _
        // Predicated region
        $region165: #{tpu_custom_call.1} parent=123 // pred_check
          %p974 = pneg %p452
        $region166: #{tpu_custom_call.1} parent=123 // pred_check_branch
          %976 = sbr.rel (%p974) target = $region168
        $region167: #{tpu_custom_call.1} parent=123 // pred_region
          %977 = dma.done [#allocation18], 16
        $region168: #{tpu_custom_call.1} parent=123 // pred_fallthru
          _
        // Predicated region
        $region169: #{tpu_custom_call.1} parent=123 // pred_check
          %p978 = pneg %p494
        $region170: #{tpu_custom_call.1} parent=123 // pred_check_branch
          %980 = sbr.rel (%p978) target = $region172
        $region171: #{tpu_custom_call.1} parent=123 // pred_region
          %981 = dma.done [#allocation21], 16
        $region172: #{tpu_custom_call.1} parent=123 // pred_fallthru
          _
        // Predicated region
        $region173: #{tpu_custom_call.1} parent=123 // pred_check
          %p982 = pneg %p536
        $region174: #{tpu_custom_call.1} parent=123 // pred_check_branch
          %984 = sbr.rel (%p982) target = $region176
        $region175: #{tpu_custom_call.1} parent=123 // pred_region
          %985 = dma.done [#allocation21], 128
        $region176: #{tpu_custom_call.1} parent=123 // pred_fallthru
          _
        // Predicated region
        $region177: #{tpu_custom_call.1} parent=123 // pred_check
          %p986 = pneg %p557
        $region178: #{tpu_custom_call.1} parent=123 // pred_check_branch
          %988 = sbr.rel (%p986) target = $region180
        $region179: #{tpu_custom_call.1} parent=123 // pred_region
          %989 = dma.done [#allocation24], 128
        $region180: #{tpu_custom_call.1} parent=123 // pred_fallthru
          _
        %s990 = smul.u32 8, %s54
        %p991 = scmp.lt.s32.totalorder %s990, 15
        %s992 = scalar_select %p991, %s990, 15
        %s993 = smul.addr %s992, 4
        %s994 = scalar_lea.vmem %s0, %s993
        %p995 = pneg %p75
        %p996 = pneg %p72
        %s997 = sand.u32 %s88, 1
        %s998 = scalar_lea.sflag [#allocation3], %s997
        %s999 = sand.u32 %s88, 1
        %s1000 = smul.addr %s999, 128
        %s1001 = scalar_lea.vmem [#allocation2], %s1000
        %p1002 = pneg %p101
        %p1003 = pneg %p98
        %s1004 = smul.u32 8, %s54
        %p1005 = scmp.lt.s32.totalorder %s1004, 15
        %s1006 = scalar_select %p1005, %s1004, 15
        %s1007 = smul.addr %s1006, 4
        %s1008 = scalar_lea.vmem %s2, %s1007
        %p1009 = pneg %p127
        %p1010 = pneg %p124
        %p1011 = scmp.lt.s32.totalorder %s54, 1
        %s1012 = scalar_select %p1011, %s54, 1
        %s1013 = smul.addr %s1012, 8
        %s1014 = scalar_lea.vmem %s3, %s1013
        %p1015 = pneg %p153
        %p1016 = pneg %p150
        %s1017 = sand.u32 %s54, 1
        %s1018 = scalar_lea.sflag [#allocation6], %s1017
        %s1019 = sand.u32 %s166, 1
        %s1020 = smul.addr %s1019, 8
        %s1021 = scalar_lea.vmem [#allocation5], %s1020
        %p1022 = pneg %p179
        %p1023 = pneg %p176
        %p1024 = pneg %p200
        %p1025 = pneg %p197
        %p1026 = pneg %p221
        %p1027 = pneg %p218
        %p1028 = pneg %p242
        %p1029 = pneg %p239
        %p1030 = pneg %p263
        %p1031 = pneg %p260
        %p1032 = pneg %p284
        %p1033 = pneg %p281
        %p1034 = pneg %p305
        %p1035 = pneg %p302
        %p1036 = pneg %p326
        %p1037 = pneg %p323
        %p1038 = pneg %p347
        %p1039 = pneg %p344
        %p1040 = pneg %p368
        %p1041 = pneg %p365
        %p1042 = pneg %p389
        %p1043 = pneg %p386
        %p1044 = pneg %p410
        %p1045 = pneg %p407
        %p1046 = pneg %p431
        %p1047 = pneg %p428
        %p1048 = pneg %p452
        %p1049 = pneg %p449
        %p1050 = pneg %p473
        %p1051 = pneg %p470
        %p1052 = pneg %p494
        %p1053 = pneg %p491
        %p1054 = pneg %p515
        %p1055 = pneg %p512
        %p1056 = pneg %p536
        %p1057 = pneg %p533
        %p1058 = pneg %p557
        %p1059 = pneg %p554
        %p1060 = pneg %p578
        %p1061 = pneg %p575
        %p1062 = pneg %p599
        %p1063 = pneg %p596
        %p1064 = pneg %p620
        %p1065 = pneg %p617
        %p1066 = pneg %p646
        %p1067 = pneg %p643
        %s1068 = sand.u32 %s633, 1
        %s1069 = scalar_lea.sflag [#allocation4], %s1068
        %s1070 = sand.u32 %s633, 1
        %s1071 = smul.addr %s1070, 8
        %s1072 = scalar_lea.vmem [#allocation25], %s1071
        %p1073 = pneg %p672
        %p1074 = pneg %p669
        %p1075 = scmp.lt.s32.totalorder %s54, 1
        %s1076 = scalar_select %p1075, %s54, 1
        %s1077 = smul.addr %s1076, 8
        %s1078 = scalar_lea.vmem %s27, %s1077
        %s1079 = smul.u32 8, %s54
        %p1080 = scmp.lt.s32.totalorder %s1079, 15
        %s1081 = scalar_select %p1080, %s1079, 15
        %s1082 = smul.addr %s1081, 4
        %s1083 = scalar_lea.vmem %s0, %s1082
        %s1084 = smul.u32 8, %s54
        %s1085 = smul.u32 8, %s54
        %s1086 = smul.u32 8, %s54
        %p1087 = scmp.lt.s32.totalorder %s1086, 15
        %s1088 = scalar_select %p1087, %s1086, 15
        %s1089 = smul.addr %s1088, 4
        %s1090 = scalar_lea.vmem %s2, %s1089
        %s1091 = smul.u32 8, %s54
        %p1092 = scmp.lt.s32.totalorder %s54, 1
        %s1093 = scalar_select %p1092, %s54, 1
        %s1094 = smul.addr %s1093, 8
        %s1095 = scalar_lea.vmem %s3, %s1094
        %p1096 = scmp.lt.s32.totalorder %s54, 1
        %s1097 = scalar_select %p1096, %s54, 1
        %s1098 = smul.addr %s1097, 8
        %s1099 = scalar_lea.vmem %s27, %s1098
        %v1100 = vld [vmem:[%s1083] sm:$0xf]
        %v1101 = vld [vmem:[%s1083 + $0x4] sm:$0xf]
        %v1102 = vld [vmem:[%s1083 + $0x8] sm:$0xf]
        %v1103 = vld [vmem:[%s1083 + $0xc] sm:$0xf]
        %v1104 = vld [vmem:[%s1083 + $0x10] sm:$0xf]
        %v1105 = vld [vmem:[%s1083 + $0x14] sm:$0xf]
        %v1106 = vld [vmem:[%s1083 + $0x18] sm:$0xf]
        %v1107 = vld [vmem:[%s1083 + $0x1c] sm:$0xf]
        %v1108 = vld [vmem:[%s928] sm:$0xf]
        %v1109 = vld [vmem:[%s928 + $0x4] sm:$0xf]
        %v1110 = vld [vmem:[%s928 + $0x8] sm:$0xf]
        %v1111 = vld [vmem:[%s928 + $0xc] sm:$0xf]
        %v1112 = vld [vmem:[%s928 + $0x10] sm:$0xf]
        %v1113 = vld [vmem:[%s928 + $0x14] sm:$0xf]
        %v1114 = vld [vmem:[%s928 + $0x18] sm:$0xf]
        %v1115 = vld [vmem:[%s928 + $0x1c] sm:$0xf]
        %v1116 = vld [vmem:[%s928 + $0x20] sm:$0xf]
        %v1117 = vld [vmem:[%s928 + $0x24] sm:$0xf]
        %v1118 = vld [vmem:[%s928 + $0x28] sm:$0xf]
        %v1119 = vld [vmem:[%s928 + $0x2c] sm:$0xf]
        %v1120 = vld [vmem:[%s928 + $0x30] sm:$0xf]
        %v1121 = vld [vmem:[%s928 + $0x34] sm:$0xf]
        %v1122 = vld [vmem:[%s928 + $0x38] sm:$0xf]
        %v1123 = vld [vmem:[%s928 + $0x3c] sm:$0xf]
        %v1124 = vld [vmem:[%s928 + $0x40] sm:$0xf]
        %v1125 = vld [vmem:[%s928 + $0x44] sm:$0xf]
        %v1126 = vld [vmem:[%s928 + $0x48] sm:$0xf]
        %v1127 = vld [vmem:[%s928 + $0x4c] sm:$0xf]
        %v1128 = vld [vmem:[%s928 + $0x50] sm:$0xf]
        %v1129 = vld [vmem:[%s928 + $0x54] sm:$0xf]
        %v1130 = vld [vmem:[%s928 + $0x58] sm:$0xf]
        %v1131 = vld [vmem:[%s928 + $0x5c] sm:$0xf]
        %v1132 = vld [vmem:[%s928 + $0x60] sm:$0xf]
        %v1133 = vld [vmem:[%s928 + $0x64] sm:$0xf]
        %v1134 = vld [vmem:[%s928 + $0x68] sm:$0xf]
        %v1135 = vld [vmem:[%s928 + $0x6c] sm:$0xf]
        %v1136 = vld [vmem:[%s928 + $0x70] sm:$0xf]
        %v1137 = vld [vmem:[%s928 + $0x74] sm:$0xf]
        %v1138 = vld [vmem:[%s928 + $0x78] sm:$0xf]
        %v1139 = vld [vmem:[%s928 + $0x7c] sm:$0xf]
        %v1140 = vld [vmem:[%s1090] sm:$0xf]
        %v1141 = vld [vmem:[%s1090 + $0x4] sm:$0xf]
        %v1142 = vld [vmem:[%s1090 + $0x8] sm:$0xf]
        %v1143 = vld [vmem:[%s1090 + $0xc] sm:$0xf]
        %v1144 = vld [vmem:[%s1090 + $0x10] sm:$0xf]
        %v1145 = vld [vmem:[%s1090 + $0x14] sm:$0xf]
        %v1146 = vld [vmem:[%s1090 + $0x18] sm:$0xf]
        %v1147 = vld [vmem:[%s1090 + $0x1c] sm:$0xf]
        %v1148 = vld [vmem:[%s1095] sm:$0xff]
        %v1149 = vld [vmem:[%s937] sm:$0xff]
        %vm1150 = vcmask 27648
        %v1151 = vsel %vm1150, %v1140, 0.0
        %1152 = vadd.xlane.f32.xlu0 %v1151
        %v1153 = vpop.xlane.xlu0 %1152
        %v1154 = vsel %vm1150, %v1141, 0.0
        %1155 = vadd.xlane.f32.xlu0 %v1154
        %v1156 = vpop.xlane.xlu0 %1155
        %v1157 = vsel %vm1150, %v1142, 0.0
        %1158 = vadd.xlane.f32.xlu0 %v1157
        %v1159 = vpop.xlane.xlu0 %1158
        %v1160 = vsel %vm1150, %v1143, 0.0
        %1161 = vadd.xlane.f32.xlu0 %v1160
        %v1162 = vpop.xlane.xlu0 %1161
        %v1163 = vsel %vm1150, %v1144, 0.0
        %1164 = vadd.xlane.f32.xlu0 %v1163
        %v1165 = vpop.xlane.xlu0 %1164
        %v1166 = vsel %vm1150, %v1145, 0.0
        %1167 = vadd.xlane.f32.xlu0 %v1166
        %v1168 = vpop.xlane.xlu0 %1167
        %v1169 = vsel %vm1150, %v1146, 0.0
        %1170 = vadd.xlane.f32.xlu0 %v1169
        %v1171 = vpop.xlane.xlu0 %1170
        %v1172 = vsel %vm1150, %v1147, 0.0
        %1173 = vadd.xlane.f32.xlu0 %v1172
        %v1174 = vpop.xlane.xlu0 %1173
        %v1175 = vmax.f32 %v1153, 1.0
        %v1176 = vmax.f32 %v1156, 1.0
        %v1177 = vmax.f32 %v1159, 1.0
        %v1178 = vmax.f32 %v1162, 1.0
        %v1179 = vmax.f32 %v1165, 1.0
        %v1180 = vmax.f32 %v1168, 1.0
        %v1181 = vmax.f32 %v1171, 1.0
        %v1182 = vmax.f32 %v1174, 1.0
        %v1183 = vlaneseq
        %v1184 = vshrl.u32 %v1183, 7
        %v1185 = vsub.s32 0, %v1184
        %v1186 = vrot.slane %v1140, %v1185
        %1188 = vbcast.lane.b32.xlu0 %v1186, 256
        %v1189 = vpop.permute.xlu0 %1188
        %v1190 = vlaneseq
        %v1191 = vshrl.u32 %v1190, 7
        %v1192 = vsub.s32 1, %v1191
        %v1193 = vrot.slane %v1140, %v1192
        %1195 = vbcast.lane.b32.xlu0 %v1193, 256
        %v1196 = vpop.permute.xlu0 %1195
        %v1197 = vlaneseq
        %v1198 = vshrl.u32 %v1197, 7
        %v1199 = vsub.s32 2, %v1198
        %v1200 = vrot.slane %v1140, %v1199
        %1202 = vbcast.lane.b32.xlu0 %v1200, 256
        %v1203 = vpop.permute.xlu0 %1202
        %v1204 = vlaneseq
        %v1205 = vshrl.u32 %v1204, 7
        %v1206 = vsub.s32 3, %v1205
        %v1207 = vrot.slane %v1140, %v1206
        %1209 = vbcast.lane.b32.xlu0 %v1207, 256
        %v1210 = vpop.permute.xlu0 %1209
        %v1211 = vlaneseq
        %v1212 = vshrl.u32 %v1211, 7
        %v1213 = vsub.s32 0, %v1212
        %v1214 = vrot.slane %v1141, %v1213
        %1216 = vbcast.lane.b32.xlu0 %v1214, 256
        %v1217 = vpop.permute.xlu0 %1216
        %v1218 = vlaneseq
        %v1219 = vshrl.u32 %v1218, 7
        %v1220 = vsub.s32 1, %v1219
        %v1221 = vrot.slane %v1141, %v1220
        %1223 = vbcast.lane.b32.xlu0 %v1221, 256
        %v1224 = vpop.permute.xlu0 %1223
        %v1225 = vlaneseq
        %v1226 = vshrl.u32 %v1225, 7
        %v1227 = vsub.s32 2, %v1226
        %v1228 = vrot.slane %v1141, %v1227
        %1230 = vbcast.lane.b32.xlu0 %v1228, 256
        %v1231 = vpop.permute.xlu0 %1230
        %v1232 = vlaneseq
        %v1233 = vshrl.u32 %v1232, 7
        %v1234 = vsub.s32 3, %v1233
        %v1235 = vrot.slane %v1141, %v1234
        %1237 = vbcast.lane.b32.xlu0 %v1235, 256
        %v1238 = vpop.permute.xlu0 %1237
        %v1239 = vlaneseq
        %v1240 = vshrl.u32 %v1239, 7
        %v1241 = vsub.s32 0, %v1240
        %v1242 = vrot.slane %v1142, %v1241
        %1244 = vbcast.lane.b32.xlu0 %v1242, 256
        %v1245 = vpop.permute.xlu0 %1244
        %v1246 = vlaneseq
        %v1247 = vshrl.u32 %v1246, 7
        %v1248 = vsub.s32 1, %v1247
        %v1249 = vrot.slane %v1142, %v1248
        %1251 = vbcast.lane.b32.xlu0 %v1249, 256
        %v1252 = vpop.permute.xlu0 %1251
        %v1253 = vlaneseq
        %v1254 = vshrl.u32 %v1253, 7
        %v1255 = vsub.s32 2, %v1254
        %v1256 = vrot.slane %v1142, %v1255
        %1258 = vbcast.lane.b32.xlu0 %v1256, 256
        %v1259 = vpop.permute.xlu0 %1258
        %v1260 = vlaneseq
        %v1261 = vshrl.u32 %v1260, 7
        %v1262 = vsub.s32 3, %v1261
        %v1263 = vrot.slane %v1142, %v1262
        %1265 = vbcast.lane.b32.xlu0 %v1263, 256
        %v1266 = vpop.permute.xlu0 %1265
        %v1267 = vlaneseq
        %v1268 = vshrl.u32 %v1267, 7
        %v1269 = vsub.s32 0, %v1268
        %v1270 = vrot.slane %v1143, %v1269
        %1272 = vbcast.lane.b32.xlu0 %v1270, 256
        %v1273 = vpop.permute.xlu0 %1272
        %v1274 = vlaneseq
        %v1275 = vshrl.u32 %v1274, 7
        %v1276 = vsub.s32 1, %v1275
        %v1277 = vrot.slane %v1143, %v1276
        %1279 = vbcast.lane.b32.xlu0 %v1277, 256
        %v1280 = vpop.permute.xlu0 %1279
        %v1281 = vlaneseq
        %v1282 = vshrl.u32 %v1281, 7
        %v1283 = vsub.s32 2, %v1282
        %v1284 = vrot.slane %v1143, %v1283
        %1286 = vbcast.lane.b32.xlu0 %v1284, 256
        %v1287 = vpop.permute.xlu0 %1286
        %v1288 = vlaneseq
        %v1289 = vshrl.u32 %v1288, 7
        %v1290 = vsub.s32 3, %v1289
        %v1291 = vrot.slane %v1143, %v1290
        %1293 = vbcast.lane.b32.xlu0 %v1291, 256
        %v1294 = vpop.permute.xlu0 %1293
        %v1295 = vlaneseq
        %v1296 = vshrl.u32 %v1295, 7
        %v1297 = vsub.s32 0, %v1296
        %v1298 = vrot.slane %v1144, %v1297
        %1300 = vbcast.lane.b32.xlu0 %v1298, 256
        %v1301 = vpop.permute.xlu0 %1300
        %v1302 = vlaneseq
        %v1303 = vshrl.u32 %v1302, 7
        %v1304 = vsub.s32 1, %v1303
        %v1305 = vrot.slane %v1144, %v1304
        %1307 = vbcast.lane.b32.xlu0 %v1305, 256
        %v1308 = vpop.permute.xlu0 %1307
        %v1309 = vlaneseq
        %v1310 = vshrl.u32 %v1309, 7
        %v1311 = vsub.s32 2, %v1310
        %v1312 = vrot.slane %v1144, %v1311
        %1314 = vbcast.lane.b32.xlu0 %v1312, 256
        %v1315 = vpop.permute.xlu0 %1314
        %v1316 = vlaneseq
        %v1317 = vshrl.u32 %v1316, 7
        %v1318 = vsub.s32 3, %v1317
        %v1319 = vrot.slane %v1144, %v1318
        %1321 = vbcast.lane.b32.xlu0 %v1319, 256
        %v1322 = vpop.permute.xlu0 %1321
        %v1323 = vlaneseq
        %v1324 = vshrl.u32 %v1323, 7
        %v1325 = vsub.s32 0, %v1324
        %v1326 = vrot.slane %v1145, %v1325
        %1328 = vbcast.lane.b32.xlu0 %v1326, 256
        %v1329 = vpop.permute.xlu0 %1328
        %v1330 = vlaneseq
        %v1331 = vshrl.u32 %v1330, 7
        %v1332 = vsub.s32 1, %v1331
        %v1333 = vrot.slane %v1145, %v1332
        %1335 = vbcast.lane.b32.xlu0 %v1333, 256
        %v1336 = vpop.permute.xlu0 %1335
        %v1337 = vlaneseq
        %v1338 = vshrl.u32 %v1337, 7
        %v1339 = vsub.s32 2, %v1338
        %v1340 = vrot.slane %v1145, %v1339
        %1342 = vbcast.lane.b32.xlu0 %v1340, 256
        %v1343 = vpop.permute.xlu0 %1342
        %v1344 = vlaneseq
        %v1345 = vshrl.u32 %v1344, 7
        %v1346 = vsub.s32 3, %v1345
        %v1347 = vrot.slane %v1145, %v1346
        %1349 = vbcast.lane.b32.xlu0 %v1347, 256
        %v1350 = vpop.permute.xlu0 %1349
        %v1351 = vlaneseq
        %v1352 = vshrl.u32 %v1351, 7
        %v1353 = vsub.s32 0, %v1352
        %v1354 = vrot.slane %v1146, %v1353
        %1356 = vbcast.lane.b32.xlu0 %v1354, 256
        %v1357 = vpop.permute.xlu0 %1356
        %v1358 = vlaneseq
        %v1359 = vshrl.u32 %v1358, 7
        %v1360 = vsub.s32 1, %v1359
        %v1361 = vrot.slane %v1146, %v1360
        %1363 = vbcast.lane.b32.xlu0 %v1361, 256
        %v1364 = vpop.permute.xlu0 %1363
        %v1365 = vlaneseq
        %v1366 = vshrl.u32 %v1365, 7
        %v1367 = vsub.s32 2, %v1366
        %v1368 = vrot.slane %v1146, %v1367
        %1370 = vbcast.lane.b32.xlu0 %v1368, 256
        %v1371 = vpop.permute.xlu0 %1370
        %v1372 = vlaneseq
        %v1373 = vshrl.u32 %v1372, 7
        %v1374 = vsub.s32 3, %v1373
        %v1375 = vrot.slane %v1146, %v1374
        %1377 = vbcast.lane.b32.xlu0 %v1375, 256
        %v1378 = vpop.permute.xlu0 %1377
        %v1379 = vlaneseq
        %v1380 = vshrl.u32 %v1379, 7
        %v1381 = vsub.s32 0, %v1380
        %v1382 = vrot.slane %v1147, %v1381
        %1384 = vbcast.lane.b32.xlu0 %v1382, 256
        %v1385 = vpop.permute.xlu0 %1384
        %v1386 = vlaneseq
        %v1387 = vshrl.u32 %v1386, 7
        %v1388 = vsub.s32 1, %v1387
        %v1389 = vrot.slane %v1147, %v1388
        %1391 = vbcast.lane.b32.xlu0 %v1389, 256
        %v1392 = vpop.permute.xlu0 %1391
        %v1393 = vlaneseq
        %v1394 = vshrl.u32 %v1393, 7
        %v1395 = vsub.s32 2, %v1394
        %v1396 = vrot.slane %v1147, %v1395
        %1398 = vbcast.lane.b32.xlu0 %v1396, 256
        %v1399 = vpop.permute.xlu0 %1398
        %v1400 = vlaneseq
        %v1401 = vshrl.u32 %v1400, 7
        %v1402 = vsub.s32 3, %v1401
        %v1403 = vrot.slane %v1147, %v1402
        %1405 = vbcast.lane.b32.xlu0 %v1403, 256
        %v1406 = vpop.permute.xlu0 %1405
        %v1407 = vmul.f32 %v1108, %v1189
        %v1408 = vmul.f32 %v1109, %v1196
        %v1409 = vmul.f32 %v1110, %v1203
        %v1410 = vmul.f32 %v1111, %v1210
        %v1411 = vmul.f32 %v1112, %v1217
        %v1412 = vmul.f32 %v1113, %v1224
        %v1413 = vmul.f32 %v1114, %v1231
        %v1414 = vmul.f32 %v1115, %v1238
        %v1415 = vmul.f32 %v1116, %v1245
        %v1416 = vmul.f32 %v1117, %v1252
        %v1417 = vmul.f32 %v1118, %v1259
        %v1418 = vmul.f32 %v1119, %v1266
        %v1419 = vmul.f32 %v1120, %v1273
        %v1420 = vmul.f32 %v1121, %v1280
        %v1421 = vmul.f32 %v1122, %v1287
        %v1422 = vmul.f32 %v1123, %v1294
        %v1423 = vmul.f32 %v1124, %v1301
        %v1424 = vmul.f32 %v1125, %v1308
        %v1425 = vmul.f32 %v1126, %v1315
        %v1426 = vmul.f32 %v1127, %v1322
        %v1427 = vmul.f32 %v1128, %v1329
        %v1428 = vmul.f32 %v1129, %v1336
        %v1429 = vmul.f32 %v1130, %v1343
        %v1430 = vmul.f32 %v1131, %v1350
        %v1431 = vmul.f32 %v1132, %v1357
        %v1432 = vmul.f32 %v1133, %v1364
        %v1433 = vmul.f32 %v1134, %v1371
        %v1434 = vmul.f32 %v1135, %v1378
        %v1435 = vmul.f32 %v1136, %v1385
        %v1436 = vmul.f32 %v1137, %v1392
        %v1437 = vmul.f32 %v1138, %v1399
        %v1438 = vmul.f32 %v1139, %v1406
        %vm1439 = vcmask 257024
        %v1440 = vsel %vm1439, %v1407, 0.0
        %v1441 = vrot.slane %v1440, 4
        %v1442 = vadd.f32 %v1440, %v1441
        %v1443 = vrot.slane %v1442, 2
        %v1444 = vadd.f32 %v1442, %v1443
        %v1445 = vrot.slane %v1444, 1
        %v1446 = vadd.f32 %v1444, %v1445
        %v1447 = vsel %vm1439, %v1408, 0.0
        %v1448 = vrot.slane %v1447, 4
        %v1449 = vadd.f32 %v1447, %v1448
        %v1450 = vrot.slane %v1449, 2
        %v1451 = vadd.f32 %v1449, %v1450
        %v1452 = vrot.slane %v1451, 1
        %v1453 = vadd.f32 %v1451, %v1452
        %v1454 = vsel %vm1439, %v1409, 0.0
        %v1455 = vrot.slane %v1454, 4
        %v1456 = vadd.f32 %v1454, %v1455
        %v1457 = vrot.slane %v1456, 2
        %v1458 = vadd.f32 %v1456, %v1457
        %v1459 = vrot.slane %v1458, 1
        %v1460 = vadd.f32 %v1458, %v1459
        %v1461 = vsel %vm1439, %v1410, 0.0
        %v1462 = vrot.slane %v1461, 4
        %v1463 = vadd.f32 %v1461, %v1462
        %v1464 = vrot.slane %v1463, 2
        %v1465 = vadd.f32 %v1463, %v1464
        %v1466 = vrot.slane %v1465, 1
        %v1467 = vadd.f32 %v1465, %v1466
        %v1468 = vsel %vm1439, %v1411, 0.0
        %v1469 = vrot.slane %v1468, 4
        %v1470 = vadd.f32 %v1468, %v1469
        %v1471 = vrot.slane %v1470, 2
        %v1472 = vadd.f32 %v1470, %v1471
        %v1473 = vrot.slane %v1472, 1
        %v1474 = vadd.f32 %v1472, %v1473
        %v1475 = vsel %vm1439, %v1412, 0.0
        %v1476 = vrot.slane %v1475, 4
        %v1477 = vadd.f32 %v1475, %v1476
        %v1478 = vrot.slane %v1477, 2
        %v1479 = vadd.f32 %v1477, %v1478
        %v1480 = vrot.slane %v1479, 1
        %v1481 = vadd.f32 %v1479, %v1480
        %v1482 = vsel %vm1439, %v1413, 0.0
        %v1483 = vrot.slane %v1482, 4
        %v1484 = vadd.f32 %v1482, %v1483
        %v1485 = vrot.slane %v1484, 2
        %v1486 = vadd.f32 %v1484, %v1485
        %v1487 = vrot.slane %v1486, 1
        %v1488 = vadd.f32 %v1486, %v1487
        %v1489 = vsel %vm1439, %v1414, 0.0
        %v1490 = vrot.slane %v1489, 4
        %v1491 = vadd.f32 %v1489, %v1490
        %v1492 = vrot.slane %v1491, 2
        %v1493 = vadd.f32 %v1491, %v1492
        %v1494 = vrot.slane %v1493, 1
        %v1495 = vadd.f32 %v1493, %v1494
        %v1496 = vsel %vm1439, %v1415, 0.0
        %v1497 = vrot.slane %v1496, 4
        %v1498 = vadd.f32 %v1496, %v1497
        %v1499 = vrot.slane %v1498, 2
        %v1500 = vadd.f32 %v1498, %v1499
        %v1501 = vrot.slane %v1500, 1
        %v1502 = vadd.f32 %v1500, %v1501
        %v1503 = vsel %vm1439, %v1416, 0.0
        %v1504 = vrot.slane %v1503, 4
        %v1505 = vadd.f32 %v1503, %v1504
        %v1506 = vrot.slane %v1505, 2
        %v1507 = vadd.f32 %v1505, %v1506
        %v1508 = vrot.slane %v1507, 1
        %v1509 = vadd.f32 %v1507, %v1508
        %v1510 = vsel %vm1439, %v1417, 0.0
        %v1511 = vrot.slane %v1510, 4
        %v1512 = vadd.f32 %v1510, %v1511
        %v1513 = vrot.slane %v1512, 2
        %v1514 = vadd.f32 %v1512, %v1513
        %v1515 = vrot.slane %v1514, 1
        %v1516 = vadd.f32 %v1514, %v1515
        %v1517 = vsel %vm1439, %v1418, 0.0
        %v1518 = vrot.slane %v1517, 4
        %v1519 = vadd.f32 %v1517, %v1518
        %v1520 = vrot.slane %v1519, 2
        %v1521 = vadd.f32 %v1519, %v1520
        %v1522 = vrot.slane %v1521, 1
        %v1523 = vadd.f32 %v1521, %v1522
        %v1524 = vsel %vm1439, %v1419, 0.0
        %v1525 = vrot.slane %v1524, 4
        %v1526 = vadd.f32 %v1524, %v1525
        %v1527 = vrot.slane %v1526, 2
        %v1528 = vadd.f32 %v1526, %v1527
        %v1529 = vrot.slane %v1528, 1
        %v1530 = vadd.f32 %v1528, %v1529
        %v1531 = vsel %vm1439, %v1420, 0.0
        %v1532 = vrot.slane %v1531, 4
        %v1533 = vadd.f32 %v1531, %v1532
        %v1534 = vrot.slane %v1533, 2
        %v1535 = vadd.f32 %v1533, %v1534
        %v1536 = vrot.slane %v1535, 1
        %v1537 = vadd.f32 %v1535, %v1536
        %v1538 = vsel %vm1439, %v1421, 0.0
        %v1539 = vrot.slane %v1538, 4
        %v1540 = vadd.f32 %v1538, %v1539
        %v1541 = vrot.slane %v1540, 2
        %v1542 = vadd.f32 %v1540, %v1541
        %v1543 = vrot.slane %v1542, 1
        %v1544 = vadd.f32 %v1542, %v1543
        %v1545 = vsel %vm1439, %v1422, 0.0
        %v1546 = vrot.slane %v1545, 4
        %v1547 = vadd.f32 %v1545, %v1546
        %v1548 = vrot.slane %v1547, 2
        %v1549 = vadd.f32 %v1547, %v1548
        %v1550 = vrot.slane %v1549, 1
        %v1551 = vadd.f32 %v1549, %v1550
        %v1552 = vsel %vm1439, %v1423, 0.0
        %v1553 = vrot.slane %v1552, 4
        %v1554 = vadd.f32 %v1552, %v1553
        %v1555 = vrot.slane %v1554, 2
        %v1556 = vadd.f32 %v1554, %v1555
        %v1557 = vrot.slane %v1556, 1
        %v1558 = vadd.f32 %v1556, %v1557
        %v1559 = vsel %vm1439, %v1424, 0.0
        %v1560 = vrot.slane %v1559, 4
        %v1561 = vadd.f32 %v1559, %v1560
        %v1562 = vrot.slane %v1561, 2
        %v1563 = vadd.f32 %v1561, %v1562
        %v1564 = vrot.slane %v1563, 1
        %v1565 = vadd.f32 %v1563, %v1564
        %v1566 = vsel %vm1439, %v1425, 0.0
        %v1567 = vrot.slane %v1566, 4
        %v1568 = vadd.f32 %v1566, %v1567
        %v1569 = vrot.slane %v1568, 2
        %v1570 = vadd.f32 %v1568, %v1569
        %v1571 = vrot.slane %v1570, 1
        %v1572 = vadd.f32 %v1570, %v1571
        %v1573 = vsel %vm1439, %v1426, 0.0
        %v1574 = vrot.slane %v1573, 4
        %v1575 = vadd.f32 %v1573, %v1574
        %v1576 = vrot.slane %v1575, 2
        %v1577 = vadd.f32 %v1575, %v1576
        %v1578 = vrot.slane %v1577, 1
        %v1579 = vadd.f32 %v1577, %v1578
        %v1580 = vsel %vm1439, %v1427, 0.0
        %v1581 = vrot.slane %v1580, 4
        %v1582 = vadd.f32 %v1580, %v1581
        %v1583 = vrot.slane %v1582, 2
        %v1584 = vadd.f32 %v1582, %v1583
        %v1585 = vrot.slane %v1584, 1
        %v1586 = vadd.f32 %v1584, %v1585
        %v1587 = vsel %vm1439, %v1428, 0.0
        %v1588 = vrot.slane %v1587, 4
        %v1589 = vadd.f32 %v1587, %v1588
        %v1590 = vrot.slane %v1589, 2
        %v1591 = vadd.f32 %v1589, %v1590
        %v1592 = vrot.slane %v1591, 1
        %v1593 = vadd.f32 %v1591, %v1592
        %v1594 = vsel %vm1439, %v1429, 0.0
        %v1595 = vrot.slane %v1594, 4
        %v1596 = vadd.f32 %v1594, %v1595
        %v1597 = vrot.slane %v1596, 2
        %v1598 = vadd.f32 %v1596, %v1597
        %v1599 = vrot.slane %v1598, 1
        %v1600 = vadd.f32 %v1598, %v1599
        %v1601 = vsel %vm1439, %v1430, 0.0
        %v1602 = vrot.slane %v1601, 4
        %v1603 = vadd.f32 %v1601, %v1602
        %v1604 = vrot.slane %v1603, 2
        %v1605 = vadd.f32 %v1603, %v1604
        %v1606 = vrot.slane %v1605, 1
        %v1607 = vadd.f32 %v1605, %v1606
        %v1608 = vsel %vm1439, %v1431, 0.0
        %v1609 = vrot.slane %v1608, 4
        %v1610 = vadd.f32 %v1608, %v1609
        %v1611 = vrot.slane %v1610, 2
        %v1612 = vadd.f32 %v1610, %v1611
        %v1613 = vrot.slane %v1612, 1
        %v1614 = vadd.f32 %v1612, %v1613
        %v1615 = vsel %vm1439, %v1432, 0.0
        %v1616 = vrot.slane %v1615, 4
        %v1617 = vadd.f32 %v1615, %v1616
        %v1618 = vrot.slane %v1617, 2
        %v1619 = vadd.f32 %v1617, %v1618
        %v1620 = vrot.slane %v1619, 1
        %v1621 = vadd.f32 %v1619, %v1620
        %v1622 = vsel %vm1439, %v1433, 0.0
        %v1623 = vrot.slane %v1622, 4
        %v1624 = vadd.f32 %v1622, %v1623
        %v1625 = vrot.slane %v1624, 2
        %v1626 = vadd.f32 %v1624, %v1625
        %v1627 = vrot.slane %v1626, 1
        %v1628 = vadd.f32 %v1626, %v1627
        %v1629 = vsel %vm1439, %v1434, 0.0
        %v1630 = vrot.slane %v1629, 4
        %v1631 = vadd.f32 %v1629, %v1630
        %v1632 = vrot.slane %v1631, 2
        %v1633 = vadd.f32 %v1631, %v1632
        %v1634 = vrot.slane %v1633, 1
        %v1635 = vadd.f32 %v1633, %v1634
        %v1636 = vsel %vm1439, %v1435, 0.0
        %v1637 = vrot.slane %v1636, 4
        %v1638 = vadd.f32 %v1636, %v1637
        %v1639 = vrot.slane %v1638, 2
        %v1640 = vadd.f32 %v1638, %v1639
        %v1641 = vrot.slane %v1640, 1
        %v1642 = vadd.f32 %v1640, %v1641
        %v1643 = vsel %vm1439, %v1436, 0.0
        %v1644 = vrot.slane %v1643, 4
        %v1645 = vadd.f32 %v1643, %v1644
        %v1646 = vrot.slane %v1645, 2
        %v1647 = vadd.f32 %v1645, %v1646
        %v1648 = vrot.slane %v1647, 1
        %v1649 = vadd.f32 %v1647, %v1648
        %v1650 = vsel %vm1439, %v1437, 0.0
        %v1651 = vrot.slane %v1650, 4
        %v1652 = vadd.f32 %v1650, %v1651
        %v1653 = vrot.slane %v1652, 2
        %v1654 = vadd.f32 %v1652, %v1653
        %v1655 = vrot.slane %v1654, 1
        %v1656 = vadd.f32 %v1654, %v1655
        %v1657 = vsel %vm1439, %v1438, 0.0
        %v1658 = vrot.slane %v1657, 4
        %v1659 = vadd.f32 %v1657, %v1658
        %v1660 = vrot.slane %v1659, 2
        %v1661 = vadd.f32 %v1659, %v1660
        %v1662 = vrot.slane %v1661, 1
        %v1663 = vadd.f32 %v1661, %v1662
        %v1672 = vrot.slane %v1175, 1
        %v1673 = vrot.slane %v1175, 2
        %v1674 = vrot.slane %v1175, 3
        %v1675 = vrot.slane %v1176, 1
        %v1676 = vrot.slane %v1176, 2
        %v1677 = vrot.slane %v1176, 3
        %v1678 = vrot.slane %v1177, 1
        %v1679 = vrot.slane %v1177, 2
        %v1680 = vrot.slane %v1177, 3
        %v1681 = vrot.slane %v1178, 1
        %v1682 = vrot.slane %v1178, 2
        %v1683 = vrot.slane %v1178, 3
        %v1684 = vrot.slane %v1179, 1
        %v1685 = vrot.slane %v1179, 2
        %v1686 = vrot.slane %v1179, 3
        %v1687 = vrot.slane %v1180, 1
        %v1688 = vrot.slane %v1180, 2
        %v1689 = vrot.slane %v1180, 3
        %v1690 = vrot.slane %v1181, 1
        %v1691 = vrot.slane %v1181, 2
        %v1692 = vrot.slane %v1181, 3
        %v1693 = vrot.slane %v1182, 1
        %v1694 = vrot.slane %v1182, 2
        %v1695 = vrot.slane %v1182, 3
        %v1728 = vrcp.pop %v1175
        %v1729 = vmul.f32 %v1446, %v1728
        %v1730 = vrcp.pop %v1672
        %v1731 = vmul.f32 %v1453, %v1730
        %v1732 = vrcp.pop %v1673
        %v1733 = vmul.f32 %v1460, %v1732
        %v1734 = vrcp.pop %v1674
        %v1735 = vmul.f32 %v1467, %v1734
        %v1736 = vrcp.pop %v1176
        %v1737 = vmul.f32 %v1474, %v1736
        %v1738 = vrcp.pop %v1675
        %v1739 = vmul.f32 %v1481, %v1738
        %v1740 = vrcp.pop %v1676
        %v1741 = vmul.f32 %v1488, %v1740
        %v1742 = vrcp.pop %v1677
        %v1743 = vmul.f32 %v1495, %v1742
        %v1744 = vrcp.pop %v1177
        %v1745 = vmul.f32 %v1502, %v1744
        %v1746 = vrcp.pop %v1678
        %v1747 = vmul.f32 %v1509, %v1746
        %v1748 = vrcp.pop %v1679
        %v1749 = vmul.f32 %v1516, %v1748
        %v1750 = vrcp.pop %v1680
        %v1751 = vmul.f32 %v1523, %v1750
        %v1752 = vrcp.pop %v1178
        %v1753 = vmul.f32 %v1530, %v1752
        %v1754 = vrcp.pop %v1681
        %v1755 = vmul.f32 %v1537, %v1754
        %v1756 = vrcp.pop %v1682
        %v1757 = vmul.f32 %v1544, %v1756
        %v1758 = vrcp.pop %v1683
        %v1759 = vmul.f32 %v1551, %v1758
        %v1760 = vrcp.pop %v1179
        %v1761 = vmul.f32 %v1558, %v1760
        %v1762 = vrcp.pop %v1684
        %v1763 = vmul.f32 %v1565, %v1762
        %v1764 = vrcp.pop %v1685
        %v1765 = vmul.f32 %v1572, %v1764
        %v1766 = vrcp.pop %v1686
        %v1767 = vmul.f32 %v1579, %v1766
        %v1768 = vrcp.pop %v1180
        %v1769 = vmul.f32 %v1586, %v1768
        %v1770 = vrcp.pop %v1687
        %v1771 = vmul.f32 %v1593, %v1770
        %v1772 = vrcp.pop %v1688
        %v1773 = vmul.f32 %v1600, %v1772
        %v1774 = vrcp.pop %v1689
        %v1775 = vmul.f32 %v1607, %v1774
        %v1776 = vrcp.pop %v1181
        %v1777 = vmul.f32 %v1614, %v1776
        %v1778 = vrcp.pop %v1690
        %v1779 = vmul.f32 %v1621, %v1778
        %v1780 = vrcp.pop %v1691
        %v1781 = vmul.f32 %v1628, %v1780
        %v1782 = vrcp.pop %v1692
        %v1783 = vmul.f32 %v1635, %v1782
        %v1784 = vrcp.pop %v1182
        %v1785 = vmul.f32 %v1642, %v1784
        %v1786 = vrcp.pop %v1693
        %v1787 = vmul.f32 %v1649, %v1786
        %v1788 = vrcp.pop %v1694
        %v1789 = vmul.f32 %v1656, %v1788
        %v1790 = vrcp.pop %v1695
        %v1791 = vmul.f32 %v1663, %v1790
        %v1824 = vrot.slane %v1731, 7
        %vm1825 = vcmask 1041409
        %v1826 = vsel %vm1825, %v1824, %v1729
        %v1827 = vrot.slane %v1733, 6
        %vm1828 = vcmask 1042434
        %v1829 = vsel %vm1828, %v1827, %v1826
        %v1830 = vrot.slane %v1735, 5
        %vm1831 = vcmask 1043459
        %v1832 = vsel %vm1831, %v1830, %v1829
        %v1833 = vrot.slane %v1739, 7
        %v1834 = vsel %vm1825, %v1833, %v1737
        %v1835 = vrot.slane %v1741, 6
        %v1836 = vsel %vm1828, %v1835, %v1834
        %v1837 = vrot.slane %v1743, 5
        %v1838 = vsel %vm1831, %v1837, %v1836
        %v1839 = vrot.slane %v1747, 7
        %v1840 = vsel %vm1825, %v1839, %v1745
        %v1841 = vrot.slane %v1749, 6
        %v1842 = vsel %vm1828, %v1841, %v1840
        %v1843 = vrot.slane %v1751, 5
        %v1844 = vsel %vm1831, %v1843, %v1842
        %v1845 = vrot.slane %v1755, 7
        %v1846 = vsel %vm1825, %v1845, %v1753
        %v1847 = vrot.slane %v1757, 6
        %v1848 = vsel %vm1828, %v1847, %v1846
        %v1849 = vrot.slane %v1759, 5
        %v1850 = vsel %vm1831, %v1849, %v1848
        %v1851 = vrot.slane %v1763, 7
        %v1852 = vsel %vm1825, %v1851, %v1761
        %v1853 = vrot.slane %v1765, 6
        %v1854 = vsel %vm1828, %v1853, %v1852
        %v1855 = vrot.slane %v1767, 5
        %v1856 = vsel %vm1831, %v1855, %v1854
        %v1857 = vrot.slane %v1771, 7
        %v1858 = vsel %vm1825, %v1857, %v1769
        %v1859 = vrot.slane %v1773, 6
        %v1860 = vsel %vm1828, %v1859, %v1858
        %v1861 = vrot.slane %v1775, 5
        %v1862 = vsel %vm1831, %v1861, %v1860
        %v1863 = vrot.slane %v1779, 7
        %v1864 = vsel %vm1825, %v1863, %v1777
        %v1865 = vrot.slane %v1781, 6
        %v1866 = vsel %vm1828, %v1865, %v1864
        %v1867 = vrot.slane %v1783, 5
        %v1868 = vsel %vm1831, %v1867, %v1866
        %v1869 = vrot.slane %v1787, 7
        %v1870 = vsel %vm1825, %v1869, %v1785
        %v1871 = vrot.slane %v1789, 6
        %v1872 = vsel %vm1828, %v1871, %v1870
        %v1873 = vrot.slane %v1791, 5
        %v1874 = vsel %vm1831, %v1873, %v1872
        %v1883 = vadd.f32 %v1100, %v1832
        %v1884 = vadd.f32 %v1101, %v1838
        %v1885 = vadd.f32 %v1102, %v1844
        %v1886 = vadd.f32 %v1103, %v1850
        %v1887 = vadd.f32 %v1104, %v1856
        %v1888 = vadd.f32 %v1105, %v1862
        %v1889 = vadd.f32 %v1106, %v1868
        %v1890 = vadd.f32 %v1107, %v1874
        %v1891 = vsel %vm1439, %v1883, 0.0
        %1892 = vadd.xlane.f32.xlu0 %v1891
        %v1893 = vpop.xlane.xlu0 %1892
        %v1894 = vsel %vm1439, %v1884, 0.0
        %1895 = vadd.xlane.f32.xlu0 %v1894
        %v1896 = vpop.xlane.xlu0 %1895
        %v1897 = vsel %vm1439, %v1885, 0.0
        %1898 = vadd.xlane.f32.xlu0 %v1897
        %v1899 = vpop.xlane.xlu0 %1898
        %v1900 = vsel %vm1439, %v1886, 0.0
        %1901 = vadd.xlane.f32.xlu0 %v1900
        %v1902 = vpop.xlane.xlu0 %1901
        %v1903 = vsel %vm1439, %v1887, 0.0
        %1904 = vadd.xlane.f32.xlu0 %v1903
        %v1905 = vpop.xlane.xlu0 %1904
        %v1906 = vsel %vm1439, %v1888, 0.0
        %1907 = vadd.xlane.f32.xlu0 %v1906
        %v1908 = vpop.xlane.xlu0 %1907
        %v1909 = vsel %vm1439, %v1889, 0.0
        %1910 = vadd.xlane.f32.xlu0 %v1909
        %v1911 = vpop.xlane.xlu0 %1910
        %v1912 = vsel %vm1439, %v1890, 0.0
        %1913 = vadd.xlane.f32.xlu0 %v1912
        %v1914 = vpop.xlane.xlu0 %1913
        %v1915 = vrcp.pop 32.0
        %v1916 = vmul.f32 %v1893, %v1915
        %v1917 = vmul.f32 %v1896, %v1915
        %v1918 = vmul.f32 %v1899, %v1915
        %v1919 = vmul.f32 %v1902, %v1915
        %v1920 = vmul.f32 %v1905, %v1915
        %v1921 = vmul.f32 %v1908, %v1915
        %v1922 = vmul.f32 %v1911, %v1915
        %v1923 = vmul.f32 %v1914, %v1915
        %v1924 = vsub.f32 %v1883, %v1916
        %v1925 = vsub.f32 %v1884, %v1917
        %v1926 = vsub.f32 %v1885, %v1918
        %v1927 = vsub.f32 %v1886, %v1919
        %v1928 = vsub.f32 %v1887, %v1920
        %v1929 = vsub.f32 %v1888, %v1921
        %v1930 = vsub.f32 %v1889, %v1922
        %v1931 = vsub.f32 %v1890, %v1923
        %v1932 = vmul.f32 %v1924, %v1924
        %v1933 = vmul.f32 %v1925, %v1925
        %v1934 = vmul.f32 %v1926, %v1926
        %v1935 = vmul.f32 %v1927, %v1927
        %v1936 = vmul.f32 %v1928, %v1928
        %v1937 = vmul.f32 %v1929, %v1929
        %v1938 = vmul.f32 %v1930, %v1930
        %v1939 = vmul.f32 %v1931, %v1931
        %v1940 = vsel %vm1439, %v1932, 0.0
        %1941 = vadd.xlane.f32.xlu0 %v1940
        %v1942 = vpop.xlane.xlu0 %1941
        %v1943 = vsel %vm1439, %v1933, 0.0
        %1944 = vadd.xlane.f32.xlu0 %v1943
        %v1945 = vpop.xlane.xlu0 %1944
        %v1946 = vsel %vm1439, %v1934, 0.0
        %1947 = vadd.xlane.f32.xlu0 %v1946
        %v1948 = vpop.xlane.xlu0 %1947
        %v1949 = vsel %vm1439, %v1935, 0.0
        %1950 = vadd.xlane.f32.xlu0 %v1949
        %v1951 = vpop.xlane.xlu0 %1950
        %v1952 = vsel %vm1439, %v1936, 0.0
        %1953 = vadd.xlane.f32.xlu0 %v1952
        %v1954 = vpop.xlane.xlu0 %1953
        %v1955 = vsel %vm1439, %v1937, 0.0
        %1956 = vadd.xlane.f32.xlu0 %v1955
        %v1957 = vpop.xlane.xlu0 %1956
        %v1958 = vsel %vm1439, %v1938, 0.0
        %1959 = vadd.xlane.f32.xlu0 %v1958
        %v1960 = vpop.xlane.xlu0 %1959
        %v1961 = vsel %vm1439, %v1939, 0.0
        %1962 = vadd.xlane.f32.xlu0 %v1961
        %v1963 = vpop.xlane.xlu0 %1962
        %v1964 = vmul.f32 %v1942, %v1915
        %v1965 = vmul.f32 %v1945, %v1915
        %v1966 = vmul.f32 %v1948, %v1915
        %v1967 = vmul.f32 %v1951, %v1915
        %v1968 = vmul.f32 %v1954, %v1915
        %v1969 = vmul.f32 %v1957, %v1915
        %v1970 = vmul.f32 %v1960, %v1915
        %v1971 = vmul.f32 %v1963, %v1915
        %v1972 = vadd.f32 %v1964, 1e-06
        %v1973 = vadd.f32 %v1965, 1e-06
        %v1974 = vadd.f32 %v1966, 1e-06
        %v1975 = vadd.f32 %v1967, 1e-06
        %v1976 = vadd.f32 %v1968, 1e-06
        %v1977 = vadd.f32 %v1969, 1e-06
        %v1978 = vadd.f32 %v1970, 1e-06
        %v1979 = vadd.f32 %v1971, 1e-06
        %v1980 = vrsqrt.pop %v1972
        %v1981 = vrsqrt.pop %v1973
        %v1982 = vrsqrt.pop %v1974
        %v1983 = vrsqrt.pop %v1975
        %v1984 = vrsqrt.pop %v1976
        %v1985 = vrsqrt.pop %v1977
        %v1986 = vrsqrt.pop %v1978
        %v1987 = vrsqrt.pop %v1979
        %v1988 = vmul.f32 %v1924, %v1980
        %v1989 = vmul.f32 %v1925, %v1981
        %v1990 = vmul.f32 %v1926, %v1982
        %v1991 = vmul.f32 %v1927, %v1983
        %v1992 = vmul.f32 %v1928, %v1984
        %v1993 = vmul.f32 %v1929, %v1985
        %v1994 = vmul.f32 %v1930, %v1986
        %v1995 = vmul.f32 %v1931, %v1987
        %v1996 = vld [vmem:[#allocation8] sm:$0x1]
        %v1998 = vlaneseq
        %v1999 = vshrl.u32 %v1998, 7
        %v2000 = vsub.s32 0, %v1999
        %v2001 = vrot.slane %v1996, %v2000
        %v2003 = vmul.f32 %v1988, %v2001
        %v2004 = vmul.f32 %v1989, %v2001
        %v2005 = vmul.f32 %v1990, %v2001
        %v2006 = vmul.f32 %v1991, %v2001
        %v2007 = vmul.f32 %v1992, %v2001
        %v2008 = vmul.f32 %v1993, %v2001
        %v2009 = vmul.f32 %v1994, %v2001
        %v2010 = vmul.f32 %v1995, %v2001
        %v2011 = vld [vmem:[#allocation10] sm:$0x1]
        %v2013 = vlaneseq
        %v2014 = vshrl.u32 %v2013, 7
        %v2015 = vsub.s32 0, %v2014
        %v2016 = vrot.slane %v2011, %v2015
        %v2018 = vadd.f32 %v2003, %v2016
        %v2019 = vadd.f32 %v2004, %v2016
        %v2020 = vadd.f32 %v2005, %v2016
        %v2021 = vadd.f32 %v2006, %v2016
        %v2022 = vadd.f32 %v2007, %v2016
        %v2023 = vadd.f32 %v2008, %v2016
        %v2024 = vadd.f32 %v2009, %v2016
        %v2025 = vadd.f32 %v2010, %v2016
        %v2026 = vld [vmem:[#allocation7] sm:$0x1]
        %v2027 = vmul.f32 %v2026, %v2026
        %vm2028 = vcmask 253952
        %v2029 = vsel %vm2028, %v2027, 0.0
        %2030 = vadd.xlane.f32.xlu0 %v2029
        %v2031 = vpop.xlane.xlu0 %2030
        %v2032 = vrsqrt.pop %v2031
        %v2033 = vmul.f32 %v2031, %v2032
        %vm2034 = vcmp.eq.f32.partialorder %v2031, inf
        %v2035 = vsel %vm2034, %v2031, %v2033
        %vm2036 = vcmp.eq.f32.partialorder %v2031, 0.0
        %v2037 = vand.u32 %v2031, 2147483648
        %v2038 = vsel %vm2036, %v2037, %v2035
        %v2039 = vmax.f32 %v2038, 1e-12
        %v2040 = vrcp.pop %v2039
        %v2041 = vmul.f32 %v2026, %v2040
        %v2042 = vld [vmem:[%s8] sm:$0xff]
        %v2043 = vld [vmem:[%s8 + $0x8] sm:$0xff]
        %v2044 = vld [vmem:[%s8 + $0x10] sm:$0xff]
        %v2045 = vld [vmem:[%s8 + $0x18] sm:$0xff]
        %v2046 = vld [vmem:[#allocation11] sm:$0x1]
        %vm2047 = vcmask 261120
        %v2049 = vsel %vm2047, %v2041, 0
        %v2052 = vsel %vm2047, %v2042, 0
        %v2055 = vsel %vm2047, %v2043, 0
        %v2058 = vsel %vm2047, %v2044, 0
        %v2061 = vsel %vm2047, %v2045, 0
        %2063 = vmatprep.subr.mxu0 0.0
        %2064 = vmatpush1.xpose.msra.mxu0 0.0
        %2065 = vmatprep.subr.mxu0 0.0
        %2066 = vmatpush1.xpose.msra.mxu0 0.0
        %2067 = vmatprep.subr.mxu0 0.0
        %2068 = vmatpush1.xpose.msra.mxu0 0.0
        %2069 = vmatprep.subr.mxu0 0.0
        %2070 = vmatpush1.xpose.msra.mxu0 0.0
        %2071 = vmatprep.subr.mxu0 0.0
        %2072 = vmatpush1.xpose.msra.mxu0 0.0
        %2073 = vmatprep.subr.mxu0 0.0
        %2074 = vmatpush1.xpose.msra.mxu0 0.0
        %2075 = vmatprep.subr.mxu0 0.0
        %2076 = vmatpush1.xpose.msra.mxu0 0.0
        %2077 = vmatprep.subr.mxu0 0.0
        %2078 = vmatpush1.xpose.msra.mxu0 0.0
        %2079 = vmatprep.subr.mxu0 0.0
        %2080 = vmatpush1.xpose.msra.mxu0 0.0
        %2081 = vmatprep.subr.mxu0 0.0
        %2082 = vmatpush1.xpose.msra.mxu0 0.0
        %2083 = vmatprep.subr.mxu0 0.0
        %2084 = vmatpush1.xpose.msra.mxu0 0.0
        %2085 = vmatprep.subr.mxu0 0.0
        %2086 = vmatpush1.xpose.msra.mxu0 0.0
        %2087 = vmatprep.subr.mxu0 0.0
        %2088 = vmatpush1.xpose.msra.mxu0 %v2061
        %2089 = vmatprep.subr.mxu0 0.0
        %2090 = vmatpush1.xpose.msra.mxu0 %v2058
        %2091 = vmatprep.subr.mxu0 0.0
        %2092 = vmatpush1.xpose.msra.mxu0 %v2055
        %2093 = vmatprep.subr.mxu0 0.0
        %2094 = vmatpush1.xpose.msra.mxu0 %v2052
        %2095 = vmatprep.subr.mxu0 0.0
        %2096 = vmatpush2.xpose.msra.mxu0 0.0
        %2097 = vmatprep.subr.mxu0 0.0
        %2098 = vmatpush2.xpose.msra.mxu0 0.0
        %2099 = vmatprep.subr.mxu0 0.0
        %2100 = vmatpush2.xpose.msra.mxu0 0.0
        %2101 = vmatprep.subr.mxu0 0.0
        %2102 = vmatpush2.xpose.msra.mxu0 0.0
        %2103 = vmatprep.subr.mxu0 0.0
        %2104 = vmatpush2.xpose.msra.mxu0 0.0
        %2105 = vmatprep.subr.mxu0 0.0
        %2106 = vmatpush2.xpose.msra.mxu0 0.0
        %2107 = vmatprep.subr.mxu0 0.0
        %2108 = vmatpush2.xpose.msra.mxu0 0.0
        %2109 = vmatprep.subr.mxu0 0.0
        %2110 = vmatpush2.xpose.msra.mxu0 0.0
        %2111 = vmatprep.subr.mxu0 0.0
        %2112 = vmatpush2.xpose.msra.mxu0 0.0
        %2113 = vmatprep.subr.mxu0 0.0
        %2114 = vmatpush2.xpose.msra.mxu0 0.0
        %2115 = vmatprep.subr.mxu0 0.0
        %2116 = vmatpush2.xpose.msra.mxu0 0.0
        %2117 = vmatprep.subr.mxu0 0.0
        %2118 = vmatpush2.xpose.msra.mxu0 0.0
        %2119 = vmatprep.subr.mxu0 0.0
        %2120 = vmatpush2.xpose.msra.mxu0 0.0
        %2121 = vmatprep.subr.mxu0 0.0
        %2122 = vmatpush2.xpose.msra.mxu0 0.0
        %2123 = vmatprep.subr.mxu0 0.0
        %2124 = vmatpush2.xpose.msra.mxu0 0.0
        %2125 = vmatprep.subr.mxu0 0.0
        %2126 = vmatpush2.xpose.msra.mxu0 0.0
        %2127 = vmatprep.mubr.f32.mxu0 0.0
        %2128 = vmatmul.mubr.f32.gmra.mxu0 %v2049
        %v2129 = vpop.f32.mrf.mxu0
        %v2130 = vadd.f32 %v2046, %v2129
        %v2131 = vpop.f32.mrf.mxu0
        %2132 = vdwg.mxu0
        %v2133 = vld [vmem:[%s9] sm:$0xff]
        %v2134 = vld [vmem:[%s9 + $0x8] sm:$0xff]
        %v2135 = vld [vmem:[%s9 + $0x10] sm:$0xff]
        %v2136 = vld [vmem:[%s9 + $0x18] sm:$0xff]
        %v2138 = vsel %vm2047, %v2130, 0
        %2140 = vmatprep.subr.mxu0 0.0
        %2141 = vmatpush1.msra.mxu0 0.0
        %2142 = vmatprep.subr.mxu0 0.0
        %2143 = vmatpush1.msra.mxu0 0.0
        %2144 = vmatprep.subr.mxu0 0.0
        %2145 = vmatpush1.msra.mxu0 0.0
        %2146 = vmatprep.subr.mxu0 0.0
        %2147 = vmatpush1.msra.mxu0 0.0
        %2148 = vmatprep.subr.mxu0 0.0
        %2149 = vmatpush1.msra.mxu0 0.0
        %2150 = vmatprep.subr.mxu0 0.0
        %2151 = vmatpush1.msra.mxu0 0.0
        %2152 = vmatprep.subr.mxu0 0.0
        %2153 = vmatpush1.msra.mxu0 0.0
        %2154 = vmatprep.subr.mxu0 0.0
        %2155 = vmatpush1.msra.mxu0 0.0
        %2156 = vmatprep.subr.mxu0 0.0
        %2157 = vmatpush1.msra.mxu0 0.0
        %2158 = vmatprep.subr.mxu0 0.0
        %2159 = vmatpush1.msra.mxu0 0.0
        %2160 = vmatprep.subr.mxu0 0.0
        %2161 = vmatpush1.msra.mxu0 0.0
        %2162 = vmatprep.subr.mxu0 0.0
        %2163 = vmatpush1.msra.mxu0 0.0
        %2164 = vmatprep.subr.mxu0 0.0
        %2165 = vmatpush1.msra.mxu0 %v2136
        %2166 = vmatprep.subr.mxu0 0.0
        %2167 = vmatpush1.msra.mxu0 %v2135
        %2168 = vmatprep.subr.mxu0 0.0
        %2169 = vmatpush1.msra.mxu0 %v2134
        %2170 = vmatprep.subr.mxu0 0.0
        %2171 = vmatpush1.msra.mxu0 %v2133
        %2172 = vmatprep.subr.mxu0 0.0
        %2173 = vmatpush2.msra.mxu0 0.0
        %2174 = vmatprep.subr.mxu0 0.0
        %2175 = vmatpush2.msra.mxu0 0.0
        %2176 = vmatprep.subr.mxu0 0.0
        %2177 = vmatpush2.msra.mxu0 0.0
        %2178 = vmatprep.subr.mxu0 0.0
        %2179 = vmatpush2.msra.mxu0 0.0
        %2180 = vmatprep.subr.mxu0 0.0
        %2181 = vmatpush2.msra.mxu0 0.0
        %2182 = vmatprep.subr.mxu0 0.0
        %2183 = vmatpush2.msra.mxu0 0.0
        %2184 = vmatprep.subr.mxu0 0.0
        %2185 = vmatpush2.msra.mxu0 0.0
        %2186 = vmatprep.subr.mxu0 0.0
        %2187 = vmatpush2.msra.mxu0 0.0
        %2188 = vmatprep.subr.mxu0 0.0
        %2189 = vmatpush2.msra.mxu0 0.0
        %2190 = vmatprep.subr.mxu0 0.0
        %2191 = vmatpush2.msra.mxu0 0.0
        %2192 = vmatprep.subr.mxu0 0.0
        %2193 = vmatpush2.msra.mxu0 0.0
        %2194 = vmatprep.subr.mxu0 0.0
        %2195 = vmatpush2.msra.mxu0 0.0
        %2196 = vmatprep.subr.mxu0 0.0
        %2197 = vmatpush2.msra.mxu0 0.0
        %2198 = vmatprep.subr.mxu0 0.0
        %2199 = vmatpush2.msra.mxu0 0.0
        %2200 = vmatprep.subr.mxu0 0.0
        %2201 = vmatpush2.msra.mxu0 0.0
        %2202 = vmatprep.subr.mxu0 0.0
        %2203 = vmatpush2.msra.mxu0 0.0
        %2204 = vmatprep.mubr.f32.mxu0 0.0
        %2205 = vmatmul.mubr.f32.gmra.mxu0 %v2138
        %v2206 = vpop.f32.mrf.mxu0
        %v2207 = vadd.f32 0.0, %v2206
        %v2208 = vpop.f32.mrf.mxu0
        %2209 = vdwg.mxu0
        %v2210 = vld [vmem:[#allocation13] sm:$0x1]
        %v2211 = vmul.f32 %v2130, %v2210
        %v2212 = vsel %vm2028, %v2211, 0.0
        %2213 = vadd.xlane.f32.xlu0 %v2212
        %v2214 = vpop.xlane.xlu0 %2213
        %v2215 = vlaneseq
        %v2216 = vshrl.u32 %v2215, 7
        %v2217 = vsub.s32 0, %v2216
        %v2218 = vrot.slane %v2207, %v2217
        %v2219 = vmul.f32 %v2018, %v2218
        %v2220 = vmul.f32 %v2019, %v2218
        %v2221 = vmul.f32 %v2020, %v2218
        %v2222 = vmul.f32 %v2021, %v2218
        %v2223 = vmul.f32 %v2022, %v2218
        %v2224 = vmul.f32 %v2023, %v2218
        %v2225 = vmul.f32 %v2024, %v2218
        %v2226 = vmul.f32 %v2025, %v2218
        %v2227 = vsel %vm1439, %v2219, 0.0
        %2228 = vadd.xlane.f32.xlu0 %v2227
        %v2229 = vpop.xlane.xlu0 %2228
        %v2230 = vsel %vm1439, %v2220, 0.0
        %2231 = vadd.xlane.f32.xlu0 %v2230
        %v2232 = vpop.xlane.xlu0 %2231
        %v2233 = vsel %vm1439, %v2221, 0.0
        %2234 = vadd.xlane.f32.xlu0 %v2233
        %v2235 = vpop.xlane.xlu0 %2234
        %v2236 = vsel %vm1439, %v2222, 0.0
        %2237 = vadd.xlane.f32.xlu0 %v2236
        %v2238 = vpop.xlane.xlu0 %2237
        %v2239 = vsel %vm1439, %v2223, 0.0
        %2240 = vadd.xlane.f32.xlu0 %v2239
        %v2241 = vpop.xlane.xlu0 %2240
        %v2242 = vsel %vm1439, %v2224, 0.0
        %2243 = vadd.xlane.f32.xlu0 %v2242
        %v2244 = vpop.xlane.xlu0 %2243
        %v2245 = vsel %vm1439, %v2225, 0.0
        %2246 = vadd.xlane.f32.xlu0 %v2245
        %v2247 = vpop.xlane.xlu0 %2246
        %v2248 = vsel %vm1439, %v2226, 0.0
        %2249 = vadd.xlane.f32.xlu0 %v2248
        %v2250 = vpop.xlane.xlu0 %2249
        %v2251 = vlaneseq
        %v2252 = vshrl.u32 %v2251, 7
        %v2253 = vsub.s32 0, %v2252
        %v2254 = vrot.slane %v2214, %v2253
        %v2255 = vadd.f32 %v2229, %v2254
        %v2256 = vadd.f32 %v2232, %v2254
        %v2257 = vadd.f32 %v2235, %v2254
        %v2258 = vadd.f32 %v2238, %v2254
        %v2259 = vadd.f32 %v2241, %v2254
        %v2260 = vadd.f32 %v2244, %v2254
        %v2261 = vadd.f32 %v2247, %v2254
        %v2262 = vadd.f32 %v2250, %v2254
        %v2263 = vmul.f32 %v2255, 0.17677669
        %v2264 = vmul.f32 %v2256, 0.17677669
        %v2265 = vmul.f32 %v2257, 0.17677669
        %v2266 = vmul.f32 %v2258, 0.17677669
        %v2267 = vmul.f32 %v2259, 0.17677669
        %v2268 = vmul.f32 %v2260, 0.17677669
        %v2269 = vmul.f32 %v2261, 0.17677669
        %v2270 = vmul.f32 %v2262, 0.17677669
        %vm2271 = vcmp.gt.f32.partialorder %v1148, 0.0
        %v2280 = vlaneseq
        %v2281 = vand.u32 %v2280, 127
        %v2282 = vlaneseq
        %v2283 = vshrl.u32 %v2282, 7
        %v2284 = vsub.s32 %v2281, %v2283
        %v2285 = vrot.slane %v2263, %v2284
        %v2286 = vlaneseq
        %v2287 = vshrl.u32 %v2286, 7
        %v2288 = vsub.s32 %v2281, %v2287
        %v2289 = vrot.slane %v2264, %v2288
        %v2290 = vlaneseq
        %v2291 = vshrl.u32 %v2290, 7
        %v2292 = vsub.s32 %v2281, %v2291
        %v2293 = vrot.slane %v2265, %v2292
        %v2294 = vlaneseq
        %v2295 = vshrl.u32 %v2294, 7
        %v2296 = vsub.s32 %v2281, %v2295
        %v2297 = vrot.slane %v2266, %v2296
        %v2298 = vlaneseq
        %v2299 = vshrl.u32 %v2298, 7
        %v2300 = vsub.s32 %v2281, %v2299
        %v2301 = vrot.slane %v2267, %v2300
        %v2302 = vlaneseq
        %v2303 = vshrl.u32 %v2302, 7
        %v2304 = vsub.s32 %v2281, %v2303
        %v2305 = vrot.slane %v2268, %v2304
        %v2306 = vlaneseq
        %v2307 = vshrl.u32 %v2306, 7
        %v2308 = vsub.s32 %v2281, %v2307
        %v2309 = vrot.slane %v2269, %v2308
        %v2310 = vlaneseq
        %v2311 = vshrl.u32 %v2310, 7
        %v2312 = vsub.s32 %v2281, %v2311
        %v2313 = vrot.slane %v2270, %v2312
        %v2314 = vsel %vm1825, %v2289, %v2285
        %v2315 = vsel %vm1828, %v2293, %v2314
        %v2316 = vsel %vm1831, %v2297, %v2315
        %vm2317 = vcmask 1044484
        %v2318 = vsel %vm2317, %v2301, %v2316
        %vm2319 = vcmask 1045509
        %v2320 = vsel %vm2319, %v2305, %v2318
        %vm2321 = vcmask 1046534
        %v2322 = vsel %vm2321, %v2309, %v2320
        %vm2323 = vcmask 1047559
        %v2324 = vsel %vm2323, %v2313, %v2322
        %v2326 = vsel %vm2271, %v2324, -1e+30
        %vm2327 = vcmask 31744
        %v2328 = vsel %vm2327, %v2326, -inf
        %2329 = vmax.xlane.f32.xlu0 %v2328
        %v2330 = vpop.xlane.xlu0 %2329
        %v2331 = vsub.f32 %v2326, %v2330
        %v2332 = vmul.f32 %v2331, 1.442695
        %v2333 = vpow.pop %v2332
        %v2334 = vsel %vm2327, %v2333, 0.0
        %2335 = vadd.xlane.f32.xlu0 %v2334
        %v2336 = vpop.xlane.xlu0 %2335
        %v2337 = vrcp.pop %v2336
        %v2338 = vmul.f32 %v2333, %v2337
        %v2339 = vlaneseq
        %v2340 = vshrl.u32 %v2339, 7
        %v2341 = vsub.s32 0, %v2340
        %v2342 = vrot.slane %v2338, %v2341
        %2344 = vbcast.lane.b32.xlu0 %v2342, 256
        %v2345 = vpop.permute.xlu0 %2344
        %v2346 = vlaneseq
        %v2347 = vshrl.u32 %v2346, 7
        %v2348 = vsub.s32 1, %v2347
        %v2349 = vrot.slane %v2338, %v2348
        %2351 = vbcast.lane.b32.xlu0 %v2349, 256
        %v2352 = vpop.permute.xlu0 %2351
        %v2353 = vlaneseq
        %v2354 = vshrl.u32 %v2353, 7
        %v2355 = vsub.s32 2, %v2354
        %v2356 = vrot.slane %v2338, %v2355
        %2358 = vbcast.lane.b32.xlu0 %v2356, 256
        %v2359 = vpop.permute.xlu0 %2358
        %v2360 = vlaneseq
        %v2361 = vshrl.u32 %v2360, 7
        %v2362 = vsub.s32 3, %v2361
        %v2363 = vrot.slane %v2338, %v2362
        %2365 = vbcast.lane.b32.xlu0 %v2363, 256
        %v2366 = vpop.permute.xlu0 %2365
        %v2367 = vlaneseq
        %v2368 = vshrl.u32 %v2367, 7
        %v2369 = vsub.s32 4, %v2368
        %v2370 = vrot.slane %v2338, %v2369
        %2372 = vbcast.lane.b32.xlu0 %v2370, 256
        %v2373 = vpop.permute.xlu0 %2372
        %v2374 = vlaneseq
        %v2375 = vshrl.u32 %v2374, 7
        %v2376 = vsub.s32 5, %v2375
        %v2377 = vrot.slane %v2338, %v2376
        %2379 = vbcast.lane.b32.xlu0 %v2377, 256
        %v2380 = vpop.permute.xlu0 %2379
        %v2381 = vlaneseq
        %v2382 = vshrl.u32 %v2381, 7
        %v2383 = vsub.s32 6, %v2382
        %v2384 = vrot.slane %v2338, %v2383
        %2386 = vbcast.lane.b32.xlu0 %v2384, 256
        %v2387 = vpop.permute.xlu0 %2386
        %v2388 = vlaneseq
        %v2389 = vshrl.u32 %v2388, 7
        %v2390 = vsub.s32 7, %v2389
        %v2391 = vrot.slane %v2338, %v2390
        %2393 = vbcast.lane.b32.xlu0 %v2391, 256
        %v2394 = vpop.permute.xlu0 %2393
        %v2395 = vmul.f32 %v2345, %v2018
        %v2396 = vmul.f32 %v2352, %v2019
        %v2397 = vmul.f32 %v2359, %v2020
        %v2398 = vmul.f32 %v2366, %v2021
        %v2399 = vmul.f32 %v2373, %v2022
        %v2400 = vmul.f32 %v2380, %v2023
        %v2401 = vmul.f32 %v2387, %v2024
        %v2402 = vmul.f32 %v2394, %v2025
        %v2403 = vsel %vm1439, %v2395, 0.0
        %v2404 = vrot.slane %v2403, 4
        %v2405 = vadd.f32 %v2403, %v2404
        %v2406 = vrot.slane %v2405, 2
        %v2407 = vadd.f32 %v2405, %v2406
        %v2408 = vrot.slane %v2407, 1
        %v2409 = vadd.f32 %v2407, %v2408
        %v2410 = vsel %vm1439, %v2396, 0.0
        %v2411 = vrot.slane %v2410, 4
        %v2412 = vadd.f32 %v2410, %v2411
        %v2413 = vrot.slane %v2412, 2
        %v2414 = vadd.f32 %v2412, %v2413
        %v2415 = vrot.slane %v2414, 1
        %v2416 = vadd.f32 %v2414, %v2415
        %v2417 = vsel %vm1439, %v2397, 0.0
        %v2418 = vrot.slane %v2417, 4
        %v2419 = vadd.f32 %v2417, %v2418
        %v2420 = vrot.slane %v2419, 2
        %v2421 = vadd.f32 %v2419, %v2420
        %v2422 = vrot.slane %v2421, 1
        %v2423 = vadd.f32 %v2421, %v2422
        %v2424 = vsel %vm1439, %v2398, 0.0
        %v2425 = vrot.slane %v2424, 4
        %v2426 = vadd.f32 %v2424, %v2425
        %v2427 = vrot.slane %v2426, 2
        %v2428 = vadd.f32 %v2426, %v2427
        %v2429 = vrot.slane %v2428, 1
        %v2430 = vadd.f32 %v2428, %v2429
        %v2431 = vsel %vm1439, %v2399, 0.0
        %v2432 = vrot.slane %v2431, 4
        %v2433 = vadd.f32 %v2431, %v2432
        %v2434 = vrot.slane %v2433, 2
        %v2435 = vadd.f32 %v2433, %v2434
        %v2436 = vrot.slane %v2435, 1
        %v2437 = vadd.f32 %v2435, %v2436
        %v2438 = vsel %vm1439, %v2400, 0.0
        %v2439 = vrot.slane %v2438, 4
        %v2440 = vadd.f32 %v2438, %v2439
        %v2441 = vrot.slane %v2440, 2
        %v2442 = vadd.f32 %v2440, %v2441
        %v2443 = vrot.slane %v2442, 1
        %v2444 = vadd.f32 %v2442, %v2443
        %v2445 = vsel %vm1439, %v2401, 0.0
        %v2446 = vrot.slane %v2445, 4
        %v2447 = vadd.f32 %v2445, %v2446
        %v2448 = vrot.slane %v2447, 2
        %v2449 = vadd.f32 %v2447, %v2448
        %v2450 = vrot.slane %v2449, 1
        %v2451 = vadd.f32 %v2449, %v2450
        %v2452 = vsel %vm1439, %v2402, 0.0
        %v2453 = vrot.slane %v2452, 4
        %v2454 = vadd.f32 %v2452, %v2453
        %v2455 = vrot.slane %v2454, 2
        %v2456 = vadd.f32 %v2454, %v2455
        %v2457 = vrot.slane %v2456, 1
        %v2458 = vadd.f32 %v2456, %v2457
        %v2459 = vld [vmem:[%s10] sm:$0xff]
        %v2460 = vld [vmem:[%s10 + $0x8] sm:$0xff]
        %v2461 = vld [vmem:[%s10 + $0x10] sm:$0xff]
        %v2462 = vld [vmem:[%s10 + $0x18] sm:$0xff]
        %v2463 = vld [vmem:[#allocation14] sm:$0x1]
        %v2465 = vlaneseq
        %v2466 = vshrl.u32 %v2465, 7
        %v2467 = vsub.s32 0, %v2466
        %v2468 = vrot.slane %v2463, %v2467
        %v2478 = vsel %vm1825, %v2416, %v2409
        %v2479 = vsel %vm1828, %v2423, %v2478
        %v2480 = vsel %vm1831, %v2430, %v2479
        %v2481 = vsel %vm2317, %v2437, %v2480
        %v2482 = vsel %vm2319, %v2444, %v2481
        %v2483 = vsel %vm2321, %v2451, %v2482
        %v2484 = vsel %vm2323, %v2458, %v2483
        %v2485 = vsel %vm2047, %v2484, 0
        %v2488 = vsel %vm2047, %v2459, 0
        %v2491 = vsel %vm2047, %v2460, 0
        %v2494 = vsel %vm2047, %v2461, 0
        %v2497 = vsel %vm2047, %v2462, 0
        %2499 = vmatprep.subr.mxu0 0.0
        %2500 = vmatpush1.xpose.msra.mxu0 0.0
        %2501 = vmatprep.subr.mxu0 0.0
        %2502 = vmatpush1.xpose.msra.mxu0 0.0
        %2503 = vmatprep.subr.mxu0 0.0
        %2504 = vmatpush1.xpose.msra.mxu0 0.0
        %2505 = vmatprep.subr.mxu0 0.0
        %2506 = vmatpush1.xpose.msra.mxu0 0.0
        %2507 = vmatprep.subr.mxu0 0.0
        %2508 = vmatpush1.xpose.msra.mxu0 0.0
        %2509 = vmatprep.subr.mxu0 0.0
        %2510 = vmatpush1.xpose.msra.mxu0 0.0
        %2511 = vmatprep.subr.mxu0 0.0
        %2512 = vmatpush1.xpose.msra.mxu0 0.0
        %2513 = vmatprep.subr.mxu0 0.0
        %2514 = vmatpush1.xpose.msra.mxu0 0.0
        %2515 = vmatprep.subr.mxu0 0.0
        %2516 = vmatpush1.xpose.msra.mxu0 0.0
        %2517 = vmatprep.subr.mxu0 0.0
        %2518 = vmatpush1.xpose.msra.mxu0 0.0
        %2519 = vmatprep.subr.mxu0 0.0
        %2520 = vmatpush1.xpose.msra.mxu0 0.0
        %2521 = vmatprep.subr.mxu0 0.0
        %2522 = vmatpush1.xpose.msra.mxu0 0.0
        %2523 = vmatprep.subr.mxu0 0.0
        %2524 = vmatpush1.xpose.msra.mxu0 %v2497
        %2525 = vmatprep.subr.mxu0 0.0
        %2526 = vmatpush1.xpose.msra.mxu0 %v2494
        %2527 = vmatprep.subr.mxu0 0.0
        %2528 = vmatpush1.xpose.msra.mxu0 %v2491
        %2529 = vmatprep.subr.mxu0 0.0
        %2530 = vmatpush1.xpose.msra.mxu0 %v2488
        %2531 = vmatprep.subr.mxu0 0.0
        %2532 = vmatpush2.xpose.msra.mxu0 0.0
        %2533 = vmatprep.subr.mxu0 0.0
        %2534 = vmatpush2.xpose.msra.mxu0 0.0
        %2535 = vmatprep.subr.mxu0 0.0
        %2536 = vmatpush2.xpose.msra.mxu0 0.0
        %2537 = vmatprep.subr.mxu0 0.0
        %2538 = vmatpush2.xpose.msra.mxu0 0.0
        %2539 = vmatprep.subr.mxu0 0.0
        %2540 = vmatpush2.xpose.msra.mxu0 0.0
        %2541 = vmatprep.subr.mxu0 0.0
        %2542 = vmatpush2.xpose.msra.mxu0 0.0
        %2543 = vmatprep.subr.mxu0 0.0
        %2544 = vmatpush2.xpose.msra.mxu0 0.0
        %2545 = vmatprep.subr.mxu0 0.0
        %2546 = vmatpush2.xpose.msra.mxu0 0.0
        %2547 = vmatprep.subr.mxu0 0.0
        %2548 = vmatpush2.xpose.msra.mxu0 0.0
        %2549 = vmatprep.subr.mxu0 0.0
        %2550 = vmatpush2.xpose.msra.mxu0 0.0
        %2551 = vmatprep.subr.mxu0 0.0
        %2552 = vmatpush2.xpose.msra.mxu0 0.0
        %2553 = vmatprep.subr.mxu0 0.0
        %2554 = vmatpush2.xpose.msra.mxu0 0.0
        %2555 = vmatprep.subr.mxu0 0.0
        %2556 = vmatpush2.xpose.msra.mxu0 0.0
        %2557 = vmatprep.subr.mxu0 0.0
        %2558 = vmatpush2.xpose.msra.mxu0 0.0
        %2559 = vmatprep.subr.mxu0 0.0
        %2560 = vmatpush2.xpose.msra.mxu0 0.0
        %2561 = vmatprep.subr.mxu0 0.0
        %2562 = vmatpush2.xpose.msra.mxu0 0.0
        %2563 = vmatprep.mubr.f32.mxu0 0.0
        %2564 = vmatmul.mubr.f32.gmra.mxu0 %v2485
        %v2565 = vpop.f32.mrf.mxu0
        %v2566 = vadd.f32 %v2468, %v2565
        %v2567 = vpop.f32.mrf.mxu0
        %2568 = vdwg.mxu0
        %v2569 = vld [vmem:[#allocation16] sm:$0xff]
        %v2570 = vld [vmem:[#allocation16 + $0x8] sm:$0xff]
        %v2571 = vld [vmem:[#allocation16 + $0x10] sm:$0xff]
        %v2572 = vld [vmem:[#allocation16 + $0x18] sm:$0xff]
        %v2573 = vld [vmem:[#allocation17] sm:$0x1]
        %v2575 = vlaneseq
        %v2576 = vshrl.u32 %v2575, 7
        %v2577 = vsub.s32 0, %v2576
        %v2578 = vrot.slane %v2573, %v2577
        %v2581 = vsel %vm2047, %v2566, 0
        %v2584 = vsel %vm2047, %v2569, 0
        %v2587 = vsel %vm2047, %v2570, 0
        %v2590 = vsel %vm2047, %v2571, 0
        %v2593 = vsel %vm2047, %v2572, 0
        %2595 = vmatprep.subr.mxu0 0.0
        %2596 = vmatpush1.xpose.msra.mxu0 0.0
        %2597 = vmatprep.subr.mxu0 0.0
        %2598 = vmatpush1.xpose.msra.mxu0 0.0
        %2599 = vmatprep.subr.mxu0 0.0
        %2600 = vmatpush1.xpose.msra.mxu0 0.0
        %2601 = vmatprep.subr.mxu0 0.0
        %2602 = vmatpush1.xpose.msra.mxu0 0.0
        %2603 = vmatprep.subr.mxu0 0.0
        %2604 = vmatpush1.xpose.msra.mxu0 0.0
        %2605 = vmatprep.subr.mxu0 0.0
        %2606 = vmatpush1.xpose.msra.mxu0 0.0
        %2607 = vmatprep.subr.mxu0 0.0
        %2608 = vmatpush1.xpose.msra.mxu0 0.0
        %2609 = vmatprep.subr.mxu0 0.0
        %2610 = vmatpush1.xpose.msra.mxu0 0.0
        %2611 = vmatprep.subr.mxu0 0.0
        %2612 = vmatpush1.xpose.msra.mxu0 0.0
        %2613 = vmatprep.subr.mxu0 0.0
        %2614 = vmatpush1.xpose.msra.mxu0 0.0
        %2615 = vmatprep.subr.mxu0 0.0
        %2616 = vmatpush1.xpose.msra.mxu0 0.0
        %2617 = vmatprep.subr.mxu0 0.0
        %2618 = vmatpush1.xpose.msra.mxu0 0.0
        %2619 = vmatprep.subr.mxu0 0.0
        %2620 = vmatpush1.xpose.msra.mxu0 %v2593
        %2621 = vmatprep.subr.mxu0 0.0
        %2622 = vmatpush1.xpose.msra.mxu0 %v2590
        %2623 = vmatprep.subr.mxu0 0.0
        %2624 = vmatpush1.xpose.msra.mxu0 %v2587
        %2625 = vmatprep.subr.mxu0 0.0
        %2626 = vmatpush1.xpose.msra.mxu0 %v2584
        %2627 = vmatprep.subr.mxu0 0.0
        %2628 = vmatpush2.xpose.msra.mxu0 0.0
        %2629 = vmatprep.subr.mxu0 0.0
        %2630 = vmatpush2.xpose.msra.mxu0 0.0
        %2631 = vmatprep.subr.mxu0 0.0
        %2632 = vmatpush2.xpose.msra.mxu0 0.0
        %2633 = vmatprep.subr.mxu0 0.0
        %2634 = vmatpush2.xpose.msra.mxu0 0.0
        %2635 = vmatprep.subr.mxu0 0.0
        %2636 = vmatpush2.xpose.msra.mxu0 0.0
        %2637 = vmatprep.subr.mxu0 0.0
        %2638 = vmatpush2.xpose.msra.mxu0 0.0
        %2639 = vmatprep.subr.mxu0 0.0
        %2640 = vmatpush2.xpose.msra.mxu0 0.0
        %2641 = vmatprep.subr.mxu0 0.0
        %2642 = vmatpush2.xpose.msra.mxu0 0.0
        %2643 = vmatprep.subr.mxu0 0.0
        %2644 = vmatpush2.xpose.msra.mxu0 0.0
        %2645 = vmatprep.subr.mxu0 0.0
        %2646 = vmatpush2.xpose.msra.mxu0 0.0
        %2647 = vmatprep.subr.mxu0 0.0
        %2648 = vmatpush2.xpose.msra.mxu0 0.0
        %2649 = vmatprep.subr.mxu0 0.0
        %2650 = vmatpush2.xpose.msra.mxu0 0.0
        %2651 = vmatprep.subr.mxu0 0.0
        %2652 = vmatpush2.xpose.msra.mxu0 0.0
        %2653 = vmatprep.subr.mxu0 0.0
        %2654 = vmatpush2.xpose.msra.mxu0 0.0
        %2655 = vmatprep.subr.mxu0 0.0
        %2656 = vmatpush2.xpose.msra.mxu0 0.0
        %2657 = vmatprep.subr.mxu0 0.0
        %2658 = vmatpush2.xpose.msra.mxu0 0.0
        %2659 = vmatprep.mubr.f32.mxu0 0.0
        %2660 = vmatmul.mubr.f32.gmra.mxu0 %v2581
        %v2661 = vpop.f32.mrf.mxu0
        %v2662 = vadd.f32 %v2578, %v2661
        %v2663 = vpop.f32.mrf.mxu0
        %2664 = vdwg.mxu0
        %v2665 = vld [vmem:[%s16] sm:$0xff]
        %v2666 = vld [vmem:[%s16 + $0x8] sm:$0xff]
        %v2667 = vld [vmem:[%s16 + $0x10] sm:$0xff]
        %v2668 = vld [vmem:[%s16 + $0x18] sm:$0xff]
        %v2669 = vld [vmem:[%s16 + $0x20] sm:$0xff]
        %v2670 = vld [vmem:[%s16 + $0x28] sm:$0xff]
        %v2671 = vld [vmem:[%s16 + $0x30] sm:$0xff]
        %v2672 = vld [vmem:[%s16 + $0x38] sm:$0xff]
        %v2673 = vld [vmem:[#allocation19] sm:$0x1]
        %v2675 = vlaneseq
        %v2676 = vshrl.u32 %v2675, 7
        %v2677 = vsub.s32 0, %v2676
        %v2678 = vrot.slane %v2673, %v2677
        %v2681 = vsel %vm2047, %v2662, 0
        %v2684 = vsel %vm2047, %v2665, 0
        %v2687 = vsel %vm2047, %v2666, 0
        %v2690 = vsel %vm2047, %v2667, 0
        %v2693 = vsel %vm2047, %v2668, 0
        %v2696 = vsel %vm2047, %v2669, 0
        %v2699 = vsel %vm2047, %v2670, 0
        %v2702 = vsel %vm2047, %v2671, 0
        %v2705 = vsel %vm2047, %v2672, 0
        %2707 = vmatprep.subr.mxu0 0.0
        %2708 = vmatpush1.xpose.msra.mxu0 0.0
        %2709 = vmatprep.subr.mxu0 0.0
        %2710 = vmatpush1.xpose.msra.mxu0 0.0
        %2711 = vmatprep.subr.mxu0 0.0
        %2712 = vmatpush1.xpose.msra.mxu0 0.0
        %2713 = vmatprep.subr.mxu0 0.0
        %2714 = vmatpush1.xpose.msra.mxu0 0.0
        %2715 = vmatprep.subr.mxu0 0.0
        %2716 = vmatpush1.xpose.msra.mxu0 0.0
        %2717 = vmatprep.subr.mxu0 0.0
        %2718 = vmatpush1.xpose.msra.mxu0 0.0
        %2719 = vmatprep.subr.mxu0 0.0
        %2720 = vmatpush1.xpose.msra.mxu0 0.0
        %2721 = vmatprep.subr.mxu0 0.0
        %2722 = vmatpush1.xpose.msra.mxu0 0.0
        %2723 = vmatprep.subr.mxu0 0.0
        %2724 = vmatpush1.xpose.msra.mxu0 %v2705
        %2725 = vmatprep.subr.mxu0 0.0
        %2726 = vmatpush1.xpose.msra.mxu0 %v2702
        %2727 = vmatprep.subr.mxu0 0.0
        %2728 = vmatpush1.xpose.msra.mxu0 %v2699
        %2729 = vmatprep.subr.mxu0 0.0
        %2730 = vmatpush1.xpose.msra.mxu0 %v2696
        %2731 = vmatprep.subr.mxu0 0.0
        %2732 = vmatpush1.xpose.msra.mxu0 %v2693
        %2733 = vmatprep.subr.mxu0 0.0
        %2734 = vmatpush1.xpose.msra.mxu0 %v2690
        %2735 = vmatprep.subr.mxu0 0.0
        %2736 = vmatpush1.xpose.msra.mxu0 %v2687
        %2737 = vmatprep.subr.mxu0 0.0
        %2738 = vmatpush1.xpose.msra.mxu0 %v2684
        %2739 = vmatprep.subr.mxu0 0.0
        %2740 = vmatpush2.xpose.msra.mxu0 0.0
        %2741 = vmatprep.subr.mxu0 0.0
        %2742 = vmatpush2.xpose.msra.mxu0 0.0
        %2743 = vmatprep.subr.mxu0 0.0
        %2744 = vmatpush2.xpose.msra.mxu0 0.0
        %2745 = vmatprep.subr.mxu0 0.0
        %2746 = vmatpush2.xpose.msra.mxu0 0.0
        %2747 = vmatprep.subr.mxu0 0.0
        %2748 = vmatpush2.xpose.msra.mxu0 0.0
        %2749 = vmatprep.subr.mxu0 0.0
        %2750 = vmatpush2.xpose.msra.mxu0 0.0
        %2751 = vmatprep.subr.mxu0 0.0
        %2752 = vmatpush2.xpose.msra.mxu0 0.0
        %2753 = vmatprep.subr.mxu0 0.0
        %2754 = vmatpush2.xpose.msra.mxu0 0.0
        %2755 = vmatprep.subr.mxu0 0.0
        %2756 = vmatpush2.xpose.msra.mxu0 0.0
        %2757 = vmatprep.subr.mxu0 0.0
        %2758 = vmatpush2.xpose.msra.mxu0 0.0
        %2759 = vmatprep.subr.mxu0 0.0
        %2760 = vmatpush2.xpose.msra.mxu0 0.0
        %2761 = vmatprep.subr.mxu0 0.0
        %2762 = vmatpush2.xpose.msra.mxu0 0.0
        %2763 = vmatprep.subr.mxu0 0.0
        %2764 = vmatpush2.xpose.msra.mxu0 0.0
        %2765 = vmatprep.subr.mxu0 0.0
        %2766 = vmatpush2.xpose.msra.mxu0 0.0
        %2767 = vmatprep.subr.mxu0 0.0
        %2768 = vmatpush2.xpose.msra.mxu0 0.0
        %2769 = vmatprep.subr.mxu0 0.0
        %2770 = vmatpush2.xpose.msra.mxu0 0.0
        %2771 = vmatprep.mubr.f32.mxu0 0.0
        %2772 = vmatmul.mubr.f32.gmra.mxu0 %v2681
        %v2773 = vpop.f32.mrf.mxu0
        %v2774 = vadd.f32 %v2678, %v2773
        %v2775 = vpop.f32.mrf.mxu0
        %2776 = vdwg.mxu0
        %v2777 = vmax.f32 %v2774, 0.0
        %v2778 = vld [vmem:[%s18] sm:$0xff]
        %v2779 = vld [vmem:[%s18 + $0x8] sm:$0xff]
        %v2780 = vld [vmem:[%s18 + $0x10] sm:$0xff]
        %v2781 = vld [vmem:[%s18 + $0x18] sm:$0xff]
        %v2782 = vld [vmem:[#allocation20] sm:$0x1]
        %v2784 = vlaneseq
        %v2785 = vshrl.u32 %v2784, 7
        %v2786 = vsub.s32 0, %v2785
        %v2787 = vrot.slane %v2782, %v2786
        %vm2789 = vcmask 523264
        %v2791 = vsel %vm2789, %v2777, 0
        %v2794 = vsel %vm2789, %v2778, 0
        %v2797 = vsel %vm2789, %v2779, 0
        %v2800 = vsel %vm2789, %v2780, 0
        %v2803 = vsel %vm2789, %v2781, 0
        %2805 = vmatprep.subr.mxu0 0.0
        %2806 = vmatpush1.xpose.msra.mxu0 0.0
        %2807 = vmatprep.subr.mxu0 0.0
        %2808 = vmatpush1.xpose.msra.mxu0 0.0
        %2809 = vmatprep.subr.mxu0 0.0
        %2810 = vmatpush1.xpose.msra.mxu0 0.0
        %2811 = vmatprep.subr.mxu0 0.0
        %2812 = vmatpush1.xpose.msra.mxu0 0.0
        %2813 = vmatprep.subr.mxu0 0.0
        %2814 = vmatpush1.xpose.msra.mxu0 0.0
        %2815 = vmatprep.subr.mxu0 0.0
        %2816 = vmatpush1.xpose.msra.mxu0 0.0
        %2817 = vmatprep.subr.mxu0 0.0
        %2818 = vmatpush1.xpose.msra.mxu0 0.0
        %2819 = vmatprep.subr.mxu0 0.0
        %2820 = vmatpush1.xpose.msra.mxu0 0.0
        %2821 = vmatprep.subr.mxu0 0.0
        %2822 = vmatpush1.xpose.msra.mxu0 0.0
        %2823 = vmatprep.subr.mxu0 0.0
        %2824 = vmatpush1.xpose.msra.mxu0 0.0
        %2825 = vmatprep.subr.mxu0 0.0
        %2826 = vmatpush1.xpose.msra.mxu0 0.0
        %2827 = vmatprep.subr.mxu0 0.0
        %2828 = vmatpush1.xpose.msra.mxu0 0.0
        %2829 = vmatprep.subr.mxu0 0.0
        %2830 = vmatpush1.xpose.msra.mxu0 %v2803
        %2831 = vmatprep.subr.mxu0 0.0
        %2832 = vmatpush1.xpose.msra.mxu0 %v2800
        %2833 = vmatprep.subr.mxu0 0.0
        %2834 = vmatpush1.xpose.msra.mxu0 %v2797
        %2835 = vmatprep.subr.mxu0 0.0
        %2836 = vmatpush1.xpose.msra.mxu0 %v2794
        %2837 = vmatprep.subr.mxu0 0.0
        %2838 = vmatpush2.xpose.msra.mxu0 0.0
        %2839 = vmatprep.subr.mxu0 0.0
        %2840 = vmatpush2.xpose.msra.mxu0 0.0
        %2841 = vmatprep.subr.mxu0 0.0
        %2842 = vmatpush2.xpose.msra.mxu0 0.0
        %2843 = vmatprep.subr.mxu0 0.0
        %2844 = vmatpush2.xpose.msra.mxu0 0.0
        %2845 = vmatprep.subr.mxu0 0.0
        %2846 = vmatpush2.xpose.msra.mxu0 0.0
        %2847 = vmatprep.subr.mxu0 0.0
        %2848 = vmatpush2.xpose.msra.mxu0 0.0
        %2849 = vmatprep.subr.mxu0 0.0
        %2850 = vmatpush2.xpose.msra.mxu0 0.0
        %2851 = vmatprep.subr.mxu0 0.0
        %2852 = vmatpush2.xpose.msra.mxu0 0.0
        %2853 = vmatprep.subr.mxu0 0.0
        %2854 = vmatpush2.xpose.msra.mxu0 0.0
        %2855 = vmatprep.subr.mxu0 0.0
        %2856 = vmatpush2.xpose.msra.mxu0 0.0
        %2857 = vmatprep.subr.mxu0 0.0
        %2858 = vmatpush2.xpose.msra.mxu0 0.0
        %2859 = vmatprep.subr.mxu0 0.0
        %2860 = vmatpush2.xpose.msra.mxu0 0.0
        %2861 = vmatprep.subr.mxu0 0.0
        %2862 = vmatpush2.xpose.msra.mxu0 0.0
        %2863 = vmatprep.subr.mxu0 0.0
        %2864 = vmatpush2.xpose.msra.mxu0 0.0
        %2865 = vmatprep.subr.mxu0 0.0
        %2866 = vmatpush2.xpose.msra.mxu0 0.0
        %2867 = vmatprep.subr.mxu0 0.0
        %2868 = vmatpush2.xpose.msra.mxu0 0.0
        %2869 = vmatprep.mubr.f32.mxu0 0.0
        %2870 = vmatmul.mubr.f32.gmra.mxu0 %v2791
        %v2871 = vpop.f32.mrf.mxu0
        %v2872 = vadd.f32 %v2787, %v2871
        %v2873 = vpop.f32.mrf.mxu0
        %2874 = vdwg.mxu0
        %v2875 = vmul.f32 %v2872, %v2872
        %v2876 = vsel %vm2047, %v2875, 0.0
        %2877 = vadd.xlane.f32.xlu0 %v2876
        %v2878 = vpop.xlane.xlu0 %2877
        %v2879 = vrsqrt.pop %v2878
        %v2880 = vmul.f32 %v2878, %v2879
        %vm2881 = vcmp.eq.f32.partialorder %v2878, inf
        %v2882 = vsel %vm2881, %v2878, %v2880
        %vm2883 = vcmp.eq.f32.partialorder %v2878, 0.0
        %v2884 = vand.u32 %v2878, 2147483648
        %v2885 = vsel %vm2883, %v2884, %v2882
        %v2886 = vmax.f32 %v2885, 1e-12
        %v2887 = vrcp.pop %v2886
        %v2888 = vmul.f32 %v2872, %v2887
        %2889 = vst.msk [vmem:[%s1072] sm:$0xff] %vm2047, %v2888
        %v2890 = vmul.f32 %v2888, %v1149
        %v2891 = vld [vmem:[%s20] sm:$0xff]
        %v2892 = vld [vmem:[#allocation22] sm:$0xff]
        %v2894 = vsel %vm2047, %v2888, 0
        %v2897 = vsel %vm2047, %v2892, 0
        %2899 = vmatprep.subr.mxu0 0.0
        %2900 = vmatpush1.xpose.msra.mxu0 0.0
        %2901 = vmatprep.subr.mxu0 0.0
        %2902 = vmatpush1.xpose.msra.mxu0 0.0
        %2903 = vmatprep.subr.mxu0 0.0
        %2904 = vmatpush1.xpose.msra.mxu0 0.0
        %2905 = vmatprep.subr.mxu0 0.0
        %2906 = vmatpush1.xpose.msra.mxu0 0.0
        %2907 = vmatprep.subr.mxu0 0.0
        %2908 = vmatpush1.xpose.msra.mxu0 0.0
        %2909 = vmatprep.subr.mxu0 0.0
        %2910 = vmatpush1.xpose.msra.mxu0 0.0
        %2911 = vmatprep.subr.mxu0 0.0
        %2912 = vmatpush1.xpose.msra.mxu0 0.0
        %2913 = vmatprep.subr.mxu0 0.0
        %2914 = vmatpush1.xpose.msra.mxu0 0.0
        %2915 = vmatprep.subr.mxu0 0.0
        %2916 = vmatpush1.xpose.msra.mxu0 0.0
        %2917 = vmatprep.subr.mxu0 0.0
        %2918 = vmatpush1.xpose.msra.mxu0 0.0
        %2919 = vmatprep.subr.mxu0 0.0
        %2920 = vmatpush1.xpose.msra.mxu0 0.0
        %2921 = vmatprep.subr.mxu0 0.0
        %2922 = vmatpush1.xpose.msra.mxu0 0.0
        %2923 = vmatprep.subr.mxu0 0.0
        %2924 = vmatpush1.xpose.msra.mxu0 0.0
        %2925 = vmatprep.subr.mxu0 0.0
        %2926 = vmatpush1.xpose.msra.mxu0 0.0
        %2927 = vmatprep.subr.mxu0 0.0
        %2928 = vmatpush1.xpose.msra.mxu0 0.0
        %2929 = vmatprep.subr.mxu0 0.0
        %2930 = vmatpush1.xpose.msra.mxu0 %v2897
        %2931 = vmatprep.subr.mxu0 0.0
        %2932 = vmatpush2.xpose.msra.mxu0 0.0
        %2933 = vmatprep.subr.mxu0 0.0
        %2934 = vmatpush2.xpose.msra.mxu0 0.0
        %2935 = vmatprep.subr.mxu0 0.0
        %2936 = vmatpush2.xpose.msra.mxu0 0.0
        %2937 = vmatprep.subr.mxu0 0.0
        %2938 = vmatpush2.xpose.msra.mxu0 0.0
        %2939 = vmatprep.subr.mxu0 0.0
        %2940 = vmatpush2.xpose.msra.mxu0 0.0
        %2941 = vmatprep.subr.mxu0 0.0
        %2942 = vmatpush2.xpose.msra.mxu0 0.0
        %2943 = vmatprep.subr.mxu0 0.0
        %2944 = vmatpush2.xpose.msra.mxu0 0.0
        %2945 = vmatprep.subr.mxu0 0.0
        %2946 = vmatpush2.xpose.msra.mxu0 0.0
        %2947 = vmatprep.subr.mxu0 0.0
        %2948 = vmatpush2.xpose.msra.mxu0 0.0
        %2949 = vmatprep.subr.mxu0 0.0
        %2950 = vmatpush2.xpose.msra.mxu0 0.0
        %2951 = vmatprep.subr.mxu0 0.0
        %2952 = vmatpush2.xpose.msra.mxu0 0.0
        %2953 = vmatprep.subr.mxu0 0.0
        %2954 = vmatpush2.xpose.msra.mxu0 0.0
        %2955 = vmatprep.subr.mxu0 0.0
        %2956 = vmatpush2.xpose.msra.mxu0 0.0
        %2957 = vmatprep.subr.mxu0 0.0
        %2958 = vmatpush2.xpose.msra.mxu0 0.0
        %2959 = vmatprep.subr.mxu0 0.0
        %2960 = vmatpush2.xpose.msra.mxu0 0.0
        %2961 = vmatprep.subr.mxu0 0.0
        %2962 = vmatpush2.xpose.msra.mxu0 0.0
        %2963 = vmatprep.mubr.f32.mxu0 0.0
        %2964 = vmatmul.mubr.f32.gmra.mxu0 %v2894
        %v2965 = vpop.f32.mrf.mxu0
        %v2966 = vadd.f32 0.0, %v2965
        %v2967 = vpop.f32.mrf.mxu0
        %2968 = vdwg.mxu0
        %v2970 = vsel %vm2047, %v2890, 0
        %v2973 = vsel %vm2047, %v2891, 0
        %2975 = vmatprep.subr.mxu0 0.0
        %2976 = vmatpush1.xpose.msra.mxu0 0.0
        %2977 = vmatprep.subr.mxu0 0.0
        %2978 = vmatpush1.xpose.msra.mxu0 0.0
        %2979 = vmatprep.subr.mxu0 0.0
        %2980 = vmatpush1.xpose.msra.mxu0 0.0
        %2981 = vmatprep.subr.mxu0 0.0
        %2982 = vmatpush1.xpose.msra.mxu0 0.0
        %2983 = vmatprep.subr.mxu0 0.0
        %2984 = vmatpush1.xpose.msra.mxu0 0.0
        %2985 = vmatprep.subr.mxu0 0.0
        %2986 = vmatpush1.xpose.msra.mxu0 0.0
        %2987 = vmatprep.subr.mxu0 0.0
        %2988 = vmatpush1.xpose.msra.mxu0 0.0
        %2989 = vmatprep.subr.mxu0 0.0
        %2990 = vmatpush1.xpose.msra.mxu0 0.0
        %2991 = vmatprep.subr.mxu0 0.0
        %2992 = vmatpush1.xpose.msra.mxu0 0.0
        %2993 = vmatprep.subr.mxu0 0.0
        %2994 = vmatpush1.xpose.msra.mxu0 0.0
        %2995 = vmatprep.subr.mxu0 0.0
        %2996 = vmatpush1.xpose.msra.mxu0 0.0
        %2997 = vmatprep.subr.mxu0 0.0
        %2998 = vmatpush1.xpose.msra.mxu0 0.0
        %2999 = vmatprep.subr.mxu0 0.0
        %3000 = vmatpush1.xpose.msra.mxu0 0.0
        %3001 = vmatprep.subr.mxu0 0.0
        %3002 = vmatpush1.xpose.msra.mxu0 0.0
        %3003 = vmatprep.subr.mxu0 0.0
        %3004 = vmatpush1.xpose.msra.mxu0 0.0
        %3005 = vmatprep.subr.mxu0 0.0
        %3006 = vmatpush1.xpose.msra.mxu0 %v2973
        %3007 = vmatprep.subr.mxu0 0.0
        %3008 = vmatpush2.xpose.msra.mxu0 0.0
        %3009 = vmatprep.subr.mxu0 0.0
        %3010 = vmatpush2.xpose.msra.mxu0 0.0
        %3011 = vmatprep.subr.mxu0 0.0
        %3012 = vmatpush2.xpose.msra.mxu0 0.0
        %3013 = vmatprep.subr.mxu0 0.0
        %3014 = vmatpush2.xpose.msra.mxu0 0.0
        %3015 = vmatprep.subr.mxu0 0.0
        %3016 = vmatpush2.xpose.msra.mxu0 0.0
        %3017 = vmatprep.subr.mxu0 0.0
        %3018 = vmatpush2.xpose.msra.mxu0 0.0
        %3019 = vmatprep.subr.mxu0 0.0
        %3020 = vmatpush2.xpose.msra.mxu0 0.0
        %3021 = vmatprep.subr.mxu0 0.0
        %3022 = vmatpush2.xpose.msra.mxu0 0.0
        %3023 = vmatprep.subr.mxu0 0.0
        %3024 = vmatpush2.xpose.msra.mxu0 0.0
        %3025 = vmatprep.subr.mxu0 0.0
        %3026 = vmatpush2.xpose.msra.mxu0 0.0
        %3027 = vmatprep.subr.mxu0 0.0
        %3028 = vmatpush2.xpose.msra.mxu0 0.0
        %3029 = vmatprep.subr.mxu0 0.0
        %3030 = vmatpush2.xpose.msra.mxu0 0.0
        %3031 = vmatprep.subr.mxu0 0.0
        %3032 = vmatpush2.xpose.msra.mxu0 0.0
        %3033 = vmatprep.subr.mxu0 0.0
        %3034 = vmatpush2.xpose.msra.mxu0 0.0
        %3035 = vmatprep.subr.mxu0 0.0
        %3036 = vmatpush2.xpose.msra.mxu0 0.0
        %3037 = vmatprep.subr.mxu0 0.0
        %3038 = vmatpush2.xpose.msra.mxu0 0.0
        %3039 = vmatprep.mubr.f32.mxu0 0.0
        %3040 = vmatmul.mubr.f32.gmra.mxu0 %v2970
        %v3041 = vpop.f32.mrf.mxu0
        %v3042 = vadd.f32 %v2966, %v3041
        %v3043 = vpop.f32.mrf.mxu0
        %3044 = vdwg.mxu0
        %v3045 = vld [vmem:[#allocation23] sm:$0xff]
        %v3047 = vsel %vm2047, %v1149, 0
        %v3050 = vsel %vm2047, %v3045, 0
        %3052 = vmatprep.subr.mxu0 0.0
        %3053 = vmatpush1.xpose.msra.mxu0 0.0
        %3054 = vmatprep.subr.mxu0 0.0
        %3055 = vmatpush1.xpose.msra.mxu0 0.0
        %3056 = vmatprep.subr.mxu0 0.0
        %3057 = vmatpush1.xpose.msra.mxu0 0.0
        %3058 = vmatprep.subr.mxu0 0.0
        %3059 = vmatpush1.xpose.msra.mxu0 0.0
        %3060 = vmatprep.subr.mxu0 0.0
        %3061 = vmatpush1.xpose.msra.mxu0 0.0
        %3062 = vmatprep.subr.mxu0 0.0
        %3063 = vmatpush1.xpose.msra.mxu0 0.0
        %3064 = vmatprep.subr.mxu0 0.0
        %3065 = vmatpush1.xpose.msra.mxu0 0.0
        %3066 = vmatprep.subr.mxu0 0.0
        %3067 = vmatpush1.xpose.msra.mxu0 0.0
        %3068 = vmatprep.subr.mxu0 0.0
        %3069 = vmatpush1.xpose.msra.mxu0 0.0
        %3070 = vmatprep.subr.mxu0 0.0
        %3071 = vmatpush1.xpose.msra.mxu0 0.0
        %3072 = vmatprep.subr.mxu0 0.0
        %3073 = vmatpush1.xpose.msra.mxu0 0.0
        %3074 = vmatprep.subr.mxu0 0.0
        %3075 = vmatpush1.xpose.msra.mxu0 0.0
        %3076 = vmatprep.subr.mxu0 0.0
        %3077 = vmatpush1.xpose.msra.mxu0 0.0
        %3078 = vmatprep.subr.mxu0 0.0
        %3079 = vmatpush1.xpose.msra.mxu0 0.0
        %3080 = vmatprep.subr.mxu0 0.0
        %3081 = vmatpush1.xpose.msra.mxu0 0.0
        %3082 = vmatprep.subr.mxu0 0.0
        %3083 = vmatpush1.xpose.msra.mxu0 %v3050
        %3084 = vmatprep.subr.mxu0 0.0
        %3085 = vmatpush2.xpose.msra.mxu0 0.0
        %3086 = vmatprep.subr.mxu0 0.0
        %3087 = vmatpush2.xpose.msra.mxu0 0.0
        %3088 = vmatprep.subr.mxu0 0.0
        %3089 = vmatpush2.xpose.msra.mxu0 0.0
        %3090 = vmatprep.subr.mxu0 0.0
        %3091 = vmatpush2.xpose.msra.mxu0 0.0
        %3092 = vmatprep.subr.mxu0 0.0
        %3093 = vmatpush2.xpose.msra.mxu0 0.0
        %3094 = vmatprep.subr.mxu0 0.0
        %3095 = vmatpush2.xpose.msra.mxu0 0.0
        %3096 = vmatprep.subr.mxu0 0.0
        %3097 = vmatpush2.xpose.msra.mxu0 0.0
        %3098 = vmatprep.subr.mxu0 0.0
        %3099 = vmatpush2.xpose.msra.mxu0 0.0
        %3100 = vmatprep.subr.mxu0 0.0
        %3101 = vmatpush2.xpose.msra.mxu0 0.0
        %3102 = vmatprep.subr.mxu0 0.0
        %3103 = vmatpush2.xpose.msra.mxu0 0.0
        %3104 = vmatprep.subr.mxu0 0.0
        %3105 = vmatpush2.xpose.msra.mxu0 0.0
        %3106 = vmatprep.subr.mxu0 0.0
        %3107 = vmatpush2.xpose.msra.mxu0 0.0
        %3108 = vmatprep.subr.mxu0 0.0
        %3109 = vmatpush2.xpose.msra.mxu0 0.0
        %3110 = vmatprep.subr.mxu0 0.0
        %3111 = vmatpush2.xpose.msra.mxu0 0.0
        %3112 = vmatprep.subr.mxu0 0.0
        %3113 = vmatpush2.xpose.msra.mxu0 0.0
        %3114 = vmatprep.subr.mxu0 0.0
        %3115 = vmatpush2.xpose.msra.mxu0 0.0
        %3116 = vmatprep.mubr.f32.mxu0 0.0
        %3117 = vmatmul.mubr.f32.gmra.mxu0 %v3047
        %v3118 = vpop.f32.mrf.mxu0
        %v3119 = vadd.f32 0.0, %v3118
        %v3120 = vpop.f32.mrf.mxu0
        %3121 = vdwg.mxu0
        %v3122 = vadd.f32 %v3042, %v3119
        %v3123 = vld [vmem:[%s23] sm:$0x1]
        %v3125 = vlaneseq
        %v3126 = vshrl.u32 %v3125, 7
        %v3127 = vsub.s32 0, %v3126
        %v3128 = vrot.slane %v3123, %v3127
        %v3130 = vadd.f32 %v3122, %v3128
        %v3131 = vmax.f32 %v3130, 0.0
        %v3132 = vld [vmem:[%s24] sm:$0x3]
        %v3133 = vld [vmem:[%s25] sm:$0x1]
        %v3135 = vlaneseq
        %v3136 = vshrl.u32 %v3135, 7
        %v3137 = vsub.s32 0, %v3136
        %v3138 = vrot.slane %v3133, %v3137
        %vm3140 = vcmask 64512
        %v3142 = vsel %vm3140, %v3131, 0
        %v3145 = vsel %vm3140, %v3132, 0
        %3147 = vmatprep.subr.mxu0 0.0
        %3148 = vmatpush1.xpose.msra.mxu0 0.0
        %3149 = vmatprep.subr.mxu0 0.0
        %3150 = vmatpush1.xpose.msra.mxu0 0.0
        %3151 = vmatprep.subr.mxu0 0.0
        %3152 = vmatpush1.xpose.msra.mxu0 0.0
        %3153 = vmatprep.subr.mxu0 0.0
        %3154 = vmatpush1.xpose.msra.mxu0 0.0
        %3155 = vmatprep.subr.mxu0 0.0
        %3156 = vmatpush1.xpose.msra.mxu0 0.0
        %3157 = vmatprep.subr.mxu0 0.0
        %3158 = vmatpush1.xpose.msra.mxu0 0.0
        %3159 = vmatprep.subr.mxu0 0.0
        %3160 = vmatpush1.xpose.msra.mxu0 0.0
        %3161 = vmatprep.subr.mxu0 0.0
        %3162 = vmatpush1.xpose.msra.mxu0 0.0
        %3163 = vmatprep.subr.mxu0 0.0
        %3164 = vmatpush1.xpose.msra.mxu0 0.0
        %3165 = vmatprep.subr.mxu0 0.0
        %3166 = vmatpush1.xpose.msra.mxu0 0.0
        %3167 = vmatprep.subr.mxu0 0.0
        %3168 = vmatpush1.xpose.msra.mxu0 0.0
        %3169 = vmatprep.subr.mxu0 0.0
        %3170 = vmatpush1.xpose.msra.mxu0 0.0
        %3171 = vmatprep.subr.mxu0 0.0
        %3172 = vmatpush1.xpose.msra.mxu0 0.0
        %3173 = vmatprep.subr.mxu0 0.0
        %3174 = vmatpush1.xpose.msra.mxu0 0.0
        %3175 = vmatprep.subr.mxu0 0.0
        %3176 = vmatpush1.xpose.msra.mxu0 0.0
        %3177 = vmatprep.subr.mxu0 0.0
        %3178 = vmatpush1.xpose.msra.mxu0 %v3145
        %3179 = vmatprep.subr.mxu0 0.0
        %3180 = vmatpush2.xpose.msra.mxu0 0.0
        %3181 = vmatprep.subr.mxu0 0.0
        %3182 = vmatpush2.xpose.msra.mxu0 0.0
        %3183 = vmatprep.subr.mxu0 0.0
        %3184 = vmatpush2.xpose.msra.mxu0 0.0
        %3185 = vmatprep.subr.mxu0 0.0
        %3186 = vmatpush2.xpose.msra.mxu0 0.0
        %3187 = vmatprep.subr.mxu0 0.0
        %3188 = vmatpush2.xpose.msra.mxu0 0.0
        %3189 = vmatprep.subr.mxu0 0.0
        %3190 = vmatpush2.xpose.msra.mxu0 0.0
        %3191 = vmatprep.subr.mxu0 0.0
        %3192 = vmatpush2.xpose.msra.mxu0 0.0
        %3193 = vmatprep.subr.mxu0 0.0
        %3194 = vmatpush2.xpose.msra.mxu0 0.0
        %3195 = vmatprep.subr.mxu0 0.0
        %3196 = vmatpush2.xpose.msra.mxu0 0.0
        %3197 = vmatprep.subr.mxu0 0.0
        %3198 = vmatpush2.xpose.msra.mxu0 0.0
        %3199 = vmatprep.subr.mxu0 0.0
        %3200 = vmatpush2.xpose.msra.mxu0 0.0
        %3201 = vmatprep.subr.mxu0 0.0
        %3202 = vmatpush2.xpose.msra.mxu0 0.0
        %3203 = vmatprep.subr.mxu0 0.0
        %3204 = vmatpush2.xpose.msra.mxu0 0.0
        %3205 = vmatprep.subr.mxu0 0.0
        %3206 = vmatpush2.xpose.msra.mxu0 0.0
        %3207 = vmatprep.subr.mxu0 0.0
        %3208 = vmatpush2.xpose.msra.mxu0 0.0
        %3209 = vmatprep.subr.mxu0 0.0
        %3210 = vmatpush2.xpose.msra.mxu0 0.0
        %3211 = vmatprep.mubr.f32.mxu0 0.0
        %3212 = vmatmul.mubr.f32.gmra.mxu0 %v3142
        %v3213 = vpop.f32.mrf.mxu0
        %v3214 = vadd.f32 %v3138, %v3213
        %v3215 = vpop.f32.mrf.mxu0
        %3216 = vdwg.mxu0
        %v3217 = vxor.u32 %v3214, 2147483648
        %v3218 = vmul.f32 %v3217, 1.442695
        %v3219 = vpow.pop %v3218
        %v3220 = vadd.f32 %v3219, 1.0
        %v3221 = vrcp.pop %v3220
        %v3222 = vmul.f32 1.0, %v3221
        %v3223 = vmax.f32 %v3214, 0.0
        %vm3224 = vcmp.ne.f32.partialorder %v3214, %v3214
        %v3225 = vadd.f32 %v3214, 0.0
        %v3226 = vand.u32 2147483647, %v3214
        %v3227 = vsub.f32 0.0, %v3226
        %v3228 = vmul.f32 %v3227, 1.442695
        %v3229 = vpow.pop %v3228
        %v3230 = vadd.f32 %v3229, 1.0
        %v3231 = vlog2.pop %v3230
        %v3232 = vmul.f32 %v3231, 0.6931472
        %v3233 = vmul.f32 -0.5, %v3229
        %v3234 = vadd.f32 %v3233, 1.0
        %v3235 = vmul.f32 %v3234, %v3229
        %v3236 = vand.u32 2147483647, %v3229
        %vm3237 = vcmp.lt.f32.partialorder %v3236, 0.0004427343
        %v3238 = vsel %vm3237, %v3235, %v3232
        %v3239 = vadd.f32 %v3223, %v3238
        %v3240 = vsel %vm3224, %v3225, %v3239
        %v3241 = vmul.f32 %v3240, 0.9
        %v3242 = vadd.f32 %v3241, 0.1
        %vm3243 = vcmp.eq.s32.totalorder %v2281, 0
        %v3244 = vsel %vm3243, %v3222, %v3242
        %vm3245 = vcmask 15360
        %3246 = vst.msk [vmem:[%s1099] sm:$0xff] %vm3245, %v3244
        %s3247 = sand.u32 %s633, 1
        %s3248 = scalar_lea.sflag [#allocation4], %s3247
        %s3249 = sand.u32 %s633, 1
        %s3250 = smul.addr %s3249, 8
        %s3251 = scalar_lea.vmem [#allocation25], %s3250
        %p3252 = scmp.lt.s32.totalorder %s54, 1
        %s3253 = scalar_select %p3252, %s54, 1
        %s3254 = smul.addr %s3253, 8
        %s3255 = scalar_lea.vmem %s27, %s3254
        // Predicated region
        $region181: #{tpu_custom_call.1} parent=123 // pred_check
          %p3256 = pneg %p643
        $region182: #{tpu_custom_call.1} parent=123 // pred_check_branch
          %3258 = sbr.rel (%p3256) target = $region184
        $region183: #{tpu_custom_call.1} parent=123 // pred_region
          %s3260 = ssub.s32 128, 128
          %3261 = vsyncadd %s3248, %s3260
          %s3262 = smul.addr %s54, 128
          %s3263 = scalar_lea.hbm %s26, %s3262
          %s3265 = sshll.u32 %s3251, 4
          %s3266 = int_to_ptr.vmem [resolvable:$true] %s3265
          %3268 = dma.vmem_to_hbm [thread:$0]  %s3266, 128, %s3263, %s3248
        $region184: #{tpu_custom_call.1} parent=123 // pred_fallthru
          _
        // Predicated region
        $region185: #{tpu_custom_call.1} parent=123 // pred_check
          %p3269 = pneg %p669
        $region186: #{tpu_custom_call.1} parent=123 // pred_check_branch
          %3271 = sbr.rel (%p3269) target = $region188
        $region187: #{tpu_custom_call.1} parent=123 // pred_region
          _
        $region188: #{tpu_custom_call.1} parent=123 // pred_fallthru
          _
      $region124: #{tpu_custom_call.1} parent=5 // pred_fallthru
        _
      %p3272 = scmp.le.s32.totalorder 2, %s49
      // Predicated region
      $region189: #{tpu_custom_call.1} parent=5 // pred_check
        %p3273 = pneg %p3272
      $region190: #{tpu_custom_call.1} parent=5 // pred_check_branch
        %3275 = sbr.rel (%p3273) target = $region192
      $region191: #{tpu_custom_call.1} parent=5 // pred_region
        %s3276 = ssub.s32 %s49, 2
        // Predicated region
        $region193: #{tpu_custom_call.1} parent=191 // pred_check
          %p3277 = pneg %p649
        $region194: #{tpu_custom_call.1} parent=191 // pred_check_branch
          %3279 = sbr.rel (%p3277) target = $region196
        $region195: #{tpu_custom_call.1} parent=191 // pred_region
          %s3280 = sand.u32 %s634, 1
          %s3281 = scalar_lea.sflag [#allocation4], %s3280
          %s3282 = sand.u32 %s634, 1
          %s3283 = smul.addr %s3282, 8
          %s3284 = scalar_lea.vmem [#allocation25], %s3283
          %3285 = dma.done %s3281, 128
        $region196: #{tpu_custom_call.1} parent=191 // pred_fallthru
          _
        // Predicated region
        $region197: #{tpu_custom_call.1} parent=191 // pred_check
          %p3286 = pneg %p675
        $region198: #{tpu_custom_call.1} parent=191 // pred_check_branch
          %3288 = sbr.rel (%p3286) target = $region200
        $region199: #{tpu_custom_call.1} parent=191 // pred_region
          %p3289 = scmp.lt.s32.totalorder %s55, 1
          %s3290 = scalar_select %p3289, %s55, 1
          %s3291 = smul.addr %s3290, 8
          %s3292 = scalar_lea.vmem %s27, %s3291
        $region200: #{tpu_custom_call.1} parent=191 // pred_fallthru
          _
      $region192: #{tpu_custom_call.1} parent=5 // pred_fallthru
        _
    $region6: #{tpu_custom_call.1} parent=1 // loop_footer
      %s53 = sadd.s32 1, %s49
    $region7: #{tpu_custom_call.1} parent=1 // loop_footer_branch
      %48 = sbr.rel target = $region3
    $region8: #{tpu_custom_call.1} parent=1 // loop_exit
      _
    %3293 = vsyncpa [#allocation3], 1
    %s3294 = scalar_lea.sflag [#allocation3], 1
    %3295 = vsyncpa %s3294, 1
    %3296 = vsyncpa [#allocation6], 1
    %s3297 = scalar_lea.sflag [#allocation6], 1
    %3298 = vsyncpa %s3297, 1
    %3299 = vsyncpa [#allocation9], 1
    %3300 = vsyncpa [#allocation12], 1
    %3301 = vsyncpa [#allocation15], 1
    %3302 = vsyncpa [#allocation18], 1
    %3303 = vsyncpa [#allocation21], 1
    %3304 = vsyncpa [#allocation24], 1
    %3305 = vsyncpa [#allocation4], 1
    %s3306 = scalar_lea.sflag [#allocation4], 1
    %3307 = vsyncpa %s3306, 1

</llo_original>
